<compile_context>
chip_gen: v7x
topology: tpu7x:2x2x1
jax: 0.10.0
libtpu: 0.0.40
codegen_flags: <defaults>
</compile_context>

<pallas_src>
import numpy as np
import jax
import jax.numpy as jnp
from jax.experimental import pallas as pl
from jax.experimental.pallas import tpu as pltpu

H1, H2 = 1024, 512
H3 = 1
H3_PAD = 128           # lane-dense padding of the final (512 -> 1) layer


def mlp_kernel(x_ref, w1_ref, b1_ref, w2_ref, b2_ref, w3_ref, b3_ref, o_ref):
    # Cast the f32 input tile to bf16 in-kernel (cheap VPU work, avoids an
    # extra HBM round-trip for a bf16 copy of x in the wrapper).
    xb = x_ref[...].astype(jnp.bfloat16)

    # Layer 1: bf16 x bf16 -> f32 accumulate on the MXU; bias + ReLU in f32.
    h1 = jnp.dot(xb, w1_ref[...], preferred_element_type=jnp.float32)
    h1 = jnp.maximum(h1 + b1_ref[...], 0.0)
    # TODO(synk): train-mode dropout (p=0.5) would use pltpu.prng_seed +
    # pltpu.stateful_bernoulli; forward() here is inference, so identity.

    # Layer 2: cast activations back to bf16 so the MXU runs at full rate.
    h2 = jnp.dot(h1.astype(jnp.bfloat16), w2_ref[...],
                 preferred_element_type=jnp.float32)
    h2 = jnp.maximum(h2 + b2_ref[...], 0.0)

    # Layer 3: output padded to 128 lanes -> lane-dense (unmasked) store; the
    # MXU pass count is the same as the degenerate N=1 matmul.
    out = jnp.dot(h2.astype(jnp.bfloat16), w3_ref[...],
                  preferred_element_type=jnp.float32)
    o_ref[...] = (out + b3_ref[...]).astype(o_ref.dtype)


def _round_up(v, m):
    return ((v + m - 1) // m) * m


def _default_tile_b():
    try:
        kind = jax.devices()[0].device_kind.lower()
    except Exception:
        kind = ""
    # v5e: 4x128x128 MXU -> 128 rows already saturate; v6e/v7x want >=256 rows.
    return 128 if "v5" in kind else 256


def net_forward(x, params, *, tile_b=None):
    """x: (B, d_feature) f32. params: transposed (in, out) weights + biases."""
    B, D = x.shape
    w1, b1 = params["w1"], params["b1"]   # (D,1024) bf16, (1,1024) f32
    w2, b2 = params["w2"], params["b2"]   # (1024,512) bf16, (1,512) f32
    w3, b3 = params["w3"], params["b3"]   # (512,1)  bf16, (1,1)  f32

    if tile_b is None:
        tile_b = _default_tile_b()
    # Keep the batch tile a multiple of 16 (bf16 sublane packing) and no
    # larger than the (rounded-up) batch.
    tile_b = max(16, _round_up(min(tile_b, _round_up(B, 16)), 16))
    # v7x has 2 TensorCores: keep >=2 parallel grid steps when batch allows.
    while tile_b > 128 and pl.cdiv(B, tile_b) < 2:
        tile_b //= 2

    # bf16 weight operands for the MXU (no-ops if already bf16); biases f32.
    w1 = w1.astype(jnp.bfloat16)
    w2 = w2.astype(jnp.bfloat16)
    b1 = b1.astype(jnp.float32)
    b2 = b2.astype(jnp.float32)
    # Pad the (512, 1) output layer to 128 lanes; only column 0 is meaningful.
    w3p = jnp.zeros((H2, H3_PAD), jnp.bfloat16).at[:, :H3].set(
        w3.astype(jnp.bfloat16))
    b3p = jnp.zeros((1, H3_PAD), jnp.float32).at[:, :H3].set(
        b3.astype(jnp.float32))

    grid = (pl.cdiv(B, tile_b),)

    # VMEM budget: double-buffered x/out tiles + (double-buffered) resident
    # weights/biases + f32/bf16 intermediates h1/h2.
    vmem_est = (
        2 * (tile_b * D * 4 + tile_b * H3_PAD * 4)
        + 2 * ((D * H1 + H1 * H2 + H2 * H3_PAD) * 2 + (H1 + H2 + H3_PAD) * 4)
        + tile_b * (H1 + H2) * (4 + 2)
    )
    vmem_limit = int(min(max(2 * vmem_est, 16 << 20), 48 << 20))
    # TODO(synk): for very large d_feature (W1 no longer VMEM-resident,
    # especially on v7x's 64 MiB), add a K-tiling grid axis over D with a
    # pl.when-initialized accumulator instead of holding all of W1 resident.

    flops = 2 * B * (D * H1 + H1 * H2 + H2 * H3)
    bytes_accessed = (
        x.size * 4 + w1.size * 2 + w2.size * 2 + w3p.size * 2
        + b1.size * 4 + b2.size * 4 + b3p.size * 4 + B * H3_PAD * 4
    )

    out_padded = pl.pallas_call(
        mlp_kernel,
        out_shape=jax.ShapeDtypeStruct((B, H3_PAD), jnp.float32),
        grid_spec=pltpu.PrefetchScalarGridSpec(
            num_scalar_prefetch=0,
            grid=grid,
            in_specs=[
                pl.BlockSpec((tile_b, D), lambda i: (i, 0)),    # x tile (batch)
                pl.BlockSpec((D, H1), lambda i: (0, 0)),        # W1 (resident)
                pl.BlockSpec((1, H1), lambda i: (0, 0)),        # b1
                pl.BlockSpec((H1, H2), lambda i: (0, 0)),       # W2
                pl.BlockSpec((1, H2), lambda i: (0, 0)),        # b2
                pl.BlockSpec((H2, H3_PAD), lambda i: (0, 0)),   # W3 (padded)
                pl.BlockSpec((1, H3_PAD), lambda i: (0, 0)),    # b3 (padded)
            ],
            out_specs=pl.BlockSpec((tile_b, H3_PAD), lambda i: (i, 0)),
        ),
        compiler_params=pltpu.CompilerParams(
            dimension_semantics=("parallel",),
            vmem_limit_bytes=vmem_limit),
        cost_estimate=pl.CostEstimate(
            flops=flops, transcendentals=0, bytes_accessed=bytes_accessed),
    )(x, w1, b1, w2, b2, w3p, b3p)

    return out_padded[:, :H3]


def xavier_uniform(key, fan_in, fan_out, gain):
    # Matches torch.nn.init.xavier_uniform_ semantics (stored transposed).
    a = gain * np.sqrt(6.0 / (fan_in + fan_out))
    return jax.random.uniform(key, (fan_in, fan_out), jnp.float32, -a, a)


def default_linear_init(key, fan_in, fan_out):
    # PyTorch nn.Linear default init, stored transposed as (in, out).
    kb, kw = jax.random.split(key)
    bound = 1.0 / np.sqrt(fan_in)
    w = jax.random.uniform(kw, (fan_in, fan_out), jnp.float32, -bound, bound)
    b = jax.random.uniform(kb, (1, fan_out), jnp.float32, -bound, bound)
    return w, b


def make_params(d_feature, key):
    k1, k2, k3, kb1, kb2 = jax.random.split(key, 5)
    gain = np.sqrt(2.0)
    w1 = xavier_uniform(k1, d_feature, H1, gain)
    _, b1 = default_linear_init(kb1, d_feature, H1)
    w2 = xavier_uniform(k2, H1, H2, gain)
    _, b2 = default_linear_init(kb2, H1, H2)
    w3, b3 = default_linear_init(k3, H2, H3)
    # Weights feed the MXU in bf16; biases stay f32 (epilogue runs in f32).
    return {"w1": w1.astype(jnp.bfloat16), "b1": b1,
            "w2": w2.astype(jnp.bfloat16), "b2": b2,
            "w3": w3.astype(jnp.bfloat16), "b3": b3}


def net_forward_ref(x, p):
    # Mirrors the kernel's bf16-operand / f32-accumulate numerics.
    xb = x.astype(jnp.bfloat16)
    h1 = jnp.maximum(
        jnp.dot(xb, p["w1"], preferred_element_type=jnp.float32) + p["b1"], 0.0)
    h2 = jnp.maximum(
        jnp.dot(h1.astype(jnp.bfloat16), p["w2"],
                preferred_element_type=jnp.float32) + p["b2"], 0.0)
    return (jnp.dot(h2.astype(jnp.bfloat16), p["w3"],
                    preferred_element_type=jnp.float32) + p["b3"])


if __name__ == "__main__":
    key = jax.random.PRNGKey(0)
    kx, kp = jax.random.split(key)

    batch, d_feature = 512, 32     # small synthetic shapes; >=2 grid steps
    x = jax.random.normal(kx, (batch, d_feature), jnp.float32)
    params = make_params(d_feature, kp)

    fwd = jax.jit(net_forward)     # fuses w3/b3 padding + column-0 slice
    out = jax.block_until_ready(fwd(x, params))

    ref = net_forward_ref(x, params)
    np.testing.assert_allclose(np.asarray(out),
                               np.asarray(ref, dtype=np.float32),
                               rtol=2e-3, atol=2e-3)
    assert out.shape == (batch, 1)
    print("KERNEL_OK")
</pallas_src>

<mosaic_0001>
module attributes {stable_mosaic.version = 11 : i64} {
  func.func @mlp_kernel(%arg0: i32, %arg1: memref<256x32xf32, #tpu.memory_space<vmem>>, %arg2: memref<32x1024xbf16, #tpu.memory_space<vmem>>, %arg3: memref<1x1024xf32, #tpu.memory_space<vmem>>, %arg4: memref<1024x512xbf16, #tpu.memory_space<vmem>>, %arg5: memref<1x512xf32, #tpu.memory_space<vmem>>, %arg6: memref<512x128xbf16, #tpu.memory_space<vmem>>, %arg7: memref<1x128xf32, #tpu.memory_space<vmem>>, %arg8: memref<256x128xf32, #tpu.memory_space<vmem>>) attributes {dimension_semantics = [#tpu.dimension_semantics<parallel>], iteration_bounds = array<i64: 2>, scalar_prefetch = 0 : i64, scratch_operands = 0 : i64, tpu.core_type = #tpu.core_type<tc>, window_params = [{transform_indices = @transform_0, window_bounds = array<i64: 256, 32>}, {pipeline_mode = #tpu.pipeline_mode<synchronous>, transform_indices = @transform_1, window_bounds = array<i64: 32, 1024>}, {pipeline_mode = #tpu.pipeline_mode<synchronous>, transform_indices = @transform_2, window_bounds = array<i64: 1, 1024>}, {pipeline_mode = #tpu.pipeline_mode<synchronous>, transform_indices = @transform_3, window_bounds = array<i64: 1024, 512>}, {pipeline_mode = #tpu.pipeline_mode<synchronous>, transform_indices = @transform_4, window_bounds = array<i64: 1, 512>}, {pipeline_mode = #tpu.pipeline_mode<synchronous>, transform_indices = @transform_5, window_bounds = array<i64: 512, 128>}, {pipeline_mode = #tpu.pipeline_mode<synchronous>, transform_indices = @transform_6, window_bounds = array<i64: 1, 128>}, {transform_indices = @transform_7, window_bounds = array<i64: 256, 128>}]} {
    %c0 = arith.constant 0 : index
    %c0_0 = arith.constant 0 : index
    %0 = vector.load %arg1[%c0, %c0_0] : memref<256x32xf32, #tpu.memory_space<vmem>>, vector<256x32xf32>
    %1 = arith.truncf %0 : vector<256x32xf32> to vector<256x32xbf16>
    %c0_1 = arith.constant 0 : index
    %c0_2 = arith.constant 0 : index
    %2 = vector.load %arg2[%c0_1, %c0_2] : memref<32x1024xbf16, #tpu.memory_space<vmem>>, vector<32x1024xbf16>
    %cst = arith.constant dense<0.000000e+00> : vector<256x1024xf32>
    %3 = tpu.matmul %1, %2, %cst {dimension_numbers = #tpu.dot_dimension_numbers<[1], [0], [0], [1], [0, 0, 1, 1], [], []>} : vector<256x32xbf16>, vector<32x1024xbf16>, vector<256x1024xf32> -> vector<256x1024xf32>
    %c0_3 = arith.constant 0 : index
    %c0_4 = arith.constant 0 : index
    %4 = vector.load %arg3[%c0_3, %c0_4] : memref<1x1024xf32, #tpu.memory_space<vmem>>, vector<1x1024xf32>
    %5 = vector.broadcast %4 : vector<1x1024xf32> to vector<256x1024xf32>
    %6 = arith.addf %3, %5 : vector<256x1024xf32>
    %cst_5 = arith.constant 0.000000e+00 : f32
    %7 = vector.broadcast %cst_5 : f32 to vector<256x1024xf32>
    %8 = arith.maximumf %6, %7 : vector<256x1024xf32>
    %9 = arith.truncf %8 : vector<256x1024xf32> to vector<256x1024xbf16>
    %c0_6 = arith.constant 0 : index
    %c0_7 = arith.constant 0 : index
    %10 = vector.load %arg4[%c0_6, %c0_7] : memref<1024x512xbf16, #tpu.memory_space<vmem>>, vector<1024x512xbf16>
    %cst_8 = arith.constant dense<0.000000e+00> : vector<256x512xf32>
    %11 = tpu.matmul %9, %10, %cst_8 {dimension_numbers = #tpu.dot_dimension_numbers<[1], [0], [0], [1], [0, 0, 1, 1], [], []>} : vector<256x1024xbf16>, vector<1024x512xbf16>, vector<256x512xf32> -> vector<256x512xf32>
    %c0_9 = arith.constant 0 : index
    %c0_10 = arith.constant 0 : index
    %12 = vector.load %arg5[%c0_9, %c0_10] : memref<1x512xf32, #tpu.memory_space<vmem>>, vector<1x512xf32>
    %13 = vector.broadcast %12 : vector<1x512xf32> to vector<256x512xf32>
    %14 = arith.addf %11, %13 : vector<256x512xf32>
    %cst_11 = arith.constant 0.000000e+00 : f32
    %15 = vector.broadcast %cst_11 : f32 to vector<256x512xf32>
    %16 = arith.maximumf %14, %15 : vector<256x512xf32>
    %17 = arith.truncf %16 : vector<256x512xf32> to vector<256x512xbf16>
    %c0_12 = arith.constant 0 : index
    %c0_13 = arith.constant 0 : index
    %18 = vector.load %arg6[%c0_12, %c0_13] : memref<512x128xbf16, #tpu.memory_space<vmem>>, vector<512x128xbf16>
    %cst_14 = arith.constant dense<0.000000e+00> : vector<256x128xf32>
    %19 = tpu.matmul %17, %18, %cst_14 {dimension_numbers = #tpu.dot_dimension_numbers<[1], [0], [0], [1], [0, 0, 1, 1], [], []>} : vector<256x512xbf16>, vector<512x128xbf16>, vector<256x128xf32> -> vector<256x128xf32>
    %c0_15 = arith.constant 0 : index
    %c0_16 = arith.constant 0 : index
    %20 = vector.load %arg7[%c0_15, %c0_16] : memref<1x128xf32, #tpu.memory_space<vmem>>, vector<1x128xf32>
    %21 = vector.broadcast %20 : vector<1x128xf32> to vector<256x128xf32>
    %22 = arith.addf %19, %21 : vector<256x128xf32>
    %c0_17 = arith.constant 0 : index
    %c0_18 = arith.constant 0 : index
    %23 = vector.load %arg8[%c0_17, %c0_18] : memref<256x128xf32, #tpu.memory_space<vmem>>, vector<256x128xf32>
    tpu.vector_store %arg8[%c0_17, %c0_18], %22 {strides = array<i32>} : memref<256x128xf32, #tpu.memory_space<vmem>>, vector<256x128xf32>,
    return
  }
  func.func @transform_0(%arg0: i32) -> (i32, i32) {
    %c0_i32 = arith.constant 0 : i32
    %c0_i32_0 = arith.constant 0 : i32
    return %arg0, %c0_i32 : i32, i32
  }
  func.func @transform_1(%arg0: i32) -> (i32, i32) {
    %c0_i32 = arith.constant 0 : i32
    %c0_i32_0 = arith.constant 0 : i32
    %c0_i32_1 = arith.constant 0 : i32
    return %c0_i32, %c0_i32_0 : i32, i32
  }
  func.func @transform_2(%arg0: i32) -> (i32, i32) {
    %c0_i32 = arith.constant 0 : i32
    %c0_i32_0 = arith.constant 0 : i32
    %c0_i32_1 = arith.constant 0 : i32
    return %c0_i32, %c0_i32_0 : i32, i32
  }
  func.func @transform_3(%arg0: i32) -> (i32, i32) {
    %c0_i32 = arith.constant 0 : i32
    %c0_i32_0 = arith.constant 0 : i32
    %c0_i32_1 = arith.constant 0 : i32
    return %c0_i32, %c0_i32_0 : i32, i32
  }
  func.func @transform_4(%arg0: i32) -> (i32, i32) {
    %c0_i32 = arith.constant 0 : i32
    %c0_i32_0 = arith.constant 0 : i32
    %c0_i32_1 = arith.constant 0 : i32
    return %c0_i32, %c0_i32_0 : i32, i32
  }
  func.func @transform_5(%arg0: i32) -> (i32, i32) {
    %c0_i32 = arith.constant 0 : i32
    %c0_i32_0 = arith.constant 0 : i32
    %c0_i32_1 = arith.constant 0 : i32
    return %c0_i32, %c0_i32_0 : i32, i32
  }
  func.func @transform_6(%arg0: i32) -> (i32, i32) {
    %c0_i32 = arith.constant 0 : i32
    %c0_i32_0 = arith.constant 0 : i32
    %c0_i32_1 = arith.constant 0 : i32
    return %c0_i32, %c0_i32_0 : i32, i32
  }
  func.func @transform_7(%arg0: i32) -> (i32, i32) {
    %c0_i32 = arith.constant 0 : i32
    %c0_i32_0 = arith.constant 0 : i32
    return %arg0, %c0_i32 : i32, i32
  }
}

</mosaic_0001>

<llo_original>
// kernel: net_forward.1
$region0: #{net_forward.1}
  #allocation0 [shape = 'u32[]', space=smem, size = 0x4, offset = 0x4, fixed_abs, tag = 'smem constant byte address 0x4 - core index']
  #allocation1 [shape = 'u32[144,128]{1,0:T(1,128)}', space=vmem, size = 0x12000, scoped, tag = 'internal scratch']
  %s0 = inlined_call_operand.vmem [shape: f32[512,32], index: 0, kind: input, shape index: {}]
  %s1 = inlined_call_operand.vmem [shape: bf16[32,1024], index: 1, kind: input, shape index: {}]
  %s2 = inlined_call_operand.vmem [shape: f32[1,1024], index: 2, kind: input, shape index: {}]
  %s3 = inlined_call_operand.hbm [shape: bf16[1024,512], index: 3, kind: input, shape index: {}]
  %s4 = inlined_call_operand.vmem [shape: f32[1,512], index: 4, kind: input, shape index: {}]
  %s5 = inlined_call_operand.vmem [shape: bf16[512,128], index: 5, kind: input, shape index: {}]
  %s6 = inlined_call_operand.vmem [shape: f32[1,128], index: 6, kind: input, shape index: {}]
  %s7 = inlined_call_operand.vmem [shape: f32[512,128], index: 7, kind: output, shape index: {}]
  %s8 = sld [smem:[#allocation0]]
  $region65: #{net_forward.1} parent=0
    _
  %s10 = ssub.s32 1, %s8
  %s11 = scalar_select 0, %s10, %s8
  $region1: #{net_forward.1} parent=0
    #allocation2 [shape = 'u8[1048576]{0}', space=vmem, size = 0x100000, scoped, tag = 'input window, operand 3, single buffered']
    #allocation3 [shape = 's32[2]{0}', space=sflag, size = 0x8, scoped, tag = 'scoped memory for net_forward.1']
    %12 = vsyncpa [#allocation3], 0
    loop: start=0, step=1, limit=4
    $region2: #{net_forward.1} parent=1 // loop_pre_header
      _
    $region3: #{net_forward.1} parent=1 // loop_header
      %s14 = sphi 0, %s18
      %p15 = scmp.ge.s32.totalorder %s14, 4
      %s24 = sphi 0, %s26
      %s27 = sphi 0, %s24
      %s28 = sphi 0, %s27
      %s44 = sphi 0, %s28
      %s48 = sphi 0, %s48
      %s50 = sphi 0, %s48
      %s51 = sphi 0, %s50
      %s65 = sphi 0, %s51
      %s69 = sphi 0, %s69
      %s71 = sphi 0, %s69
      %s72 = sphi 0, %s71
      %s86 = sphi 0, %s72
      %s90 = sphi 0, %s90
      %s92 = sphi 0, %s90
      %s93 = sphi 0, %s92
      %s107 = sphi 0, %s93
      %s111 = sphi 0, %s111
      %s113 = sphi 0, %s111
      %s114 = sphi 0, %s113
      %s128 = sphi 0, %s114
      %s132 = sphi 0, %s132
      %s134 = sphi 0, %s132
      %s135 = sphi 0, %s134
      %s149 = sphi 0, %s135
      %s153 = sphi 0, %s153
      %s155 = sphi 0, %s153
      %s156 = sphi 0, %s155
      %s170 = sphi 0, %s156
      %s176 = sphi 0, %s178
      %s179 = sphi 0, %s176
      %s180 = sphi 0, %s179
      %s196 = sphi 0, %s180
    $region4: #{net_forward.1} parent=1 // loop_header_branch
      %17 = sbr.rel (%p15) target = $region8
    $region5: #{net_forward.1} parent=1 // loop_body
      %s19 = ssub.s32 %s14, 1
      %s20 = ssub.s32 %s14, 2
      %s21 = sadd.s32 %s14, 1
      %s22 = ssub.s32 %s14, %s21
      %p23 = scmp.eq.s32.totalorder %s22, 0
      %s25 = sadd.s32 %s24, 1
      %s26 = scalar_select %p23, %s24, %s25
      %p29 = pneg %p23
      %p30 = scmp.eq.s32.totalorder %s14, 1
      %p31 = por %p29, %p30
      %p32 = scmp.ne.s32.totalorder %s24, %s27
      %p33 = scmp.eq.s32.totalorder %s14, 0
      %p34 = por %p32, %p33
      %p35 = scmp.ne.s32.totalorder %s24, %s27
      %p36 = scmp.eq.s32.totalorder %s19, 1
      %p37 = por %p35, %p36
      %p38 = scmp.ne.s32.totalorder %s27, %s28
      %p39 = scmp.eq.s32.totalorder %s19, 0
      %p40 = por %p38, %p39
      %p41 = scmp.ne.s32.totalorder %s27, %s28
      %p42 = scmp.eq.s32.totalorder %s20, 1
      %p43 = por %p41, %p42
      %p45 = scmp.ne.s32.totalorder %s28, %s44
      %p46 = scmp.eq.s32.totalorder %s20, 0
      %p47 = por %p45, %p46
      %s49 = sadd.s32 %s48, 1
      %p52 = scmp.eq.s32.totalorder %s14, 1
      %p53 = scmp.ne.s32.totalorder %s48, %s50
      %p54 = scmp.eq.s32.totalorder %s14, 0
      %p55 = por %p53, %p54
      %p56 = scmp.ne.s32.totalorder %s48, %s50
      %p57 = scmp.eq.s32.totalorder %s19, 1
      %p58 = por %p56, %p57
      %p59 = scmp.ne.s32.totalorder %s50, %s51
      %p60 = scmp.eq.s32.totalorder %s19, 0
      %p61 = por %p59, %p60
      %p62 = scmp.ne.s32.totalorder %s50, %s51
      %p63 = scmp.eq.s32.totalorder %s20, 1
      %p64 = por %p62, %p63
      %p66 = scmp.ne.s32.totalorder %s51, %s65
      %p67 = scmp.eq.s32.totalorder %s20, 0
      %p68 = por %p66, %p67
      %s70 = sadd.s32 %s69, 1
      %p73 = scmp.eq.s32.totalorder %s14, 1
      %p74 = scmp.ne.s32.totalorder %s69, %s71
      %p75 = scmp.eq.s32.totalorder %s14, 0
      %p76 = por %p74, %p75
      %p77 = scmp.ne.s32.totalorder %s69, %s71
      %p78 = scmp.eq.s32.totalorder %s19, 1
      %p79 = por %p77, %p78
      %p80 = scmp.ne.s32.totalorder %s71, %s72
      %p81 = scmp.eq.s32.totalorder %s19, 0
      %p82 = por %p80, %p81
      %p83 = scmp.ne.s32.totalorder %s71, %s72
      %p84 = scmp.eq.s32.totalorder %s20, 1
      %p85 = por %p83, %p84
      %p87 = scmp.ne.s32.totalorder %s72, %s86
      %p88 = scmp.eq.s32.totalorder %s20, 0
      %p89 = por %p87, %p88
      %s91 = sadd.s32 %s90, 1
      %p94 = scmp.eq.s32.totalorder %s14, 1
      %p95 = scmp.ne.s32.totalorder %s90, %s92
      %p96 = scmp.eq.s32.totalorder %s14, 0
      %p97 = por %p95, %p96
      %p98 = scmp.ne.s32.totalorder %s90, %s92
      %p99 = scmp.eq.s32.totalorder %s19, 1
      %p100 = por %p98, %p99
      %p101 = scmp.ne.s32.totalorder %s92, %s93
      %p102 = scmp.eq.s32.totalorder %s19, 0
      %p103 = por %p101, %p102
      %p104 = scmp.ne.s32.totalorder %s92, %s93
      %p105 = scmp.eq.s32.totalorder %s20, 1
      %p106 = por %p104, %p105
      %p108 = scmp.ne.s32.totalorder %s93, %s107
      %p109 = scmp.eq.s32.totalorder %s20, 0
      %p110 = por %p108, %p109
      %s112 = sadd.s32 %s111, 1
      %p115 = scmp.eq.s32.totalorder %s14, 1
      %p116 = scmp.ne.s32.totalorder %s111, %s113
      %p117 = scmp.eq.s32.totalorder %s14, 0
      %p118 = por %p116, %p117
      %p119 = scmp.ne.s32.totalorder %s111, %s113
      %p120 = scmp.eq.s32.totalorder %s19, 1
      %p121 = por %p119, %p120
      %p122 = scmp.ne.s32.totalorder %s113, %s114
      %p123 = scmp.eq.s32.totalorder %s19, 0
      %p124 = por %p122, %p123
      %p125 = scmp.ne.s32.totalorder %s113, %s114
      %p126 = scmp.eq.s32.totalorder %s20, 1
      %p127 = por %p125, %p126
      %p129 = scmp.ne.s32.totalorder %s114, %s128
      %p130 = scmp.eq.s32.totalorder %s20, 0
      %p131 = por %p129, %p130
      %s133 = sadd.s32 %s132, 1
      %p136 = scmp.eq.s32.totalorder %s14, 1
      %p137 = scmp.ne.s32.totalorder %s132, %s134
      %p138 = scmp.eq.s32.totalorder %s14, 0
      %p139 = por %p137, %p138
      %p140 = scmp.ne.s32.totalorder %s132, %s134
      %p141 = scmp.eq.s32.totalorder %s19, 1
      %p142 = por %p140, %p141
      %p143 = scmp.ne.s32.totalorder %s134, %s135
      %p144 = scmp.eq.s32.totalorder %s19, 0
      %p145 = por %p143, %p144
      %p146 = scmp.ne.s32.totalorder %s134, %s135
      %p147 = scmp.eq.s32.totalorder %s20, 1
      %p148 = por %p146, %p147
      %p150 = scmp.ne.s32.totalorder %s135, %s149
      %p151 = scmp.eq.s32.totalorder %s20, 0
      %p152 = por %p150, %p151
      %s154 = sadd.s32 %s153, 1
      %p157 = scmp.eq.s32.totalorder %s14, 1
      %p158 = scmp.ne.s32.totalorder %s153, %s155
      %p159 = scmp.eq.s32.totalorder %s14, 0
      %p160 = por %p158, %p159
      %p161 = scmp.ne.s32.totalorder %s153, %s155
      %p162 = scmp.eq.s32.totalorder %s19, 1
      %p163 = por %p161, %p162
      %p164 = scmp.ne.s32.totalorder %s155, %s156
      %p165 = scmp.eq.s32.totalorder %s19, 0
      %p166 = por %p164, %p165
      %p167 = scmp.ne.s32.totalorder %s155, %s156
      %p168 = scmp.eq.s32.totalorder %s20, 1
      %p169 = por %p167, %p168
      %p171 = scmp.ne.s32.totalorder %s156, %s170
      %p172 = scmp.eq.s32.totalorder %s20, 0
      %p173 = por %p171, %p172
      %s174 = ssub.s32 %s14, %s21
      %p175 = scmp.eq.s32.totalorder %s174, 0
      %s177 = sadd.s32 %s176, 1
      %s178 = scalar_select %p175, %s176, %s177
      %p181 = pneg %p175
      %p182 = scmp.eq.s32.totalorder %s14, 1
      %p183 = por %p181, %p182
      %p184 = scmp.ne.s32.totalorder %s176, %s179
      %p185 = scmp.eq.s32.totalorder %s14, 0
      %p186 = por %p184, %p185
      %p187 = scmp.ne.s32.totalorder %s176, %s179
      %p188 = scmp.eq.s32.totalorder %s19, 1
      %p189 = por %p187, %p188
      %p190 = scmp.ne.s32.totalorder %s179, %s180
      %p191 = scmp.eq.s32.totalorder %s19, 0
      %p192 = por %p190, %p191
      %p193 = scmp.ne.s32.totalorder %s179, %s180
      %p194 = scmp.eq.s32.totalorder %s20, 1
      %p195 = por %p193, %p194
      %p197 = scmp.ne.s32.totalorder %s180, %s196
      %p198 = scmp.eq.s32.totalorder %s20, 0
      %p199 = por %p197, %p198
      %p200 = scmp.le.s32.totalorder 1, %s14
      %p201 = scmp.lt.s32.totalorder %s14, 3
      %p202 = pnand %p200, %p201
      %p203 = pneg %p202
      // Predicated region
      $region9: #{net_forward.1} parent=5 // pred_check
        _
      $region10: #{net_forward.1} parent=5 // pred_check_branch
        %205 = sbr.rel (%p202) target = $region12
      $region11: #{net_forward.1} parent=5 // pred_region
        %s206 = ssub.s32 %s14, 1
        // Predicated region
        $region13: #{net_forward.1} parent=11 // pred_check
          %p207 = pneg %p61
        $region14: #{net_forward.1} parent=11 // pred_check_branch
          %209 = sbr.rel (%p207) target = $region16
        $region15: #{net_forward.1} parent=11 // pred_region
          _
        $region16: #{net_forward.1} parent=11 // pred_fallthru
          _
        // Predicated region
        $region17: #{net_forward.1} parent=11 // pred_check
          %p210 = pneg %p82
        $region18: #{net_forward.1} parent=11 // pred_check_branch
          %212 = sbr.rel (%p210) target = $region20
        $region19: #{net_forward.1} parent=11 // pred_region
          _
        $region20: #{net_forward.1} parent=11 // pred_fallthru
          _
        // Predicated region
        $region21: #{net_forward.1} parent=11 // pred_check
          %p213 = pneg %p103
        $region22: #{net_forward.1} parent=11 // pred_check_branch
          %215 = sbr.rel (%p213) target = $region24
        $region23: #{net_forward.1} parent=11 // pred_region
          %s217 = ssub.s32 32768, 32768
          %218 = vsyncadd [#allocation3], %s217
          %s219 = sshll.u32 [#allocation2], 4
          %s220 = int_to_ptr.vmem [resolvable:$true] %s219
          %225 = dma.hbm_to_vmem [thread:$0]  %s3, 32768, %s220, [#allocation3], 256, 256, 16
        $region24: #{net_forward.1} parent=11 // pred_fallthru
          _
        // Predicated region
        $region25: #{net_forward.1} parent=11 // pred_check
          %p226 = pneg %p124
        $region26: #{net_forward.1} parent=11 // pred_check_branch
          %228 = sbr.rel (%p226) target = $region28
        $region27: #{net_forward.1} parent=11 // pred_region
          _
        $region28: #{net_forward.1} parent=11 // pred_fallthru
          _
        // Predicated region
        $region29: #{net_forward.1} parent=11 // pred_check
          %p229 = pneg %p145
        $region30: #{net_forward.1} parent=11 // pred_check_branch
          %231 = sbr.rel (%p229) target = $region32
        $region31: #{net_forward.1} parent=11 // pred_region
          _
        $region32: #{net_forward.1} parent=11 // pred_fallthru
          _
        // Predicated region
        $region33: #{net_forward.1} parent=11 // pred_check
          %p232 = pneg %p166
        $region34: #{net_forward.1} parent=11 // pred_check_branch
          %234 = sbr.rel (%p232) target = $region36
        $region35: #{net_forward.1} parent=11 // pred_region
          _
        $region36: #{net_forward.1} parent=11 // pred_fallthru
          _
      $region12: #{net_forward.1} parent=5 // pred_fallthru
        _
      %p235 = scmp.lt.s32.totalorder %s14, 2
      // Predicated region
      $region37: #{net_forward.1} parent=5 // pred_check
        %p236 = pneg %p235
      $region38: #{net_forward.1} parent=5 // pred_check_branch
        %238 = sbr.rel (%p236) target = $region40
      $region39: #{net_forward.1} parent=5 // pred_region
        // Predicated region
        $region41: #{net_forward.1} parent=39 // pred_check
          %p239 = pneg %p34
        $region42: #{net_forward.1} parent=39 // pred_check_branch
          %241 = sbr.rel (%p239) target = $region44
        $region43: #{net_forward.1} parent=39 // pred_region
          %s242 = smul.u32 32, %s14
          %p243 = scmp.lt.s32.totalorder %s242, 63
          %s244 = scalar_select %p243, %s242, 63
          %s245 = smul.addr %s244, 8
          %s246 = scalar_lea.vmem %s0, %s245
          %s247 = smul.u32 32, %s14
        $region44: #{net_forward.1} parent=39 // pred_fallthru
          _
      $region40: #{net_forward.1} parent=5 // pred_fallthru
        _
      %p248 = scmp.le.s32.totalorder 1, %s14
      %p249 = scmp.lt.s32.totalorder %s14, 3
      %p250 = pnand %p248, %p249
      %p251 = pneg %p250
      // Predicated region
      $region45: #{net_forward.1} parent=5 // pred_check
        _
      $region46: #{net_forward.1} parent=5 // pred_check_branch
        %253 = sbr.rel (%p250) target = $region48
      $region47: #{net_forward.1} parent=5 // pred_region
        %s254 = ssub.s32 %s14, 1
        // Predicated region
        $region49: #{net_forward.1} parent=47 // pred_check
          %p255 = pneg %p103
        $region50: #{net_forward.1} parent=47 // pred_check_branch
          %257 = sbr.rel (%p255) target = $region52
        $region51: #{net_forward.1} parent=47 // pred_region
          %258 = dma.done [#allocation3], 32768
        $region52: #{net_forward.1} parent=47 // pred_fallthru
          _
        %s259 = smul.u32 32, %s19
        %p260 = scmp.lt.s32.totalorder %s259, 63
        %s261 = scalar_select %p260, %s259, 63
        %s262 = smul.addr %s261, 8
        %s263 = scalar_lea.vmem %s0, %s262
        %p264 = pneg %p40
        %p265 = pneg %p37
        %p266 = pneg %p61
        %p267 = pneg %p58
        %p268 = pneg %p82
        %p269 = pneg %p79
        %p270 = pneg %p103
        %p271 = pneg %p100
        %p272 = pneg %p124
        %p273 = pneg %p121
        %p274 = pneg %p145
        %p275 = pneg %p142
        %p276 = pneg %p166
        %p277 = pneg %p163
        %p278 = pneg %p192
        %p279 = pneg %p189
        %s280 = smul.u32 32, %s19
        %p281 = scmp.lt.s32.totalorder %s280, 63
        %s282 = scalar_select %p281, %s280, 63
        %s283 = smul.addr %s282, 8
        %s284 = scalar_lea.vmem %s7, %s283
        %s285 = smul.u32 32, %s19
        %p286 = scmp.lt.s32.totalorder %s285, 63
        %s287 = scalar_select %p286, %s285, 63
        %s288 = smul.addr %s287, 8
        %s289 = scalar_lea.vmem %s0, %s288
        %s290 = smul.u32 32, %s19
        %s291 = smul.u32 32, %s19
        %p292 = scmp.lt.s32.totalorder %s291, 63
        %s293 = scalar_select %p292, %s291, 63
        %s294 = smul.addr %s293, 8
        %s295 = scalar_lea.vmem %s7, %s294
        %s296 = smul.u32 32, %s19
        %v298 = vld [vmem:[%s289] sm:$0xff]
        %v299 = vld [vmem:[%s289 + $0x8] sm:$0xff]
        %v300 = vld [vmem:[%s289 + $0x10] sm:$0xff]
        %v301 = vld [vmem:[%s289 + $0x18] sm:$0xff]
        %v302 = vld [vmem:[%s289 + $0x20] sm:$0xff]
        %v303 = vld [vmem:[%s289 + $0x28] sm:$0xff]
        %v304 = vld [vmem:[%s289 + $0x30] sm:$0xff]
        %v305 = vld [vmem:[%s289 + $0x38] sm:$0xff]
        %v306 = vld [vmem:[%s289 + $0x40] sm:$0xff]
        %v307 = vld [vmem:[%s289 + $0x48] sm:$0xff]
        %v308 = vld [vmem:[%s289 + $0x50] sm:$0xff]
        %v309 = vld [vmem:[%s289 + $0x58] sm:$0xff]
        %v310 = vld [vmem:[%s289 + $0x60] sm:$0xff]
        %v311 = vld [vmem:[%s289 + $0x68] sm:$0xff]
        %v312 = vld [vmem:[%s289 + $0x70] sm:$0xff]
        %v313 = vld [vmem:[%s289 + $0x78] sm:$0xff]
        %v314 = vld [vmem:[%s289 + $0x80] sm:$0xff]
        %v315 = vld [vmem:[%s289 + $0x88] sm:$0xff]
        %v316 = vld [vmem:[%s289 + $0x90] sm:$0xff]
        %v317 = vld [vmem:[%s289 + $0x98] sm:$0xff]
        %v318 = vld [vmem:[%s289 + $0xa0] sm:$0xff]
        %v319 = vld [vmem:[%s289 + $0xa8] sm:$0xff]
        %v320 = vld [vmem:[%s289 + $0xb0] sm:$0xff]
        %v321 = vld [vmem:[%s289 + $0xb8] sm:$0xff]
        %v322 = vld [vmem:[%s289 + $0xc0] sm:$0xff]
        %v323 = vld [vmem:[%s289 + $0xc8] sm:$0xff]
        %v324 = vld [vmem:[%s289 + $0xd0] sm:$0xff]
        %v325 = vld [vmem:[%s289 + $0xd8] sm:$0xff]
        %v326 = vld [vmem:[%s289 + $0xe0] sm:$0xff]
        %v327 = vld [vmem:[%s289 + $0xe8] sm:$0xff]
        %v328 = vld [vmem:[%s289 + $0xf0] sm:$0xff]
        %v329 = vld [vmem:[%s289 + $0xf8] sm:$0xff]
        %v330 = vpack.c.bf16 %v299, %v298
        %v331 = vpack.c.bf16 %v301, %v300
        %v332 = vpack.c.bf16 %v303, %v302
        %v333 = vpack.c.bf16 %v305, %v304
        %v334 = vpack.c.bf16 %v307, %v306
        %v335 = vpack.c.bf16 %v309, %v308
        %v336 = vpack.c.bf16 %v311, %v310
        %v337 = vpack.c.bf16 %v313, %v312
        %v338 = vpack.c.bf16 %v315, %v314
        %v339 = vpack.c.bf16 %v317, %v316
        %v340 = vpack.c.bf16 %v319, %v318
        %v341 = vpack.c.bf16 %v321, %v320
        %v342 = vpack.c.bf16 %v323, %v322
        %v343 = vpack.c.bf16 %v325, %v324
        %v344 = vpack.c.bf16 %v327, %v326
        %v345 = vpack.c.bf16 %v329, %v328
        %v346 = vld [vmem:[%s1] sm:$0xff]
        %v347 = vld [vmem:[%s1 + $0x8] sm:$0xff]
        %v348 = vld [vmem:[%s1 + $0x10] sm:$0xff]
        %v349 = vld [vmem:[%s1 + $0x18] sm:$0xff]
        %v350 = vld [vmem:[%s1 + $0x20] sm:$0xff]
        %v351 = vld [vmem:[%s1 + $0x28] sm:$0xff]
        %v352 = vld [vmem:[%s1 + $0x30] sm:$0xff]
        %v353 = vld [vmem:[%s1 + $0x38] sm:$0xff]
        %v354 = vld [vmem:[%s1 + $0x40] sm:$0xff]
        %v355 = vld [vmem:[%s1 + $0x48] sm:$0xff]
        %v356 = vld [vmem:[%s1 + $0x50] sm:$0xff]
        %v357 = vld [vmem:[%s1 + $0x58] sm:$0xff]
        %v358 = vld [vmem:[%s1 + $0x60] sm:$0xff]
        %v359 = vld [vmem:[%s1 + $0x68] sm:$0xff]
        %v360 = vld [vmem:[%s1 + $0x70] sm:$0xff]
        %v361 = vld [vmem:[%s1 + $0x78] sm:$0xff]
        %v362 = vld [vmem:[%s2] sm:$0xff]
        %v364 = vlaneseq
        %v365 = vshrl.u32 %v364, 7
        %v366 = vsub.s32 0, %v365
        %v367 = vrot.slane %v362, %v366
        %v368 = vlaneseq
        %v369 = vshrl.u32 %v368, 7
        %v370 = vsub.s32 1, %v369
        %v371 = vrot.slane %v362, %v370
        %v372 = vlaneseq
        %v373 = vshrl.u32 %v372, 7
        %v374 = vsub.s32 2, %v373
        %v375 = vrot.slane %v362, %v374
        %v376 = vlaneseq
        %v377 = vshrl.u32 %v376, 7
        %v378 = vsub.s32 3, %v377
        %v379 = vrot.slane %v362, %v378
        %v380 = vlaneseq
        %v381 = vshrl.u32 %v380, 7
        %v382 = vsub.s32 4, %v381
        %v383 = vrot.slane %v362, %v382
        %v384 = vlaneseq
        %v385 = vshrl.u32 %v384, 7
        %v386 = vsub.s32 5, %v385
        %v387 = vrot.slane %v362, %v386
        %v388 = vlaneseq
        %v389 = vshrl.u32 %v388, 7
        %v390 = vsub.s32 6, %v389
        %v391 = vrot.slane %v362, %v390
        %v392 = vlaneseq
        %v393 = vshrl.u32 %v392, 7
        %v394 = vsub.s32 7, %v393
        %v395 = vrot.slane %v362, %v394
        %v420 = vunpack.c.l.b16 %v346
        %v421 = vunpack.c.h.b16 %v346
        %v422 = vunpack.c.l.b16 %v347
        %v423 = vunpack.c.h.b16 %v347
        %v424 = vunpack.c.l.b16 %v348
        %v425 = vunpack.c.h.b16 %v348
        %v426 = vunpack.c.l.b16 %v349
        %v427 = vunpack.c.h.b16 %v349
        %v428 = vunpack.c.l.b16 %v350
        %v429 = vunpack.c.h.b16 %v350
        %v430 = vunpack.c.l.b16 %v351
        %v431 = vunpack.c.h.b16 %v351
        %v432 = vunpack.c.l.b16 %v352
        %v433 = vunpack.c.h.b16 %v352
        %v434 = vunpack.c.l.b16 %v353
        %v435 = vunpack.c.h.b16 %v353
        %v436 = vunpack.c.l.b16 %v354
        %v437 = vunpack.c.h.b16 %v354
        %v438 = vunpack.c.l.b16 %v355
        %v439 = vunpack.c.h.b16 %v355
        %v440 = vunpack.c.l.b16 %v356
        %v441 = vunpack.c.h.b16 %v356
        %v442 = vunpack.c.l.b16 %v357
        %v443 = vunpack.c.h.b16 %v357
        %v444 = vunpack.c.l.b16 %v358
        %v445 = vunpack.c.h.b16 %v358
        %v446 = vunpack.c.l.b16 %v359
        %v447 = vunpack.c.h.b16 %v359
        %v448 = vunpack.c.l.b16 %v360
        %v449 = vunpack.c.h.b16 %v360
        %v450 = vunpack.c.l.b16 %v361
        %v451 = vunpack.c.h.b16 %v361
        %v452 = vpack.c.b16 %v428, %v420
        %v453 = vpack.c.b16 %v429, %v421
        %v454 = vpack.c.b16 %v430, %v422
        %v455 = vpack.c.b16 %v431, %v423
        %v456 = vpack.c.b16 %v432, %v424
        %v457 = vpack.c.b16 %v433, %v425
        %v458 = vpack.c.b16 %v434, %v426
        %v459 = vpack.c.b16 %v435, %v427
        %v460 = vpack.c.b16 %v444, %v436
        %v461 = vpack.c.b16 %v445, %v437
        %v462 = vpack.c.b16 %v446, %v438
        %v463 = vpack.c.b16 %v447, %v439
        %v464 = vpack.c.b16 %v448, %v440
        %v465 = vpack.c.b16 %v449, %v441
        %v466 = vpack.c.b16 %v450, %v442
        %v467 = vpack.c.b16 %v451, %v443
        %vm484 = vcmask 261120
        %v486 = vsel %vm484, %v330, 0
        %v489 = vsel %vm484, %v331, 0
        %v492 = vsel %vm484, %v332, 0
        %v495 = vsel %vm484, %v333, 0
        %v498 = vsel %vm484, %v334, 0
        %v501 = vsel %vm484, %v335, 0
        %v504 = vsel %vm484, %v336, 0
        %v507 = vsel %vm484, %v337, 0
        %v510 = vsel %vm484, %v338, 0
        %v513 = vsel %vm484, %v339, 0
        %v516 = vsel %vm484, %v340, 0
        %v519 = vsel %vm484, %v341, 0
        %v522 = vsel %vm484, %v342, 0
        %v525 = vsel %vm484, %v343, 0
        %v528 = vsel %vm484, %v344, 0
        %v531 = vsel %vm484, %v345, 0
        %533 = vmatprep.subr.bf16.mxu0 %v453
        %534 = vmatpush1.bf16.msra.mxu0 %v452
        %535 = vmatprep.subr.bf16.mxu0 %v461
        %536 = vmatpush1.bf16.msra.mxu0 %v460
        %537 = vmatprep.subr.bf16.mxu0 0
        %538 = vmatpush1.bf16.msra.mxu0 0
        %539 = vmatprep.subr.bf16.mxu0 0
        %540 = vmatpush1.bf16.msra.mxu0 0
        %541 = vmatprep.subr.bf16.mxu0 0
        %542 = vmatpush1.bf16.msra.mxu0 0
        %543 = vmatprep.subr.bf16.mxu0 0
        %544 = vmatpush1.bf16.msra.mxu0 0
        %545 = vmatprep.subr.bf16.mxu0 0
        %546 = vmatpush1.bf16.msra.mxu0 0
        %547 = vmatprep.subr.bf16.mxu0 0
        %548 = vmatpush1.bf16.msra.mxu0 0
        %549 = vmatprep.subr.bf16.mxu0 0
        %550 = vmatpush1.bf16.msra.mxu0 0
        %551 = vmatprep.subr.bf16.mxu0 0
        %552 = vmatpush1.bf16.msra.mxu0 0
        %553 = vmatprep.subr.bf16.mxu0 0
        %554 = vmatpush1.bf16.msra.mxu0 0
        %555 = vmatprep.subr.bf16.mxu0 0
        %556 = vmatpush1.bf16.msra.mxu0 0
        %557 = vmatprep.subr.bf16.mxu0 0
        %558 = vmatpush1.bf16.msra.mxu0 0
        %559 = vmatprep.subr.bf16.mxu0 0
        %560 = vmatpush1.bf16.msra.mxu0 0
        %561 = vmatprep.subr.bf16.mxu0 0
        %562 = vmatpush1.bf16.msra.mxu0 0
        %563 = vmatprep.subr.bf16.mxu0 0
        %564 = vmatpush1.bf16.msra.mxu0 0
        %565 = vmatprep.mubr.bf16.mxu0 0
        %566 = vmatmul.mubr.bf16.gmra.mrb[0].mxu0 %v486
        %v567 = vpop.f32.mrb[0].mxu0
        %v568 = vadd.f32 %v367, %v567
        %v569 = vpop.f32.mrb[0].mxu0
        %v570 = vadd.f32 %v371, %v569
        %v571 = vpop.f32.mrb[0].mxu0
        %v572 = vadd.f32 %v367, %v571
        %v573 = vpop.f32.mrb[0].mxu0
        %v574 = vadd.f32 %v371, %v573
        %575 = vmatprep.mubr.bf16.mxu0 0
        %576 = vmatmul.mubr.bf16.gmra.mrb[0].mxu0 %v489
        %v577 = vpop.f32.mrb[0].mxu0
        %v578 = vadd.f32 %v367, %v577
        %v579 = vpop.f32.mrb[0].mxu0
        %v580 = vadd.f32 %v371, %v579
        %v581 = vpop.f32.mrb[0].mxu0
        %v582 = vadd.f32 %v367, %v581
        %v583 = vpop.f32.mrb[0].mxu0
        %v584 = vadd.f32 %v371, %v583
        %585 = vmatprep.mubr.bf16.mxu0 0
        %586 = vmatmul.mubr.bf16.gmra.mrb[0].mxu0 %v492
        %v587 = vpop.f32.mrb[0].mxu0
        %v588 = vadd.f32 %v367, %v587
        %v589 = vpop.f32.mrb[0].mxu0
        %v590 = vadd.f32 %v371, %v589
        %v591 = vpop.f32.mrb[0].mxu0
        %v592 = vadd.f32 %v367, %v591
        %v593 = vpop.f32.mrb[0].mxu0
        %v594 = vadd.f32 %v371, %v593
        %595 = vmatprep.mubr.bf16.mxu0 0
        %596 = vmatmul.mubr.bf16.gmra.mrb[0].mxu0 %v495
        %v597 = vpop.f32.mrb[0].mxu0
        %v598 = vadd.f32 %v367, %v597
        %v599 = vpop.f32.mrb[0].mxu0
        %v600 = vadd.f32 %v371, %v599
        %v601 = vpop.f32.mrb[0].mxu0
        %v602 = vadd.f32 %v367, %v601
        %v603 = vpop.f32.mrb[0].mxu0
        %v604 = vadd.f32 %v371, %v603
        %605 = vmatprep.mubr.bf16.mxu0 0
        %606 = vmatmul.mubr.bf16.gmra.mrb[0].mxu0 %v498
        %v607 = vpop.f32.mrb[0].mxu0
        %v608 = vadd.f32 %v367, %v607
        %v609 = vpop.f32.mrb[0].mxu0
        %v610 = vadd.f32 %v371, %v609
        %v611 = vpop.f32.mrb[0].mxu0
        %v612 = vadd.f32 %v367, %v611
        %v613 = vpop.f32.mrb[0].mxu0
        %v614 = vadd.f32 %v371, %v613
        %615 = vmatprep.mubr.bf16.mxu0 0
        %616 = vmatmul.mubr.bf16.gmra.mrb[0].mxu0 %v501
        %v617 = vpop.f32.mrb[0].mxu0
        %v618 = vadd.f32 %v367, %v617
        %v619 = vpop.f32.mrb[0].mxu0
        %v620 = vadd.f32 %v371, %v619
        %v621 = vpop.f32.mrb[0].mxu0
        %v622 = vadd.f32 %v367, %v621
        %v623 = vpop.f32.mrb[0].mxu0
        %v624 = vadd.f32 %v371, %v623
        %625 = vmatprep.mubr.bf16.mxu0 0
        %626 = vmatmul.mubr.bf16.gmra.mrb[0].mxu0 %v504
        %v627 = vpop.f32.mrb[0].mxu0
        %v628 = vadd.f32 %v367, %v627
        %v629 = vpop.f32.mrb[0].mxu0
        %v630 = vadd.f32 %v371, %v629
        %v631 = vpop.f32.mrb[0].mxu0
        %v632 = vadd.f32 %v367, %v631
        %v633 = vpop.f32.mrb[0].mxu0
        %v634 = vadd.f32 %v371, %v633
        %635 = vmatprep.mubr.bf16.mxu0 0
        %636 = vmatmul.mubr.bf16.gmra.mrb[0].mxu0 %v507
        %v637 = vpop.f32.mrb[0].mxu0
        %v638 = vadd.f32 %v367, %v637
        %v639 = vpop.f32.mrb[0].mxu0
        %v640 = vadd.f32 %v371, %v639
        %v641 = vpop.f32.mrb[0].mxu0
        %v642 = vadd.f32 %v367, %v641
        %v643 = vpop.f32.mrb[0].mxu0
        %v644 = vadd.f32 %v371, %v643
        %645 = vmatprep.mubr.bf16.mxu0 0
        %646 = vmatmul.mubr.bf16.gmra.mrb[0].mxu0 %v510
        %v647 = vpop.f32.mrb[0].mxu0
        %v648 = vadd.f32 %v367, %v647
        %v649 = vpop.f32.mrb[0].mxu0
        %v650 = vadd.f32 %v371, %v649
        %v651 = vpop.f32.mrb[0].mxu0
        %v652 = vadd.f32 %v367, %v651
        %v653 = vpop.f32.mrb[0].mxu0
        %v654 = vadd.f32 %v371, %v653
        %655 = vmatprep.mubr.bf16.mxu0 0
        %656 = vmatmul.mubr.bf16.gmra.mrb[0].mxu0 %v513
        %v657 = vpop.f32.mrb[0].mxu0
        %v658 = vadd.f32 %v367, %v657
        %v659 = vpop.f32.mrb[0].mxu0
        %v660 = vadd.f32 %v371, %v659
        %v661 = vpop.f32.mrb[0].mxu0
        %v662 = vadd.f32 %v367, %v661
        %v663 = vpop.f32.mrb[0].mxu0
        %v664 = vadd.f32 %v371, %v663
        %665 = vmatprep.mubr.bf16.mxu0 0
        %666 = vmatmul.mubr.bf16.gmra.mrb[0].mxu0 %v516
        %v667 = vpop.f32.mrb[0].mxu0
        %v668 = vadd.f32 %v367, %v667
        %v669 = vpop.f32.mrb[0].mxu0
        %v670 = vadd.f32 %v371, %v669
        %v671 = vpop.f32.mrb[0].mxu0
        %v672 = vadd.f32 %v367, %v671
        %v673 = vpop.f32.mrb[0].mxu0
        %v674 = vadd.f32 %v371, %v673
        %675 = vmatprep.mubr.bf16.mxu0 0
        %676 = vmatmul.mubr.bf16.gmra.mrb[0].mxu0 %v519
        %v677 = vpop.f32.mrb[0].mxu0
        %v678 = vadd.f32 %v367, %v677
        %v679 = vpop.f32.mrb[0].mxu0
        %v680 = vadd.f32 %v371, %v679
        %v681 = vpop.f32.mrb[0].mxu0
        %v682 = vadd.f32 %v367, %v681
        %v683 = vpop.f32.mrb[0].mxu0
        %v684 = vadd.f32 %v371, %v683
        %685 = vmatprep.mubr.bf16.mxu0 0
        %686 = vmatmul.mubr.bf16.gmra.mrb[0].mxu0 %v522
        %v687 = vpop.f32.mrb[0].mxu0
        %v688 = vadd.f32 %v367, %v687
        %v689 = vpop.f32.mrb[0].mxu0
        %v690 = vadd.f32 %v371, %v689
        %v691 = vpop.f32.mrb[0].mxu0
        %v692 = vadd.f32 %v367, %v691
        %v693 = vpop.f32.mrb[0].mxu0
        %v694 = vadd.f32 %v371, %v693
        %695 = vmatprep.mubr.bf16.mxu0 0
        %696 = vmatmul.mubr.bf16.gmra.mrb[0].mxu0 %v525
        %v697 = vpop.f32.mrb[0].mxu0
        %v698 = vadd.f32 %v367, %v697
        %v699 = vpop.f32.mrb[0].mxu0
        %v700 = vadd.f32 %v371, %v699
        %v701 = vpop.f32.mrb[0].mxu0
        %v702 = vadd.f32 %v367, %v701
        %v703 = vpop.f32.mrb[0].mxu0
        %v704 = vadd.f32 %v371, %v703
        %705 = vmatprep.mubr.bf16.mxu0 0
        %706 = vmatmul.mubr.bf16.gmra.mrb[0].mxu0 %v528
        %v707 = vpop.f32.mrb[0].mxu0
        %v708 = vadd.f32 %v367, %v707
        %v709 = vpop.f32.mrb[0].mxu0
        %v710 = vadd.f32 %v371, %v709
        %v711 = vpop.f32.mrb[0].mxu0
        %v712 = vadd.f32 %v367, %v711
        %v713 = vpop.f32.mrb[0].mxu0
        %v714 = vadd.f32 %v371, %v713
        %715 = vmatprep.mubr.bf16.mxu0 0
        %716 = vmatmul.mubr.bf16.gmra.mrb[0].mxu0 %v531
        %v717 = vpop.f32.mrb[0].mxu0
        %v718 = vadd.f32 %v367, %v717
        %v719 = vpop.f32.mrb[0].mxu0
        %v720 = vadd.f32 %v371, %v719
        %v721 = vpop.f32.mrb[0].mxu0
        %v722 = vadd.f32 %v367, %v721
        %v723 = vpop.f32.mrb[0].mxu0
        %v724 = vadd.f32 %v371, %v723
        %725 = vdwg.mxu0
        %726 = vmatprep.subr.bf16.mxu0 %v455
        %727 = vmatpush1.bf16.msra.mxu0 %v454
        %728 = vmatprep.subr.bf16.mxu0 %v463
        %729 = vmatpush1.bf16.msra.mxu0 %v462
        %730 = vmatprep.subr.bf16.mxu0 0
        %731 = vmatpush1.bf16.msra.mxu0 0
        %732 = vmatprep.subr.bf16.mxu0 0
        %733 = vmatpush1.bf16.msra.mxu0 0
        %734 = vmatprep.subr.bf16.mxu0 0
        %735 = vmatpush1.bf16.msra.mxu0 0
        %736 = vmatprep.subr.bf16.mxu0 0
        %737 = vmatpush1.bf16.msra.mxu0 0
        %738 = vmatprep.subr.bf16.mxu0 0
        %739 = vmatpush1.bf16.msra.mxu0 0
        %740 = vmatprep.subr.bf16.mxu0 0
        %741 = vmatpush1.bf16.msra.mxu0 0
        %742 = vmatprep.subr.bf16.mxu0 0
        %743 = vmatpush1.bf16.msra.mxu0 0
        %744 = vmatprep.subr.bf16.mxu0 0
        %745 = vmatpush1.bf16.msra.mxu0 0
        %746 = vmatprep.subr.bf16.mxu0 0
        %747 = vmatpush1.bf16.msra.mxu0 0
        %748 = vmatprep.subr.bf16.mxu0 0
        %749 = vmatpush1.bf16.msra.mxu0 0
        %750 = vmatprep.subr.bf16.mxu0 0
        %751 = vmatpush1.bf16.msra.mxu0 0
        %752 = vmatprep.subr.bf16.mxu0 0
        %753 = vmatpush1.bf16.msra.mxu0 0
        %754 = vmatprep.subr.bf16.mxu0 0
        %755 = vmatpush1.bf16.msra.mxu0 0
        %756 = vmatprep.subr.bf16.mxu0 0
        %757 = vmatpush1.bf16.msra.mxu0 0
        %758 = vmatprep.mubr.bf16.mxu0 0
        %759 = vmatmul.mubr.bf16.gmra.mrb[0].mxu0 %v486
        %v760 = vpop.f32.mrb[0].mxu0
        %v761 = vadd.f32 %v375, %v760
        %v762 = vpop.f32.mrb[0].mxu0
        %v763 = vadd.f32 %v379, %v762
        %v764 = vpop.f32.mrb[0].mxu0
        %v765 = vadd.f32 %v375, %v764
        %v766 = vpop.f32.mrb[0].mxu0
        %v767 = vadd.f32 %v379, %v766
        %768 = vmatprep.mubr.bf16.mxu0 0
        %769 = vmatmul.mubr.bf16.gmra.mrb[0].mxu0 %v489
        %v770 = vpop.f32.mrb[0].mxu0
        %v771 = vadd.f32 %v375, %v770
        %v772 = vpop.f32.mrb[0].mxu0
        %v773 = vadd.f32 %v379, %v772
        %v774 = vpop.f32.mrb[0].mxu0
        %v775 = vadd.f32 %v375, %v774
        %v776 = vpop.f32.mrb[0].mxu0
        %v777 = vadd.f32 %v379, %v776
        %778 = vmatprep.mubr.bf16.mxu0 0
        %779 = vmatmul.mubr.bf16.gmra.mrb[0].mxu0 %v492
        %v780 = vpop.f32.mrb[0].mxu0
        %v781 = vadd.f32 %v375, %v780
        %v782 = vpop.f32.mrb[0].mxu0
        %v783 = vadd.f32 %v379, %v782
        %v784 = vpop.f32.mrb[0].mxu0
        %v785 = vadd.f32 %v375, %v784
        %v786 = vpop.f32.mrb[0].mxu0
        %v787 = vadd.f32 %v379, %v786
        %788 = vmatprep.mubr.bf16.mxu0 0
        %789 = vmatmul.mubr.bf16.gmra.mrb[0].mxu0 %v495
        %v790 = vpop.f32.mrb[0].mxu0
        %v791 = vadd.f32 %v375, %v790
        %v792 = vpop.f32.mrb[0].mxu0
        %v793 = vadd.f32 %v379, %v792
        %v794 = vpop.f32.mrb[0].mxu0
        %v795 = vadd.f32 %v375, %v794
        %v796 = vpop.f32.mrb[0].mxu0
        %v797 = vadd.f32 %v379, %v796
        %798 = vmatprep.mubr.bf16.mxu0 0
        %799 = vmatmul.mubr.bf16.gmra.mrb[0].mxu0 %v498
        %v800 = vpop.f32.mrb[0].mxu0
        %v801 = vadd.f32 %v375, %v800
        %v802 = vpop.f32.mrb[0].mxu0
        %v803 = vadd.f32 %v379, %v802
        %v804 = vpop.f32.mrb[0].mxu0
        %v805 = vadd.f32 %v375, %v804
        %v806 = vpop.f32.mrb[0].mxu0
        %v807 = vadd.f32 %v379, %v806
        %808 = vmatprep.mubr.bf16.mxu0 0
        %809 = vmatmul.mubr.bf16.gmra.mrb[0].mxu0 %v501
        %v810 = vpop.f32.mrb[0].mxu0
        %v811 = vadd.f32 %v375, %v810
        %v812 = vpop.f32.mrb[0].mxu0
        %v813 = vadd.f32 %v379, %v812
        %v814 = vpop.f32.mrb[0].mxu0
        %v815 = vadd.f32 %v375, %v814
        %v816 = vpop.f32.mrb[0].mxu0
        %v817 = vadd.f32 %v379, %v816
        %818 = vmatprep.mubr.bf16.mxu0 0
        %819 = vmatmul.mubr.bf16.gmra.mrb[0].mxu0 %v504
        %v820 = vpop.f32.mrb[0].mxu0
        %v821 = vadd.f32 %v375, %v820
        %v822 = vpop.f32.mrb[0].mxu0
        %v823 = vadd.f32 %v379, %v822
        %v824 = vpop.f32.mrb[0].mxu0
        %v825 = vadd.f32 %v375, %v824
        %v826 = vpop.f32.mrb[0].mxu0
        %v827 = vadd.f32 %v379, %v826
        %828 = vmatprep.mubr.bf16.mxu0 0
        %829 = vmatmul.mubr.bf16.gmra.mrb[0].mxu0 %v507
        %v830 = vpop.f32.mrb[0].mxu0
        %v831 = vadd.f32 %v375, %v830
        %v832 = vpop.f32.mrb[0].mxu0
        %v833 = vadd.f32 %v379, %v832
        %v834 = vpop.f32.mrb[0].mxu0
        %v835 = vadd.f32 %v375, %v834
        %v836 = vpop.f32.mrb[0].mxu0
        %v837 = vadd.f32 %v379, %v836
        %838 = vmatprep.mubr.bf16.mxu0 0
        %839 = vmatmul.mubr.bf16.gmra.mrb[0].mxu0 %v510
        %v840 = vpop.f32.mrb[0].mxu0
        %v841 = vadd.f32 %v375, %v840
        %v842 = vpop.f32.mrb[0].mxu0
        %v843 = vadd.f32 %v379, %v842
        %v844 = vpop.f32.mrb[0].mxu0
        %v845 = vadd.f32 %v375, %v844
        %v846 = vpop.f32.mrb[0].mxu0
        %v847 = vadd.f32 %v379, %v846
        %848 = vmatprep.mubr.bf16.mxu0 0
        %849 = vmatmul.mubr.bf16.gmra.mrb[0].mxu0 %v513
        %v850 = vpop.f32.mrb[0].mxu0
        %v851 = vadd.f32 %v375, %v850
        %v852 = vpop.f32.mrb[0].mxu0
        %v853 = vadd.f32 %v379, %v852
        %v854 = vpop.f32.mrb[0].mxu0
        %v855 = vadd.f32 %v375, %v854
        %v856 = vpop.f32.mrb[0].mxu0
        %v857 = vadd.f32 %v379, %v856
        %858 = vmatprep.mubr.bf16.mxu0 0
        %859 = vmatmul.mubr.bf16.gmra.mrb[0].mxu0 %v516
        %v860 = vpop.f32.mrb[0].mxu0
        %v861 = vadd.f32 %v375, %v860
        %v862 = vpop.f32.mrb[0].mxu0
        %v863 = vadd.f32 %v379, %v862
        %v864 = vpop.f32.mrb[0].mxu0
        %v865 = vadd.f32 %v375, %v864
        %v866 = vpop.f32.mrb[0].mxu0
        %v867 = vadd.f32 %v379, %v866
        %868 = vmatprep.mubr.bf16.mxu0 0
        %869 = vmatmul.mubr.bf16.gmra.mrb[0].mxu0 %v519
        %v870 = vpop.f32.mrb[0].mxu0
        %v871 = vadd.f32 %v375, %v870
        %v872 = vpop.f32.mrb[0].mxu0
        %v873 = vadd.f32 %v379, %v872
        %v874 = vpop.f32.mrb[0].mxu0
        %v875 = vadd.f32 %v375, %v874
        %v876 = vpop.f32.mrb[0].mxu0
        %v877 = vadd.f32 %v379, %v876
        %878 = vmatprep.mubr.bf16.mxu0 0
        %879 = vmatmul.mubr.bf16.gmra.mrb[0].mxu0 %v522
        %v880 = vpop.f32.mrb[0].mxu0
        %v881 = vadd.f32 %v375, %v880
        %v882 = vpop.f32.mrb[0].mxu0
        %v883 = vadd.f32 %v379, %v882
        %v884 = vpop.f32.mrb[0].mxu0
        %v885 = vadd.f32 %v375, %v884
        %v886 = vpop.f32.mrb[0].mxu0
        %v887 = vadd.f32 %v379, %v886
        %888 = vmatprep.mubr.bf16.mxu0 0
        %889 = vmatmul.mubr.bf16.gmra.mrb[0].mxu0 %v525
        %v890 = vpop.f32.mrb[0].mxu0
        %v891 = vadd.f32 %v375, %v890
        %v892 = vpop.f32.mrb[0].mxu0
        %v893 = vadd.f32 %v379, %v892
        %v894 = vpop.f32.mrb[0].mxu0
        %v895 = vadd.f32 %v375, %v894
        %v896 = vpop.f32.mrb[0].mxu0
        %v897 = vadd.f32 %v379, %v896
        %898 = vmatprep.mubr.bf16.mxu0 0
        %899 = vmatmul.mubr.bf16.gmra.mrb[0].mxu0 %v528
        %v900 = vpop.f32.mrb[0].mxu0
        %v901 = vadd.f32 %v375, %v900
        %v902 = vpop.f32.mrb[0].mxu0
        %v903 = vadd.f32 %v379, %v902
        %v904 = vpop.f32.mrb[0].mxu0
        %v905 = vadd.f32 %v375, %v904
        %v906 = vpop.f32.mrb[0].mxu0
        %v907 = vadd.f32 %v379, %v906
        %908 = vmatprep.mubr.bf16.mxu0 0
        %909 = vmatmul.mubr.bf16.gmra.mrb[0].mxu0 %v531
        %v910 = vpop.f32.mrb[0].mxu0
        %v911 = vadd.f32 %v375, %v910
        %v912 = vpop.f32.mrb[0].mxu0
        %v913 = vadd.f32 %v379, %v912
        %v914 = vpop.f32.mrb[0].mxu0
        %v915 = vadd.f32 %v375, %v914
        %v916 = vpop.f32.mrb[0].mxu0
        %v917 = vadd.f32 %v379, %v916
        %918 = vdwg.mxu0
        %919 = vmatprep.subr.bf16.mxu0 %v457
        %920 = vmatpush1.bf16.msra.mxu0 %v456
        %921 = vmatprep.subr.bf16.mxu0 %v465
        %922 = vmatpush1.bf16.msra.mxu0 %v464
        %923 = vmatprep.subr.bf16.mxu0 0
        %924 = vmatpush1.bf16.msra.mxu0 0
        %925 = vmatprep.subr.bf16.mxu0 0
        %926 = vmatpush1.bf16.msra.mxu0 0
        %927 = vmatprep.subr.bf16.mxu0 0
        %928 = vmatpush1.bf16.msra.mxu0 0
        %929 = vmatprep.subr.bf16.mxu0 0
        %930 = vmatpush1.bf16.msra.mxu0 0
        %931 = vmatprep.subr.bf16.mxu0 0
        %932 = vmatpush1.bf16.msra.mxu0 0
        %933 = vmatprep.subr.bf16.mxu0 0
        %934 = vmatpush1.bf16.msra.mxu0 0
        %935 = vmatprep.subr.bf16.mxu0 0
        %936 = vmatpush1.bf16.msra.mxu0 0
        %937 = vmatprep.subr.bf16.mxu0 0
        %938 = vmatpush1.bf16.msra.mxu0 0
        %939 = vmatprep.subr.bf16.mxu0 0
        %940 = vmatpush1.bf16.msra.mxu0 0
        %941 = vmatprep.subr.bf16.mxu0 0
        %942 = vmatpush1.bf16.msra.mxu0 0
        %943 = vmatprep.subr.bf16.mxu0 0
        %944 = vmatpush1.bf16.msra.mxu0 0
        %945 = vmatprep.subr.bf16.mxu0 0
        %946 = vmatpush1.bf16.msra.mxu0 0
        %947 = vmatprep.subr.bf16.mxu0 0
        %948 = vmatpush1.bf16.msra.mxu0 0
        %949 = vmatprep.subr.bf16.mxu0 0
        %950 = vmatpush1.bf16.msra.mxu0 0
        %951 = vmatprep.mubr.bf16.mxu0 0
        %952 = vmatmul.mubr.bf16.gmra.mrb[0].mxu0 %v486
        %v953 = vpop.f32.mrb[0].mxu0
        %v954 = vadd.f32 %v383, %v953
        %v955 = vpop.f32.mrb[0].mxu0
        %v956 = vadd.f32 %v387, %v955
        %v957 = vpop.f32.mrb[0].mxu0
        %v958 = vadd.f32 %v383, %v957
        %v959 = vpop.f32.mrb[0].mxu0
        %v960 = vadd.f32 %v387, %v959
        %961 = vmatprep.mubr.bf16.mxu0 0
        %962 = vmatmul.mubr.bf16.gmra.mrb[0].mxu0 %v489
        %v963 = vpop.f32.mrb[0].mxu0
        %v964 = vadd.f32 %v383, %v963
        %v965 = vpop.f32.mrb[0].mxu0
        %v966 = vadd.f32 %v387, %v965
        %v967 = vpop.f32.mrb[0].mxu0
        %v968 = vadd.f32 %v383, %v967
        %v969 = vpop.f32.mrb[0].mxu0
        %v970 = vadd.f32 %v387, %v969
        %971 = vmatprep.mubr.bf16.mxu0 0
        %972 = vmatmul.mubr.bf16.gmra.mrb[0].mxu0 %v492
        %v973 = vpop.f32.mrb[0].mxu0
        %v974 = vadd.f32 %v383, %v973
        %v975 = vpop.f32.mrb[0].mxu0
        %v976 = vadd.f32 %v387, %v975
        %v977 = vpop.f32.mrb[0].mxu0
        %v978 = vadd.f32 %v383, %v977
        %v979 = vpop.f32.mrb[0].mxu0
        %v980 = vadd.f32 %v387, %v979
        %981 = vmatprep.mubr.bf16.mxu0 0
        %982 = vmatmul.mubr.bf16.gmra.mrb[0].mxu0 %v495
        %v983 = vpop.f32.mrb[0].mxu0
        %v984 = vadd.f32 %v383, %v983
        %v985 = vpop.f32.mrb[0].mxu0
        %v986 = vadd.f32 %v387, %v985
        %v987 = vpop.f32.mrb[0].mxu0
        %v988 = vadd.f32 %v383, %v987
        %v989 = vpop.f32.mrb[0].mxu0
        %v990 = vadd.f32 %v387, %v989
        %991 = vmatprep.mubr.bf16.mxu0 0
        %992 = vmatmul.mubr.bf16.gmra.mrb[0].mxu0 %v498
        %v993 = vpop.f32.mrb[0].mxu0
        %v994 = vadd.f32 %v383, %v993
        %v995 = vpop.f32.mrb[0].mxu0
        %v996 = vadd.f32 %v387, %v995
        %v997 = vpop.f32.mrb[0].mxu0
        %v998 = vadd.f32 %v383, %v997
        %v999 = vpop.f32.mrb[0].mxu0
        %v1000 = vadd.f32 %v387, %v999
        %1001 = vmatprep.mubr.bf16.mxu0 0
        %1002 = vmatmul.mubr.bf16.gmra.mrb[0].mxu0 %v501
        %v1003 = vpop.f32.mrb[0].mxu0
        %v1004 = vadd.f32 %v383, %v1003
        %v1005 = vpop.f32.mrb[0].mxu0
        %v1006 = vadd.f32 %v387, %v1005
        %v1007 = vpop.f32.mrb[0].mxu0
        %v1008 = vadd.f32 %v383, %v1007
        %v1009 = vpop.f32.mrb[0].mxu0
        %v1010 = vadd.f32 %v387, %v1009
        %1011 = vmatprep.mubr.bf16.mxu0 0
        %1012 = vmatmul.mubr.bf16.gmra.mrb[0].mxu0 %v504
        %v1013 = vpop.f32.mrb[0].mxu0
        %v1014 = vadd.f32 %v383, %v1013
        %v1015 = vpop.f32.mrb[0].mxu0
        %v1016 = vadd.f32 %v387, %v1015
        %v1017 = vpop.f32.mrb[0].mxu0
        %v1018 = vadd.f32 %v383, %v1017
        %v1019 = vpop.f32.mrb[0].mxu0
        %v1020 = vadd.f32 %v387, %v1019
        %1021 = vmatprep.mubr.bf16.mxu0 0
        %1022 = vmatmul.mubr.bf16.gmra.mrb[0].mxu0 %v507
        %v1023 = vpop.f32.mrb[0].mxu0
        %v1024 = vadd.f32 %v383, %v1023
        %v1025 = vpop.f32.mrb[0].mxu0
        %v1026 = vadd.f32 %v387, %v1025
        %v1027 = vpop.f32.mrb[0].mxu0
        %v1028 = vadd.f32 %v383, %v1027
        %v1029 = vpop.f32.mrb[0].mxu0
        %v1030 = vadd.f32 %v387, %v1029
        %1031 = vmatprep.mubr.bf16.mxu0 0
        %1032 = vmatmul.mubr.bf16.gmra.mrb[0].mxu0 %v510
        %v1033 = vpop.f32.mrb[0].mxu0
        %v1034 = vadd.f32 %v383, %v1033
        %v1035 = vpop.f32.mrb[0].mxu0
        %v1036 = vadd.f32 %v387, %v1035
        %v1037 = vpop.f32.mrb[0].mxu0
        %v1038 = vadd.f32 %v383, %v1037
        %v1039 = vpop.f32.mrb[0].mxu0
        %v1040 = vadd.f32 %v387, %v1039
        %1041 = vmatprep.mubr.bf16.mxu0 0
        %1042 = vmatmul.mubr.bf16.gmra.mrb[0].mxu0 %v513
        %v1043 = vpop.f32.mrb[0].mxu0
        %v1044 = vadd.f32 %v383, %v1043
        %v1045 = vpop.f32.mrb[0].mxu0
        %v1046 = vadd.f32 %v387, %v1045
        %v1047 = vpop.f32.mrb[0].mxu0
        %v1048 = vadd.f32 %v383, %v1047
        %v1049 = vpop.f32.mrb[0].mxu0
        %v1050 = vadd.f32 %v387, %v1049
        %1051 = vmatprep.mubr.bf16.mxu0 0
        %1052 = vmatmul.mubr.bf16.gmra.mrb[0].mxu0 %v516
        %v1053 = vpop.f32.mrb[0].mxu0
        %v1054 = vadd.f32 %v383, %v1053
        %v1055 = vpop.f32.mrb[0].mxu0
        %v1056 = vadd.f32 %v387, %v1055
        %v1057 = vpop.f32.mrb[0].mxu0
        %v1058 = vadd.f32 %v383, %v1057
        %v1059 = vpop.f32.mrb[0].mxu0
        %v1060 = vadd.f32 %v387, %v1059
        %1061 = vmatprep.mubr.bf16.mxu0 0
        %1062 = vmatmul.mubr.bf16.gmra.mrb[0].mxu0 %v519
        %v1063 = vpop.f32.mrb[0].mxu0
        %v1064 = vadd.f32 %v383, %v1063
        %v1065 = vpop.f32.mrb[0].mxu0
        %v1066 = vadd.f32 %v387, %v1065
        %v1067 = vpop.f32.mrb[0].mxu0
        %v1068 = vadd.f32 %v383, %v1067
        %v1069 = vpop.f32.mrb[0].mxu0
        %v1070 = vadd.f32 %v387, %v1069
        %1071 = vmatprep.mubr.bf16.mxu0 0
        %1072 = vmatmul.mubr.bf16.gmra.mrb[0].mxu0 %v522
        %v1073 = vpop.f32.mrb[0].mxu0
        %v1074 = vadd.f32 %v383, %v1073
        %v1075 = vpop.f32.mrb[0].mxu0
        %v1076 = vadd.f32 %v387, %v1075
        %v1077 = vpop.f32.mrb[0].mxu0
        %v1078 = vadd.f32 %v383, %v1077
        %v1079 = vpop.f32.mrb[0].mxu0
        %v1080 = vadd.f32 %v387, %v1079
        %1081 = vmatprep.mubr.bf16.mxu0 0
        %1082 = vmatmul.mubr.bf16.gmra.mrb[0].mxu0 %v525
        %v1083 = vpop.f32.mrb[0].mxu0
        %v1084 = vadd.f32 %v383, %v1083
        %v1085 = vpop.f32.mrb[0].mxu0
        %v1086 = vadd.f32 %v387, %v1085
        %v1087 = vpop.f32.mrb[0].mxu0
        %v1088 = vadd.f32 %v383, %v1087
        %v1089 = vpop.f32.mrb[0].mxu0
        %v1090 = vadd.f32 %v387, %v1089
        %1091 = vmatprep.mubr.bf16.mxu0 0
        %1092 = vmatmul.mubr.bf16.gmra.mrb[0].mxu0 %v528
        %v1093 = vpop.f32.mrb[0].mxu0
        %v1094 = vadd.f32 %v383, %v1093
        %v1095 = vpop.f32.mrb[0].mxu0
        %v1096 = vadd.f32 %v387, %v1095
        %v1097 = vpop.f32.mrb[0].mxu0
        %v1098 = vadd.f32 %v383, %v1097
        %v1099 = vpop.f32.mrb[0].mxu0
        %v1100 = vadd.f32 %v387, %v1099
        %1101 = vmatprep.mubr.bf16.mxu0 0
        %1102 = vmatmul.mubr.bf16.gmra.mrb[0].mxu0 %v531
        %v1103 = vpop.f32.mrb[0].mxu0
        %v1104 = vadd.f32 %v383, %v1103
        %v1105 = vpop.f32.mrb[0].mxu0
        %v1106 = vadd.f32 %v387, %v1105
        %v1107 = vpop.f32.mrb[0].mxu0
        %v1108 = vadd.f32 %v383, %v1107
        %v1109 = vpop.f32.mrb[0].mxu0
        %v1110 = vadd.f32 %v387, %v1109
        %1111 = vdwg.mxu0
        %1112 = vmatprep.subr.bf16.mxu0 %v459
        %1113 = vmatpush1.bf16.msra.mxu0 %v458
        %1114 = vmatprep.subr.bf16.mxu0 %v467
        %1115 = vmatpush1.bf16.msra.mxu0 %v466
        %1116 = vmatprep.subr.bf16.mxu0 0
        %1117 = vmatpush1.bf16.msra.mxu0 0
        %1118 = vmatprep.subr.bf16.mxu0 0
        %1119 = vmatpush1.bf16.msra.mxu0 0
        %1120 = vmatprep.subr.bf16.mxu0 0
        %1121 = vmatpush1.bf16.msra.mxu0 0
        %1122 = vmatprep.subr.bf16.mxu0 0
        %1123 = vmatpush1.bf16.msra.mxu0 0
        %1124 = vmatprep.subr.bf16.mxu0 0
        %1125 = vmatpush1.bf16.msra.mxu0 0
        %1126 = vmatprep.subr.bf16.mxu0 0
        %1127 = vmatpush1.bf16.msra.mxu0 0
        %1128 = vmatprep.subr.bf16.mxu0 0
        %1129 = vmatpush1.bf16.msra.mxu0 0
        %1130 = vmatprep.subr.bf16.mxu0 0
        %1131 = vmatpush1.bf16.msra.mxu0 0
        %1132 = vmatprep.subr.bf16.mxu0 0
        %1133 = vmatpush1.bf16.msra.mxu0 0
        %1134 = vmatprep.subr.bf16.mxu0 0
        %1135 = vmatpush1.bf16.msra.mxu0 0
        %1136 = vmatprep.subr.bf16.mxu0 0
        %1137 = vmatpush1.bf16.msra.mxu0 0
        %1138 = vmatprep.subr.bf16.mxu0 0
        %1139 = vmatpush1.bf16.msra.mxu0 0
        %1140 = vmatprep.subr.bf16.mxu0 0
        %1141 = vmatpush1.bf16.msra.mxu0 0
        %1142 = vmatprep.subr.bf16.mxu0 0
        %1143 = vmatpush1.bf16.msra.mxu0 0
        %1144 = vmatprep.mubr.bf16.mxu0 0
        %1145 = vmatmul.mubr.bf16.gmra.mrb[0].mxu0 %v486
        %v1146 = vpop.f32.mrb[0].mxu0
        %v1147 = vadd.f32 %v391, %v1146
        %v1148 = vpop.f32.mrb[0].mxu0
        %v1149 = vadd.f32 %v395, %v1148
        %v1150 = vpop.f32.mrb[0].mxu0
        %v1151 = vadd.f32 %v391, %v1150
        %v1152 = vpop.f32.mrb[0].mxu0
        %v1153 = vadd.f32 %v395, %v1152
        %1154 = vmatprep.mubr.bf16.mxu0 0
        %1155 = vmatmul.mubr.bf16.gmra.mrb[0].mxu0 %v489
        %v1156 = vpop.f32.mrb[0].mxu0
        %v1157 = vadd.f32 %v391, %v1156
        %v1158 = vpop.f32.mrb[0].mxu0
        %v1159 = vadd.f32 %v395, %v1158
        %v1160 = vpop.f32.mrb[0].mxu0
        %v1161 = vadd.f32 %v391, %v1160
        %v1162 = vpop.f32.mrb[0].mxu0
        %v1163 = vadd.f32 %v395, %v1162
        %1164 = vmatprep.mubr.bf16.mxu0 0
        %1165 = vmatmul.mubr.bf16.gmra.mrb[0].mxu0 %v492
        %v1166 = vpop.f32.mrb[0].mxu0
        %v1167 = vadd.f32 %v391, %v1166
        %v1168 = vpop.f32.mrb[0].mxu0
        %v1169 = vadd.f32 %v395, %v1168
        %v1170 = vpop.f32.mrb[0].mxu0
        %v1171 = vadd.f32 %v391, %v1170
        %v1172 = vpop.f32.mrb[0].mxu0
        %v1173 = vadd.f32 %v395, %v1172
        %1174 = vmatprep.mubr.bf16.mxu0 0
        %1175 = vmatmul.mubr.bf16.gmra.mrb[0].mxu0 %v495
        %v1176 = vpop.f32.mrb[0].mxu0
        %v1177 = vadd.f32 %v391, %v1176
        %v1178 = vpop.f32.mrb[0].mxu0
        %v1179 = vadd.f32 %v395, %v1178
        %v1180 = vpop.f32.mrb[0].mxu0
        %v1181 = vadd.f32 %v391, %v1180
        %v1182 = vpop.f32.mrb[0].mxu0
        %v1183 = vadd.f32 %v395, %v1182
        %1184 = vmatprep.mubr.bf16.mxu0 0
        %1185 = vmatmul.mubr.bf16.gmra.mrb[0].mxu0 %v498
        %v1186 = vpop.f32.mrb[0].mxu0
        %v1187 = vadd.f32 %v391, %v1186
        %v1188 = vpop.f32.mrb[0].mxu0
        %v1189 = vadd.f32 %v395, %v1188
        %v1190 = vpop.f32.mrb[0].mxu0
        %v1191 = vadd.f32 %v391, %v1190
        %v1192 = vpop.f32.mrb[0].mxu0
        %v1193 = vadd.f32 %v395, %v1192
        %1194 = vmatprep.mubr.bf16.mxu0 0
        %1195 = vmatmul.mubr.bf16.gmra.mrb[0].mxu0 %v501
        %v1196 = vpop.f32.mrb[0].mxu0
        %v1197 = vadd.f32 %v391, %v1196
        %v1198 = vpop.f32.mrb[0].mxu0
        %v1199 = vadd.f32 %v395, %v1198
        %v1200 = vpop.f32.mrb[0].mxu0
        %v1201 = vadd.f32 %v391, %v1200
        %v1202 = vpop.f32.mrb[0].mxu0
        %v1203 = vadd.f32 %v395, %v1202
        %1204 = vmatprep.mubr.bf16.mxu0 0
        %1205 = vmatmul.mubr.bf16.gmra.mrb[0].mxu0 %v504
        %v1206 = vpop.f32.mrb[0].mxu0
        %v1207 = vadd.f32 %v391, %v1206
        %v1208 = vpop.f32.mrb[0].mxu0
        %v1209 = vadd.f32 %v395, %v1208
        %v1210 = vpop.f32.mrb[0].mxu0
        %v1211 = vadd.f32 %v391, %v1210
        %v1212 = vpop.f32.mrb[0].mxu0
        %v1213 = vadd.f32 %v395, %v1212
        %1214 = vmatprep.mubr.bf16.mxu0 0
        %1215 = vmatmul.mubr.bf16.gmra.mrb[0].mxu0 %v507
        %v1216 = vpop.f32.mrb[0].mxu0
        %v1217 = vadd.f32 %v391, %v1216
        %v1218 = vpop.f32.mrb[0].mxu0
        %v1219 = vadd.f32 %v395, %v1218
        %v1220 = vpop.f32.mrb[0].mxu0
        %v1221 = vadd.f32 %v391, %v1220
        %v1222 = vpop.f32.mrb[0].mxu0
        %v1223 = vadd.f32 %v395, %v1222
        %1224 = vmatprep.mubr.bf16.mxu0 0
        %1225 = vmatmul.mubr.bf16.gmra.mrb[0].mxu0 %v510
        %v1226 = vpop.f32.mrb[0].mxu0
        %v1227 = vadd.f32 %v391, %v1226
        %v1228 = vpop.f32.mrb[0].mxu0
        %v1229 = vadd.f32 %v395, %v1228
        %v1230 = vpop.f32.mrb[0].mxu0
        %v1231 = vadd.f32 %v391, %v1230
        %v1232 = vpop.f32.mrb[0].mxu0
        %v1233 = vadd.f32 %v395, %v1232
        %1234 = vmatprep.mubr.bf16.mxu0 0
        %1235 = vmatmul.mubr.bf16.gmra.mrb[0].mxu0 %v513
        %v1236 = vpop.f32.mrb[0].mxu0
        %v1237 = vadd.f32 %v391, %v1236
        %v1238 = vpop.f32.mrb[0].mxu0
        %v1239 = vadd.f32 %v395, %v1238
        %v1240 = vpop.f32.mrb[0].mxu0
        %v1241 = vadd.f32 %v391, %v1240
        %v1242 = vpop.f32.mrb[0].mxu0
        %v1243 = vadd.f32 %v395, %v1242
        %1244 = vmatprep.mubr.bf16.mxu0 0
        %1245 = vmatmul.mubr.bf16.gmra.mrb[0].mxu0 %v516
        %v1246 = vpop.f32.mrb[0].mxu0
        %v1247 = vadd.f32 %v391, %v1246
        %v1248 = vpop.f32.mrb[0].mxu0
        %v1249 = vadd.f32 %v395, %v1248
        %v1250 = vpop.f32.mrb[0].mxu0
        %v1251 = vadd.f32 %v391, %v1250
        %v1252 = vpop.f32.mrb[0].mxu0
        %v1253 = vadd.f32 %v395, %v1252
        %1254 = vmatprep.mubr.bf16.mxu0 0
        %1255 = vmatmul.mubr.bf16.gmra.mrb[0].mxu0 %v519
        %v1256 = vpop.f32.mrb[0].mxu0
        %v1257 = vadd.f32 %v391, %v1256
        %v1258 = vpop.f32.mrb[0].mxu0
        %v1259 = vadd.f32 %v395, %v1258
        %v1260 = vpop.f32.mrb[0].mxu0
        %v1261 = vadd.f32 %v391, %v1260
        %v1262 = vpop.f32.mrb[0].mxu0
        %v1263 = vadd.f32 %v395, %v1262
        %1264 = vmatprep.mubr.bf16.mxu0 0
        %1265 = vmatmul.mubr.bf16.gmra.mrb[0].mxu0 %v522
        %v1266 = vpop.f32.mrb[0].mxu0
        %v1267 = vadd.f32 %v391, %v1266
        %v1268 = vpop.f32.mrb[0].mxu0
        %v1269 = vadd.f32 %v395, %v1268
        %v1270 = vpop.f32.mrb[0].mxu0
        %v1271 = vadd.f32 %v391, %v1270
        %v1272 = vpop.f32.mrb[0].mxu0
        %v1273 = vadd.f32 %v395, %v1272
        %1274 = vmatprep.mubr.bf16.mxu0 0
        %1275 = vmatmul.mubr.bf16.gmra.mrb[0].mxu0 %v525
        %v1276 = vpop.f32.mrb[0].mxu0
        %v1277 = vadd.f32 %v391, %v1276
        %v1278 = vpop.f32.mrb[0].mxu0
        %v1279 = vadd.f32 %v395, %v1278
        %v1280 = vpop.f32.mrb[0].mxu0
        %v1281 = vadd.f32 %v391, %v1280
        %v1282 = vpop.f32.mrb[0].mxu0
        %v1283 = vadd.f32 %v395, %v1282
        %1284 = vmatprep.mubr.bf16.mxu0 0
        %1285 = vmatmul.mubr.bf16.gmra.mrb[0].mxu0 %v528
        %v1286 = vpop.f32.mrb[0].mxu0
        %v1287 = vadd.f32 %v391, %v1286
        %v1288 = vpop.f32.mrb[0].mxu0
        %v1289 = vadd.f32 %v395, %v1288
        %v1290 = vpop.f32.mrb[0].mxu0
        %v1291 = vadd.f32 %v391, %v1290
        %v1292 = vpop.f32.mrb[0].mxu0
        %v1293 = vadd.f32 %v395, %v1292
        %1294 = vmatprep.mubr.bf16.mxu0 0
        %1295 = vmatmul.mubr.bf16.gmra.mrb[0].mxu0 %v531
        %v1296 = vpop.f32.mrb[0].mxu0
        %v1297 = vadd.f32 %v391, %v1296
        %v1298 = vpop.f32.mrb[0].mxu0
        %v1299 = vadd.f32 %v395, %v1298
        %v1300 = vpop.f32.mrb[0].mxu0
        %v1301 = vadd.f32 %v391, %v1300
        %v1302 = vpop.f32.mrb[0].mxu0
        %v1303 = vadd.f32 %v395, %v1302
        %1304 = vdwg.mxu0
        %v1305 = vmax.f32 %v568, 0.0
        %v1306 = vmax.f32 %v570, 0.0
        %v1307 = vmax.f32 %v761, 0.0
        %v1308 = vmax.f32 %v763, 0.0
        %v1309 = vmax.f32 %v954, 0.0
        %v1310 = vmax.f32 %v956, 0.0
        %v1311 = vmax.f32 %v1147, 0.0
        %v1312 = vmax.f32 %v1149, 0.0
        %v1313 = vmax.f32 %v572, 0.0
        %v1314 = vmax.f32 %v574, 0.0
        %v1315 = vmax.f32 %v765, 0.0
        %v1316 = vmax.f32 %v767, 0.0
        %v1317 = vmax.f32 %v958, 0.0
        %v1318 = vmax.f32 %v960, 0.0
        %v1319 = vmax.f32 %v1151, 0.0
        %v1320 = vmax.f32 %v1153, 0.0
        %v1321 = vmax.f32 %v578, 0.0
        %v1322 = vmax.f32 %v580, 0.0
        %v1323 = vmax.f32 %v771, 0.0
        %v1324 = vmax.f32 %v773, 0.0
        %v1325 = vmax.f32 %v964, 0.0
        %v1326 = vmax.f32 %v966, 0.0
        %v1327 = vmax.f32 %v1157, 0.0
        %v1328 = vmax.f32 %v1159, 0.0
        %v1329 = vmax.f32 %v582, 0.0
        %v1330 = vmax.f32 %v584, 0.0
        %v1331 = vmax.f32 %v775, 0.0
        %v1332 = vmax.f32 %v777, 0.0
        %v1333 = vmax.f32 %v968, 0.0
        %v1334 = vmax.f32 %v970, 0.0
        %v1335 = vmax.f32 %v1161, 0.0
        %v1336 = vmax.f32 %v1163, 0.0
        %v1337 = vmax.f32 %v588, 0.0
        %v1338 = vmax.f32 %v590, 0.0
        %v1339 = vmax.f32 %v781, 0.0
        %v1340 = vmax.f32 %v783, 0.0
        %v1341 = vmax.f32 %v974, 0.0
        %v1342 = vmax.f32 %v976, 0.0
        %v1343 = vmax.f32 %v1167, 0.0
        %v1344 = vmax.f32 %v1169, 0.0
        %v1345 = vmax.f32 %v592, 0.0
        %v1346 = vmax.f32 %v594, 0.0
        %v1347 = vmax.f32 %v785, 0.0
        %v1348 = vmax.f32 %v787, 0.0
        %v1349 = vmax.f32 %v978, 0.0
        %v1350 = vmax.f32 %v980, 0.0
        %v1351 = vmax.f32 %v1171, 0.0
        %v1352 = vmax.f32 %v1173, 0.0
        %v1353 = vmax.f32 %v598, 0.0
        %v1354 = vmax.f32 %v600, 0.0
        %v1355 = vmax.f32 %v791, 0.0
        %v1356 = vmax.f32 %v793, 0.0
        %v1357 = vmax.f32 %v984, 0.0
        %v1358 = vmax.f32 %v986, 0.0
        %v1359 = vmax.f32 %v1177, 0.0
        %v1360 = vmax.f32 %v1179, 0.0
        %v1361 = vmax.f32 %v602, 0.0
        %v1362 = vmax.f32 %v604, 0.0
        %v1363 = vmax.f32 %v795, 0.0
        %v1364 = vmax.f32 %v797, 0.0
        %v1365 = vmax.f32 %v988, 0.0
        %v1366 = vmax.f32 %v990, 0.0
        %v1367 = vmax.f32 %v1181, 0.0
        %v1368 = vmax.f32 %v1183, 0.0
        %v1369 = vmax.f32 %v608, 0.0
        %v1370 = vmax.f32 %v610, 0.0
        %v1371 = vmax.f32 %v801, 0.0
        %v1372 = vmax.f32 %v803, 0.0
        %v1373 = vmax.f32 %v994, 0.0
        %v1374 = vmax.f32 %v996, 0.0
        %v1375 = vmax.f32 %v1187, 0.0
        %v1376 = vmax.f32 %v1189, 0.0
        %v1377 = vmax.f32 %v612, 0.0
        %v1378 = vmax.f32 %v614, 0.0
        %v1379 = vmax.f32 %v805, 0.0
        %v1380 = vmax.f32 %v807, 0.0
        %v1381 = vmax.f32 %v998, 0.0
        %v1382 = vmax.f32 %v1000, 0.0
        %v1383 = vmax.f32 %v1191, 0.0
        %v1384 = vmax.f32 %v1193, 0.0
        %v1385 = vmax.f32 %v618, 0.0
        %v1386 = vmax.f32 %v620, 0.0
        %v1387 = vmax.f32 %v811, 0.0
        %v1388 = vmax.f32 %v813, 0.0
        %v1389 = vmax.f32 %v1004, 0.0
        %v1390 = vmax.f32 %v1006, 0.0
        %v1391 = vmax.f32 %v1197, 0.0
        %v1392 = vmax.f32 %v1199, 0.0
        %v1393 = vmax.f32 %v622, 0.0
        %v1394 = vmax.f32 %v624, 0.0
        %v1395 = vmax.f32 %v815, 0.0
        %v1396 = vmax.f32 %v817, 0.0
        %v1397 = vmax.f32 %v1008, 0.0
        %v1398 = vmax.f32 %v1010, 0.0
        %v1399 = vmax.f32 %v1201, 0.0
        %v1400 = vmax.f32 %v1203, 0.0
        %v1401 = vmax.f32 %v628, 0.0
        %v1402 = vmax.f32 %v630, 0.0
        %v1403 = vmax.f32 %v821, 0.0
        %v1404 = vmax.f32 %v823, 0.0
        %v1405 = vmax.f32 %v1014, 0.0
        %v1406 = vmax.f32 %v1016, 0.0
        %v1407 = vmax.f32 %v1207, 0.0
        %v1408 = vmax.f32 %v1209, 0.0
        %v1409 = vmax.f32 %v632, 0.0
        %v1410 = vmax.f32 %v634, 0.0
        %v1411 = vmax.f32 %v825, 0.0
        %v1412 = vmax.f32 %v827, 0.0
        %v1413 = vmax.f32 %v1018, 0.0
        %v1414 = vmax.f32 %v1020, 0.0
        %v1415 = vmax.f32 %v1211, 0.0
        %v1416 = vmax.f32 %v1213, 0.0
        %v1417 = vmax.f32 %v638, 0.0
        %v1418 = vmax.f32 %v640, 0.0
        %v1419 = vmax.f32 %v831, 0.0
        %v1420 = vmax.f32 %v833, 0.0
        %v1421 = vmax.f32 %v1024, 0.0
        %v1422 = vmax.f32 %v1026, 0.0
        %v1423 = vmax.f32 %v1217, 0.0
        %v1424 = vmax.f32 %v1219, 0.0
        %v1425 = vmax.f32 %v642, 0.0
        %v1426 = vmax.f32 %v644, 0.0
        %v1427 = vmax.f32 %v835, 0.0
        %v1428 = vmax.f32 %v837, 0.0
        %v1429 = vmax.f32 %v1028, 0.0
        %v1430 = vmax.f32 %v1030, 0.0
        %v1431 = vmax.f32 %v1221, 0.0
        %v1432 = vmax.f32 %v1223, 0.0
        %v1433 = vmax.f32 %v648, 0.0
        %v1434 = vmax.f32 %v650, 0.0
        %v1435 = vmax.f32 %v841, 0.0
        %v1436 = vmax.f32 %v843, 0.0
        %v1437 = vmax.f32 %v1034, 0.0
        %v1438 = vmax.f32 %v1036, 0.0
        %v1439 = vmax.f32 %v1227, 0.0
        %v1440 = vmax.f32 %v1229, 0.0
        %v1441 = vmax.f32 %v652, 0.0
        %v1442 = vmax.f32 %v654, 0.0
        %v1443 = vmax.f32 %v845, 0.0
        %v1444 = vmax.f32 %v847, 0.0
        %v1445 = vmax.f32 %v1038, 0.0
        %v1446 = vmax.f32 %v1040, 0.0
        %v1447 = vmax.f32 %v1231, 0.0
        %v1448 = vmax.f32 %v1233, 0.0
        %v1449 = vmax.f32 %v658, 0.0
        %v1450 = vmax.f32 %v660, 0.0
        %v1451 = vmax.f32 %v851, 0.0
        %v1452 = vmax.f32 %v853, 0.0
        %v1453 = vmax.f32 %v1044, 0.0
        %v1454 = vmax.f32 %v1046, 0.0
        %v1455 = vmax.f32 %v1237, 0.0
        %v1456 = vmax.f32 %v1239, 0.0
        %v1457 = vmax.f32 %v662, 0.0
        %v1458 = vmax.f32 %v664, 0.0
        %v1459 = vmax.f32 %v855, 0.0
        %v1460 = vmax.f32 %v857, 0.0
        %v1461 = vmax.f32 %v1048, 0.0
        %v1462 = vmax.f32 %v1050, 0.0
        %v1463 = vmax.f32 %v1241, 0.0
        %v1464 = vmax.f32 %v1243, 0.0
        %v1465 = vmax.f32 %v668, 0.0
        %v1466 = vmax.f32 %v670, 0.0
        %v1467 = vmax.f32 %v861, 0.0
        %v1468 = vmax.f32 %v863, 0.0
        %v1469 = vmax.f32 %v1054, 0.0
        %v1470 = vmax.f32 %v1056, 0.0
        %v1471 = vmax.f32 %v1247, 0.0
        %v1472 = vmax.f32 %v1249, 0.0
        %v1473 = vmax.f32 %v672, 0.0
        %v1474 = vmax.f32 %v674, 0.0
        %v1475 = vmax.f32 %v865, 0.0
        %v1476 = vmax.f32 %v867, 0.0
        %v1477 = vmax.f32 %v1058, 0.0
        %v1478 = vmax.f32 %v1060, 0.0
        %v1479 = vmax.f32 %v1251, 0.0
        %v1480 = vmax.f32 %v1253, 0.0
        %v1481 = vmax.f32 %v678, 0.0
        %v1482 = vmax.f32 %v680, 0.0
        %v1483 = vmax.f32 %v871, 0.0
        %v1484 = vmax.f32 %v873, 0.0
        %v1485 = vmax.f32 %v1064, 0.0
        %v1486 = vmax.f32 %v1066, 0.0
        %v1487 = vmax.f32 %v1257, 0.0
        %v1488 = vmax.f32 %v1259, 0.0
        %v1489 = vmax.f32 %v682, 0.0
        %v1490 = vmax.f32 %v684, 0.0
        %v1491 = vmax.f32 %v875, 0.0
        %v1492 = vmax.f32 %v877, 0.0
        %v1493 = vmax.f32 %v1068, 0.0
        %v1494 = vmax.f32 %v1070, 0.0
        %v1495 = vmax.f32 %v1261, 0.0
        %v1496 = vmax.f32 %v1263, 0.0
        %v1497 = vmax.f32 %v688, 0.0
        %v1498 = vmax.f32 %v690, 0.0
        %v1499 = vmax.f32 %v881, 0.0
        %v1500 = vmax.f32 %v883, 0.0
        %v1501 = vmax.f32 %v1074, 0.0
        %v1502 = vmax.f32 %v1076, 0.0
        %v1503 = vmax.f32 %v1267, 0.0
        %v1504 = vmax.f32 %v1269, 0.0
        %v1505 = vmax.f32 %v692, 0.0
        %v1506 = vmax.f32 %v694, 0.0
        %v1507 = vmax.f32 %v885, 0.0
        %v1508 = vmax.f32 %v887, 0.0
        %v1509 = vmax.f32 %v1078, 0.0
        %v1510 = vmax.f32 %v1080, 0.0
        %v1511 = vmax.f32 %v1271, 0.0
        %v1512 = vmax.f32 %v1273, 0.0
        %v1513 = vmax.f32 %v698, 0.0
        %v1514 = vmax.f32 %v700, 0.0
        %v1515 = vmax.f32 %v891, 0.0
        %v1516 = vmax.f32 %v893, 0.0
        %v1517 = vmax.f32 %v1084, 0.0
        %v1518 = vmax.f32 %v1086, 0.0
        %v1519 = vmax.f32 %v1277, 0.0
        %v1520 = vmax.f32 %v1279, 0.0
        %v1521 = vmax.f32 %v702, 0.0
        %v1522 = vmax.f32 %v704, 0.0
        %v1523 = vmax.f32 %v895, 0.0
        %v1524 = vmax.f32 %v897, 0.0
        %v1525 = vmax.f32 %v1088, 0.0
        %v1526 = vmax.f32 %v1090, 0.0
        %v1527 = vmax.f32 %v1281, 0.0
        %v1528 = vmax.f32 %v1283, 0.0
        %v1529 = vmax.f32 %v708, 0.0
        %v1530 = vmax.f32 %v710, 0.0
        %v1531 = vmax.f32 %v901, 0.0
        %v1532 = vmax.f32 %v903, 0.0
        %v1533 = vmax.f32 %v1094, 0.0
        %v1534 = vmax.f32 %v1096, 0.0
        %v1535 = vmax.f32 %v1287, 0.0
        %v1536 = vmax.f32 %v1289, 0.0
        %v1537 = vmax.f32 %v712, 0.0
        %v1538 = vmax.f32 %v714, 0.0
        %v1539 = vmax.f32 %v905, 0.0
        %v1540 = vmax.f32 %v907, 0.0
        %v1541 = vmax.f32 %v1098, 0.0
        %v1542 = vmax.f32 %v1100, 0.0
        %v1543 = vmax.f32 %v1291, 0.0
        %v1544 = vmax.f32 %v1293, 0.0
        %v1545 = vmax.f32 %v718, 0.0
        %v1546 = vmax.f32 %v720, 0.0
        %v1547 = vmax.f32 %v911, 0.0
        %v1548 = vmax.f32 %v913, 0.0
        %v1549 = vmax.f32 %v1104, 0.0
        %v1550 = vmax.f32 %v1106, 0.0
        %v1551 = vmax.f32 %v1297, 0.0
        %v1552 = vmax.f32 %v1299, 0.0
        %v1553 = vmax.f32 %v722, 0.0
        %v1554 = vmax.f32 %v724, 0.0
        %v1555 = vmax.f32 %v915, 0.0
        %v1556 = vmax.f32 %v917, 0.0
        %v1557 = vmax.f32 %v1108, 0.0
        %v1558 = vmax.f32 %v1110, 0.0
        %v1559 = vmax.f32 %v1301, 0.0
        %v1560 = vmax.f32 %v1303, 0.0
        %v1561 = vpack.c.bf16 %v1313, %v1305
        %v1562 = vpack.c.bf16 %v1314, %v1306
        %v1563 = vpack.c.bf16 %v1315, %v1307
        %v1564 = vpack.c.bf16 %v1316, %v1308
        %v1565 = vpack.c.bf16 %v1317, %v1309
        %v1566 = vpack.c.bf16 %v1318, %v1310
        %v1567 = vpack.c.bf16 %v1319, %v1311
        %v1568 = vpack.c.bf16 %v1320, %v1312
        %v1569 = vpack.c.bf16 %v1329, %v1321
        %v1570 = vpack.c.bf16 %v1330, %v1322
        %v1571 = vpack.c.bf16 %v1331, %v1323
        %v1572 = vpack.c.bf16 %v1332, %v1324
        %v1573 = vpack.c.bf16 %v1333, %v1325
        %v1574 = vpack.c.bf16 %v1334, %v1326
        %v1575 = vpack.c.bf16 %v1335, %v1327
        %v1576 = vpack.c.bf16 %v1336, %v1328
        %v1577 = vpack.c.bf16 %v1345, %v1337
        %v1578 = vpack.c.bf16 %v1346, %v1338
        %v1579 = vpack.c.bf16 %v1347, %v1339
        %v1580 = vpack.c.bf16 %v1348, %v1340
        %v1581 = vpack.c.bf16 %v1349, %v1341
        %v1582 = vpack.c.bf16 %v1350, %v1342
        %v1583 = vpack.c.bf16 %v1351, %v1343
        %v1584 = vpack.c.bf16 %v1352, %v1344
        %v1585 = vpack.c.bf16 %v1361, %v1353
        %v1586 = vpack.c.bf16 %v1362, %v1354
        %v1587 = vpack.c.bf16 %v1363, %v1355
        %v1588 = vpack.c.bf16 %v1364, %v1356
        %v1589 = vpack.c.bf16 %v1365, %v1357
        %v1590 = vpack.c.bf16 %v1366, %v1358
        %v1591 = vpack.c.bf16 %v1367, %v1359
        %v1592 = vpack.c.bf16 %v1368, %v1360
        %v1593 = vpack.c.bf16 %v1377, %v1369
        %v1594 = vpack.c.bf16 %v1378, %v1370
        %v1595 = vpack.c.bf16 %v1379, %v1371
        %v1596 = vpack.c.bf16 %v1380, %v1372
        %v1597 = vpack.c.bf16 %v1381, %v1373
        %v1598 = vpack.c.bf16 %v1382, %v1374
        %v1599 = vpack.c.bf16 %v1383, %v1375
        %v1600 = vpack.c.bf16 %v1384, %v1376
        %v1601 = vpack.c.bf16 %v1393, %v1385
        %v1602 = vpack.c.bf16 %v1394, %v1386
        %v1603 = vpack.c.bf16 %v1395, %v1387
        %v1604 = vpack.c.bf16 %v1396, %v1388
        %v1605 = vpack.c.bf16 %v1397, %v1389
        %v1606 = vpack.c.bf16 %v1398, %v1390
        %v1607 = vpack.c.bf16 %v1399, %v1391
        %v1608 = vpack.c.bf16 %v1400, %v1392
        %v1609 = vpack.c.bf16 %v1409, %v1401
        %v1610 = vpack.c.bf16 %v1410, %v1402
        %v1611 = vpack.c.bf16 %v1411, %v1403
        %v1612 = vpack.c.bf16 %v1412, %v1404
        %v1613 = vpack.c.bf16 %v1413, %v1405
        %v1614 = vpack.c.bf16 %v1414, %v1406
        %v1615 = vpack.c.bf16 %v1415, %v1407
        %v1616 = vpack.c.bf16 %v1416, %v1408
        %v1617 = vpack.c.bf16 %v1425, %v1417
        %v1618 = vpack.c.bf16 %v1426, %v1418
        %v1619 = vpack.c.bf16 %v1427, %v1419
        %v1620 = vpack.c.bf16 %v1428, %v1420
        %v1621 = vpack.c.bf16 %v1429, %v1421
        %v1622 = vpack.c.bf16 %v1430, %v1422
        %v1623 = vpack.c.bf16 %v1431, %v1423
        %v1624 = vpack.c.bf16 %v1432, %v1424
        %v1625 = vpack.c.bf16 %v1441, %v1433
        %v1626 = vpack.c.bf16 %v1442, %v1434
        %v1627 = vpack.c.bf16 %v1443, %v1435
        %v1628 = vpack.c.bf16 %v1444, %v1436
        %v1629 = vpack.c.bf16 %v1445, %v1437
        %v1630 = vpack.c.bf16 %v1446, %v1438
        %v1631 = vpack.c.bf16 %v1447, %v1439
        %v1632 = vpack.c.bf16 %v1448, %v1440
        %v1633 = vpack.c.bf16 %v1457, %v1449
        %v1634 = vpack.c.bf16 %v1458, %v1450
        %v1635 = vpack.c.bf16 %v1459, %v1451
        %v1636 = vpack.c.bf16 %v1460, %v1452
        %v1637 = vpack.c.bf16 %v1461, %v1453
        %v1638 = vpack.c.bf16 %v1462, %v1454
        %v1639 = vpack.c.bf16 %v1463, %v1455
        %v1640 = vpack.c.bf16 %v1464, %v1456
        %v1641 = vpack.c.bf16 %v1473, %v1465
        %v1642 = vpack.c.bf16 %v1474, %v1466
        %v1643 = vpack.c.bf16 %v1475, %v1467
        %v1644 = vpack.c.bf16 %v1476, %v1468
        %v1645 = vpack.c.bf16 %v1477, %v1469
        %v1646 = vpack.c.bf16 %v1478, %v1470
        %v1647 = vpack.c.bf16 %v1479, %v1471
        %v1648 = vpack.c.bf16 %v1480, %v1472
        %v1649 = vpack.c.bf16 %v1489, %v1481
        %v1650 = vpack.c.bf16 %v1490, %v1482
        %v1651 = vpack.c.bf16 %v1491, %v1483
        %v1652 = vpack.c.bf16 %v1492, %v1484
        %v1653 = vpack.c.bf16 %v1493, %v1485
        %v1654 = vpack.c.bf16 %v1494, %v1486
        %v1655 = vpack.c.bf16 %v1495, %v1487
        %v1656 = vpack.c.bf16 %v1496, %v1488
        %v1657 = vpack.c.bf16 %v1505, %v1497
        %v1658 = vpack.c.bf16 %v1506, %v1498
        %v1659 = vpack.c.bf16 %v1507, %v1499
        %v1660 = vpack.c.bf16 %v1508, %v1500
        %v1661 = vpack.c.bf16 %v1509, %v1501
        %v1662 = vpack.c.bf16 %v1510, %v1502
        %v1663 = vpack.c.bf16 %v1511, %v1503
        %v1664 = vpack.c.bf16 %v1512, %v1504
        %v1665 = vpack.c.bf16 %v1521, %v1513
        %v1666 = vpack.c.bf16 %v1522, %v1514
        %v1667 = vpack.c.bf16 %v1523, %v1515
        %v1668 = vpack.c.bf16 %v1524, %v1516
        %v1669 = vpack.c.bf16 %v1525, %v1517
        %v1670 = vpack.c.bf16 %v1526, %v1518
        %v1671 = vpack.c.bf16 %v1527, %v1519
        %v1672 = vpack.c.bf16 %v1528, %v1520
        %v1673 = vpack.c.bf16 %v1537, %v1529
        %v1674 = vpack.c.bf16 %v1538, %v1530
        %v1675 = vpack.c.bf16 %v1539, %v1531
        %v1676 = vpack.c.bf16 %v1540, %v1532
        %v1677 = vpack.c.bf16 %v1541, %v1533
        %v1678 = vpack.c.bf16 %v1542, %v1534
        %v1679 = vpack.c.bf16 %v1543, %v1535
        %v1680 = vpack.c.bf16 %v1544, %v1536
        %v1681 = vpack.c.bf16 %v1553, %v1545
        %v1682 = vpack.c.bf16 %v1554, %v1546
        %v1683 = vpack.c.bf16 %v1555, %v1547
        %v1684 = vpack.c.bf16 %v1556, %v1548
        %v1685 = vpack.c.bf16 %v1557, %v1549
        %v1686 = vpack.c.bf16 %v1558, %v1550
        %v1687 = vpack.c.bf16 %v1559, %v1551
        %v1688 = vpack.c.bf16 %v1560, %v1552
        %v1689 = vld [vmem:[#allocation2] sm:$0xff]
        %v1690 = vld [vmem:[#allocation2 + $0x8] sm:$0xff]
        %v1691 = vld [vmem:[#allocation2 + $0x10] sm:$0xff]
        %v1692 = vld [vmem:[#allocation2 + $0x18] sm:$0xff]
        %v1693 = vld [vmem:[#allocation2 + $0x20] sm:$0xff]
        %v1694 = vld [vmem:[#allocation2 + $0x28] sm:$0xff]
        %v1695 = vld [vmem:[#allocation2 + $0x30] sm:$0xff]
        %v1696 = vld [vmem:[#allocation2 + $0x38] sm:$0xff]
        %v1697 = vld [vmem:[#allocation2 + $0x40] sm:$0xff]
        %v1698 = vld [vmem:[#allocation2 + $0x48] sm:$0xff]
        %v1699 = vld [vmem:[#allocation2 + $0x50] sm:$0xff]
        %v1700 = vld [vmem:[#allocation2 + $0x58] sm:$0xff]
        %v1701 = vld [vmem:[#allocation2 + $0x60] sm:$0xff]
        %v1702 = vld [vmem:[#allocation2 + $0x68] sm:$0xff]
        %v1703 = vld [vmem:[#allocation2 + $0x70] sm:$0xff]
        %v1704 = vld [vmem:[#allocation2 + $0x78] sm:$0xff]
        %v1705 = vld [vmem:[#allocation2 + $0x80] sm:$0xff]
        %v1706 = vld [vmem:[#allocation2 + $0x88] sm:$0xff]
        %v1707 = vld [vmem:[#allocation2 + $0x90] sm:$0xff]
        %v1708 = vld [vmem:[#allocation2 + $0x98] sm:$0xff]
        %v1709 = vld [vmem:[#allocation2 + $0xa0] sm:$0xff]
        %v1710 = vld [vmem:[#allocation2 + $0xa8] sm:$0xff]
        %v1711 = vld [vmem:[#allocation2 + $0xb0] sm:$0xff]
        %v1712 = vld [vmem:[#allocation2 + $0xb8] sm:$0xff]
        %v1713 = vld [vmem:[#allocation2 + $0xc0] sm:$0xff]
        %v1714 = vld [vmem:[#allocation2 + $0xc8] sm:$0xff]
        %v1715 = vld [vmem:[#allocation2 + $0xd0] sm:$0xff]
        %v1716 = vld [vmem:[#allocation2 + $0xd8] sm:$0xff]
        %v1717 = vld [vmem:[#allocation2 + $0xe0] sm:$0xff]
        %v1718 = vld [vmem:[#allocation2 + $0xe8] sm:$0xff]
        %v1719 = vld [vmem:[#allocation2 + $0xf0] sm:$0xff]
        %v1720 = vld [vmem:[#allocation2 + $0xf8] sm:$0xff]
        %v1721 = vld [vmem:[#allocation2 + $0x100] sm:$0xff]
        %v1722 = vld [vmem:[#allocation2 + $0x108] sm:$0xff]
        %v1723 = vld [vmem:[#allocation2 + $0x110] sm:$0xff]
        %v1724 = vld [vmem:[#allocation2 + $0x118] sm:$0xff]
        %v1725 = vld [vmem:[#allocation2 + $0x120] sm:$0xff]
        %v1726 = vld [vmem:[#allocation2 + $0x128] sm:$0xff]
        %v1727 = vld [vmem:[#allocation2 + $0x130] sm:$0xff]
        %v1728 = vld [vmem:[#allocation2 + $0x138] sm:$0xff]
        %v1729 = vld [vmem:[#allocation2 + $0x140] sm:$0xff]
        %v1730 = vld [vmem:[#allocation2 + $0x148] sm:$0xff]
        %v1731 = vld [vmem:[#allocation2 + $0x150] sm:$0xff]
        %v1732 = vld [vmem:[#allocation2 + $0x158] sm:$0xff]
        %v1733 = vld [vmem:[#allocation2 + $0x160] sm:$0xff]
        %v1734 = vld [vmem:[#allocation2 + $0x168] sm:$0xff]
        %v1735 = vld [vmem:[#allocation2 + $0x170] sm:$0xff]
        %v1736 = vld [vmem:[#allocation2 + $0x178] sm:$0xff]
        %v1737 = vld [vmem:[#allocation2 + $0x180] sm:$0xff]
        %v1738 = vld [vmem:[#allocation2 + $0x188] sm:$0xff]
        %v1739 = vld [vmem:[#allocation2 + $0x190] sm:$0xff]
        %v1740 = vld [vmem:[#allocation2 + $0x198] sm:$0xff]
        %v1741 = vld [vmem:[#allocation2 + $0x1a0] sm:$0xff]
        %v1742 = vld [vmem:[#allocation2 + $0x1a8] sm:$0xff]
        %v1743 = vld [vmem:[#allocation2 + $0x1b0] sm:$0xff]
        %v1744 = vld [vmem:[#allocation2 + $0x1b8] sm:$0xff]
        %v1745 = vld [vmem:[#allocation2 + $0x1c0] sm:$0xff]
        %v1746 = vld [vmem:[#allocation2 + $0x1c8] sm:$0xff]
        %v1747 = vld [vmem:[#allocation2 + $0x1d0] sm:$0xff]
        %v1748 = vld [vmem:[#allocation2 + $0x1d8] sm:$0xff]
        %v1749 = vld [vmem:[#allocation2 + $0x1e0] sm:$0xff]
        %v1750 = vld [vmem:[#allocation2 + $0x1e8] sm:$0xff]
        %v1751 = vld [vmem:[#allocation2 + $0x1f0] sm:$0xff]
        %v1752 = vld [vmem:[#allocation2 + $0x1f8] sm:$0xff]
        %v1753 = vld [vmem:[#allocation2 + $0x200] sm:$0xff]
        %v1754 = vld [vmem:[#allocation2 + $0x208] sm:$0xff]
        %v1755 = vld [vmem:[#allocation2 + $0x210] sm:$0xff]
        %v1756 = vld [vmem:[#allocation2 + $0x218] sm:$0xff]
        %v1757 = vld [vmem:[#allocation2 + $0x220] sm:$0xff]
        %v1758 = vld [vmem:[#allocation2 + $0x228] sm:$0xff]
        %v1759 = vld [vmem:[#allocation2 + $0x230] sm:$0xff]
        %v1760 = vld [vmem:[#allocation2 + $0x238] sm:$0xff]
        %v1761 = vld [vmem:[#allocation2 + $0x240] sm:$0xff]
        %v1762 = vld [vmem:[#allocation2 + $0x248] sm:$0xff]
        %v1763 = vld [vmem:[#allocation2 + $0x250] sm:$0xff]
        %v1764 = vld [vmem:[#allocation2 + $0x258] sm:$0xff]
        %v1765 = vld [vmem:[#allocation2 + $0x260] sm:$0xff]
        %v1766 = vld [vmem:[#allocation2 + $0x268] sm:$0xff]
        %v1767 = vld [vmem:[#allocation2 + $0x270] sm:$0xff]
        %v1768 = vld [vmem:[#allocation2 + $0x278] sm:$0xff]
        %v1769 = vld [vmem:[#allocation2 + $0x280] sm:$0xff]
        %v1770 = vld [vmem:[#allocation2 + $0x288] sm:$0xff]
        %v1771 = vld [vmem:[#allocation2 + $0x290] sm:$0xff]
        %v1772 = vld [vmem:[#allocation2 + $0x298] sm:$0xff]
        %v1773 = vld [vmem:[#allocation2 + $0x2a0] sm:$0xff]
        %v1774 = vld [vmem:[#allocation2 + $0x2a8] sm:$0xff]
        %v1775 = vld [vmem:[#allocation2 + $0x2b0] sm:$0xff]
        %v1776 = vld [vmem:[#allocation2 + $0x2b8] sm:$0xff]
        %v1777 = vld [vmem:[#allocation2 + $0x2c0] sm:$0xff]
        %v1778 = vld [vmem:[#allocation2 + $0x2c8] sm:$0xff]
        %v1779 = vld [vmem:[#allocation2 + $0x2d0] sm:$0xff]
        %v1780 = vld [vmem:[#allocation2 + $0x2d8] sm:$0xff]
        %v1781 = vld [vmem:[#allocation2 + $0x2e0] sm:$0xff]
        %v1782 = vld [vmem:[#allocation2 + $0x2e8] sm:$0xff]
        %v1783 = vld [vmem:[#allocation2 + $0x2f0] sm:$0xff]
        %v1784 = vld [vmem:[#allocation2 + $0x2f8] sm:$0xff]
        %v1785 = vld [vmem:[#allocation2 + $0x300] sm:$0xff]
        %v1786 = vld [vmem:[#allocation2 + $0x308] sm:$0xff]
        %v1787 = vld [vmem:[#allocation2 + $0x310] sm:$0xff]
        %v1788 = vld [vmem:[#allocation2 + $0x318] sm:$0xff]
        %v1789 = vld [vmem:[#allocation2 + $0x320] sm:$0xff]
        %v1790 = vld [vmem:[#allocation2 + $0x328] sm:$0xff]
        %v1791 = vld [vmem:[#allocation2 + $0x330] sm:$0xff]
        %v1792 = vld [vmem:[#allocation2 + $0x338] sm:$0xff]
        %v1793 = vld [vmem:[#allocation2 + $0x340] sm:$0xff]
        %v1794 = vld [vmem:[#allocation2 + $0x348] sm:$0xff]
        %v1795 = vld [vmem:[#allocation2 + $0x350] sm:$0xff]
        %v1796 = vld [vmem:[#allocation2 + $0x358] sm:$0xff]
        %v1797 = vld [vmem:[#allocation2 + $0x360] sm:$0xff]
        %v1798 = vld [vmem:[#allocation2 + $0x368] sm:$0xff]
        %v1799 = vld [vmem:[#allocation2 + $0x370] sm:$0xff]
        %v1800 = vld [vmem:[#allocation2 + $0x378] sm:$0xff]
        %v1801 = vld [vmem:[#allocation2 + $0x380] sm:$0xff]
        %v1802 = vld [vmem:[#allocation2 + $0x388] sm:$0xff]
        %v1803 = vld [vmem:[#allocation2 + $0x390] sm:$0xff]
        %v1804 = vld [vmem:[#allocation2 + $0x398] sm:$0xff]
        %v1805 = vld [vmem:[#allocation2 + $0x3a0] sm:$0xff]
        %v1806 = vld [vmem:[#allocation2 + $0x3a8] sm:$0xff]
        %v1807 = vld [vmem:[#allocation2 + $0x3b0] sm:$0xff]
        %v1808 = vld [vmem:[#allocation2 + $0x3b8] sm:$0xff]
        %v1809 = vld [vmem:[#allocation2 + $0x3c0] sm:$0xff]
        %v1810 = vld [vmem:[#allocation2 + $0x3c8] sm:$0xff]
        %v1811 = vld [vmem:[#allocation2 + $0x3d0] sm:$0xff]
        %v1812 = vld [vmem:[#allocation2 + $0x3d8] sm:$0xff]
        %v1813 = vld [vmem:[#allocation2 + $0x3e0] sm:$0xff]
        %v1814 = vld [vmem:[#allocation2 + $0x3e8] sm:$0xff]
        %v1815 = vld [vmem:[#allocation2 + $0x3f0] sm:$0xff]
        %v1816 = vld [vmem:[#allocation2 + $0x3f8] sm:$0xff]
        %v1817 = vld [vmem:[#allocation2 + $0x400] sm:$0xff]
        %v1818 = vld [vmem:[#allocation2 + $0x408] sm:$0xff]
        %v1819 = vld [vmem:[#allocation2 + $0x410] sm:$0xff]
        %v1820 = vld [vmem:[#allocation2 + $0x418] sm:$0xff]
        %v1821 = vld [vmem:[#allocation2 + $0x420] sm:$0xff]
        %v1822 = vld [vmem:[#allocation2 + $0x428] sm:$0xff]
        %v1823 = vld [vmem:[#allocation2 + $0x430] sm:$0xff]
        %v1824 = vld [vmem:[#allocation2 + $0x438] sm:$0xff]
        %v1825 = vld [vmem:[#allocation2 + $0x440] sm:$0xff]
        %v1826 = vld [vmem:[#allocation2 + $0x448] sm:$0xff]
        %v1827 = vld [vmem:[#allocation2 + $0x450] sm:$0xff]
        %v1828 = vld [vmem:[#allocation2 + $0x458] sm:$0xff]
        %v1829 = vld [vmem:[#allocation2 + $0x460] sm:$0xff]
        %v1830 = vld [vmem:[#allocation2 + $0x468] sm:$0xff]
        %v1831 = vld [vmem:[#allocation2 + $0x470] sm:$0xff]
        %v1832 = vld [vmem:[#allocation2 + $0x478] sm:$0xff]
        %v1833 = vld [vmem:[#allocation2 + $0x480] sm:$0xff]
        %v1834 = vld [vmem:[#allocation2 + $0x488] sm:$0xff]
        %v1835 = vld [vmem:[#allocation2 + $0x490] sm:$0xff]
        %v1836 = vld [vmem:[#allocation2 + $0x498] sm:$0xff]
        %v1837 = vld [vmem:[#allocation2 + $0x4a0] sm:$0xff]
        %v1838 = vld [vmem:[#allocation2 + $0x4a8] sm:$0xff]
        %v1839 = vld [vmem:[#allocation2 + $0x4b0] sm:$0xff]
        %v1840 = vld [vmem:[#allocation2 + $0x4b8] sm:$0xff]
        %v1841 = vld [vmem:[#allocation2 + $0x4c0] sm:$0xff]
        %v1842 = vld [vmem:[#allocation2 + $0x4c8] sm:$0xff]
        %v1843 = vld [vmem:[#allocation2 + $0x4d0] sm:$0xff]
        %v1844 = vld [vmem:[#allocation2 + $0x4d8] sm:$0xff]
        %v1845 = vld [vmem:[#allocation2 + $0x4e0] sm:$0xff]
        %v1846 = vld [vmem:[#allocation2 + $0x4e8] sm:$0xff]
        %v1847 = vld [vmem:[#allocation2 + $0x4f0] sm:$0xff]
        %v1848 = vld [vmem:[#allocation2 + $0x4f8] sm:$0xff]
        %v1849 = vld [vmem:[#allocation2 + $0x500] sm:$0xff]
        %v1850 = vld [vmem:[#allocation2 + $0x508] sm:$0xff]
        %v1851 = vld [vmem:[#allocation2 + $0x510] sm:$0xff]
        %v1852 = vld [vmem:[#allocation2 + $0x518] sm:$0xff]
        %v1853 = vld [vmem:[#allocation2 + $0x520] sm:$0xff]
        %v1854 = vld [vmem:[#allocation2 + $0x528] sm:$0xff]
        %v1855 = vld [vmem:[#allocation2 + $0x530] sm:$0xff]
        %v1856 = vld [vmem:[#allocation2 + $0x538] sm:$0xff]
        %v1857 = vld [vmem:[#allocation2 + $0x540] sm:$0xff]
        %v1858 = vld [vmem:[#allocation2 + $0x548] sm:$0xff]
        %v1859 = vld [vmem:[#allocation2 + $0x550] sm:$0xff]
        %v1860 = vld [vmem:[#allocation2 + $0x558] sm:$0xff]
        %v1861 = vld [vmem:[#allocation2 + $0x560] sm:$0xff]
        %v1862 = vld [vmem:[#allocation2 + $0x568] sm:$0xff]
        %v1863 = vld [vmem:[#allocation2 + $0x570] sm:$0xff]
        %v1864 = vld [vmem:[#allocation2 + $0x578] sm:$0xff]
        %v1865 = vld [vmem:[#allocation2 + $0x580] sm:$0xff]
        %v1866 = vld [vmem:[#allocation2 + $0x588] sm:$0xff]
        %v1867 = vld [vmem:[#allocation2 + $0x590] sm:$0xff]
        %v1868 = vld [vmem:[#allocation2 + $0x598] sm:$0xff]
        %v1869 = vld [vmem:[#allocation2 + $0x5a0] sm:$0xff]
        %v1870 = vld [vmem:[#allocation2 + $0x5a8] sm:$0xff]
        %v1871 = vld [vmem:[#allocation2 + $0x5b0] sm:$0xff]
        %v1872 = vld [vmem:[#allocation2 + $0x5b8] sm:$0xff]
        %v1873 = vld [vmem:[#allocation2 + $0x5c0] sm:$0xff]
        %v1874 = vld [vmem:[#allocation2 + $0x5c8] sm:$0xff]
        %v1875 = vld [vmem:[#allocation2 + $0x5d0] sm:$0xff]
        %v1876 = vld [vmem:[#allocation2 + $0x5d8] sm:$0xff]
        %v1877 = vld [vmem:[#allocation2 + $0x5e0] sm:$0xff]
        %v1878 = vld [vmem:[#allocation2 + $0x5e8] sm:$0xff]
        %v1879 = vld [vmem:[#allocation2 + $0x5f0] sm:$0xff]
        %v1880 = vld [vmem:[#allocation2 + $0x5f8] sm:$0xff]
        %v1881 = vld [vmem:[#allocation2 + $0x600] sm:$0xff]
        %v1882 = vld [vmem:[#allocation2 + $0x608] sm:$0xff]
        %v1883 = vld [vmem:[#allocation2 + $0x610] sm:$0xff]
        %v1884 = vld [vmem:[#allocation2 + $0x618] sm:$0xff]
        %v1885 = vld [vmem:[#allocation2 + $0x620] sm:$0xff]
        %v1886 = vld [vmem:[#allocation2 + $0x628] sm:$0xff]
        %v1887 = vld [vmem:[#allocation2 + $0x630] sm:$0xff]
        %v1888 = vld [vmem:[#allocation2 + $0x638] sm:$0xff]
        %v1889 = vld [vmem:[#allocation2 + $0x640] sm:$0xff]
        %v1890 = vld [vmem:[#allocation2 + $0x648] sm:$0xff]
        %v1891 = vld [vmem:[#allocation2 + $0x650] sm:$0xff]
        %v1892 = vld [vmem:[#allocation2 + $0x658] sm:$0xff]
        %v1893 = vld [vmem:[#allocation2 + $0x660] sm:$0xff]
        %v1894 = vld [vmem:[#allocation2 + $0x668] sm:$0xff]
        %v1895 = vld [vmem:[#allocation2 + $0x670] sm:$0xff]
        %v1896 = vld [vmem:[#allocation2 + $0x678] sm:$0xff]
        %v1897 = vld [vmem:[#allocation2 + $0x680] sm:$0xff]
        %v1898 = vld [vmem:[#allocation2 + $0x688] sm:$0xff]
        %v1899 = vld [vmem:[#allocation2 + $0x690] sm:$0xff]
        %v1900 = vld [vmem:[#allocation2 + $0x698] sm:$0xff]
        %v1901 = vld [vmem:[#allocation2 + $0x6a0] sm:$0xff]
        %v1902 = vld [vmem:[#allocation2 + $0x6a8] sm:$0xff]
        %v1903 = vld [vmem:[#allocation2 + $0x6b0] sm:$0xff]
        %v1904 = vld [vmem:[#allocation2 + $0x6b8] sm:$0xff]
        %v1905 = vld [vmem:[#allocation2 + $0x6c0] sm:$0xff]
        %v1906 = vld [vmem:[#allocation2 + $0x6c8] sm:$0xff]
        %v1907 = vld [vmem:[#allocation2 + $0x6d0] sm:$0xff]
        %v1908 = vld [vmem:[#allocation2 + $0x6d8] sm:$0xff]
        %v1909 = vld [vmem:[#allocation2 + $0x6e0] sm:$0xff]
        %v1910 = vld [vmem:[#allocation2 + $0x6e8] sm:$0xff]
        %v1911 = vld [vmem:[#allocation2 + $0x6f0] sm:$0xff]
        %v1912 = vld [vmem:[#allocation2 + $0x6f8] sm:$0xff]
        %v1913 = vld [vmem:[#allocation2 + $0x700] sm:$0xff]
        %v1914 = vld [vmem:[#allocation2 + $0x708] sm:$0xff]
        %v1915 = vld [vmem:[#allocation2 + $0x710] sm:$0xff]
        %v1916 = vld [vmem:[#allocation2 + $0x718] sm:$0xff]
        %v1917 = vld [vmem:[#allocation2 + $0x720] sm:$0xff]
        %v1918 = vld [vmem:[#allocation2 + $0x728] sm:$0xff]
        %v1919 = vld [vmem:[#allocation2 + $0x730] sm:$0xff]
        %v1920 = vld [vmem:[#allocation2 + $0x738] sm:$0xff]
        %v1921 = vld [vmem:[#allocation2 + $0x740] sm:$0xff]
        %v1922 = vld [vmem:[#allocation2 + $0x748] sm:$0xff]
        %v1923 = vld [vmem:[#allocation2 + $0x750] sm:$0xff]
        %v1924 = vld [vmem:[#allocation2 + $0x758] sm:$0xff]
        %v1925 = vld [vmem:[#allocation2 + $0x760] sm:$0xff]
        %v1926 = vld [vmem:[#allocation2 + $0x768] sm:$0xff]
        %v1927 = vld [vmem:[#allocation2 + $0x770] sm:$0xff]
        %v1928 = vld [vmem:[#allocation2 + $0x778] sm:$0xff]
        %v1929 = vld [vmem:[#allocation2 + $0x780] sm:$0xff]
        %v1930 = vld [vmem:[#allocation2 + $0x788] sm:$0xff]
        %v1931 = vld [vmem:[#allocation2 + $0x790] sm:$0xff]
        %v1932 = vld [vmem:[#allocation2 + $0x798] sm:$0xff]
        %v1933 = vld [vmem:[#allocation2 + $0x7a0] sm:$0xff]
        %v1934 = vld [vmem:[#allocation2 + $0x7a8] sm:$0xff]
        %v1935 = vld [vmem:[#allocation2 + $0x7b0] sm:$0xff]
        %v1936 = vld [vmem:[#allocation2 + $0x7b8] sm:$0xff]
        %v1937 = vld [vmem:[#allocation2 + $0x7c0] sm:$0xff]
        %v1938 = vld [vmem:[#allocation2 + $0x7c8] sm:$0xff]
        %v1939 = vld [vmem:[#allocation2 + $0x7d0] sm:$0xff]
        %v1940 = vld [vmem:[#allocation2 + $0x7d8] sm:$0xff]
        %v1941 = vld [vmem:[#allocation2 + $0x7e0] sm:$0xff]
        %v1942 = vld [vmem:[#allocation2 + $0x7e8] sm:$0xff]
        %v1943 = vld [vmem:[#allocation2 + $0x7f0] sm:$0xff]
        %v1944 = vld [vmem:[#allocation2 + $0x7f8] sm:$0xff]
        %v1945 = vld [vmem:[%s4] sm:$0xf]
        %v1947 = vlaneseq
        %v1948 = vshrl.u32 %v1947, 7
        %v1949 = vsub.s32 0, %v1948
        %v1950 = vrot.slane %v1945, %v1949
        %v1951 = vlaneseq
        %v1952 = vshrl.u32 %v1951, 7
        %v1953 = vsub.s32 1, %v1952
        %v1954 = vrot.slane %v1945, %v1953
        %v1955 = vlaneseq
        %v1956 = vshrl.u32 %v1955, 7
        %v1957 = vsub.s32 2, %v1956
        %v1958 = vrot.slane %v1945, %v1957
        %v1959 = vlaneseq
        %v1960 = vshrl.u32 %v1959, 7
        %v1961 = vsub.s32 3, %v1960
        %v1962 = vrot.slane %v1945, %v1961
        %v2223 = vunpack.c.l.b16 %v1689
        %v2224 = vunpack.c.h.b16 %v1689
        %v2225 = vunpack.c.l.b16 %v1690
        %v2226 = vunpack.c.h.b16 %v1690
        %v2227 = vunpack.c.l.b16 %v1691
        %v2228 = vunpack.c.h.b16 %v1691
        %v2229 = vunpack.c.l.b16 %v1692
        %v2230 = vunpack.c.h.b16 %v1692
        %v2231 = vunpack.c.l.b16 %v1693
        %v2232 = vunpack.c.h.b16 %v1693
        %v2233 = vunpack.c.l.b16 %v1694
        %v2234 = vunpack.c.h.b16 %v1694
        %v2235 = vunpack.c.l.b16 %v1695
        %v2236 = vunpack.c.h.b16 %v1695
        %v2237 = vunpack.c.l.b16 %v1696
        %v2238 = vunpack.c.h.b16 %v1696
        %v2239 = vunpack.c.l.b16 %v1697
        %v2240 = vunpack.c.h.b16 %v1697
        %v2241 = vunpack.c.l.b16 %v1698
        %v2242 = vunpack.c.h.b16 %v1698
        %v2243 = vunpack.c.l.b16 %v1699
        %v2244 = vunpack.c.h.b16 %v1699
        %v2245 = vunpack.c.l.b16 %v1700
        %v2246 = vunpack.c.h.b16 %v1700
        %v2247 = vunpack.c.l.b16 %v1701
        %v2248 = vunpack.c.h.b16 %v1701
        %v2249 = vunpack.c.l.b16 %v1702
        %v2250 = vunpack.c.h.b16 %v1702
        %v2251 = vunpack.c.l.b16 %v1703
        %v2252 = vunpack.c.h.b16 %v1703
        %v2253 = vunpack.c.l.b16 %v1704
        %v2254 = vunpack.c.h.b16 %v1704
        %v2255 = vunpack.c.l.b16 %v1705
        %v2256 = vunpack.c.h.b16 %v1705
        %v2257 = vunpack.c.l.b16 %v1706
        %v2258 = vunpack.c.h.b16 %v1706
        %v2259 = vunpack.c.l.b16 %v1707
        %v2260 = vunpack.c.h.b16 %v1707
        %v2261 = vunpack.c.l.b16 %v1708
        %v2262 = vunpack.c.h.b16 %v1708
        %v2263 = vunpack.c.l.b16 %v1709
        %v2264 = vunpack.c.h.b16 %v1709
        %v2265 = vunpack.c.l.b16 %v1710
        %v2266 = vunpack.c.h.b16 %v1710
        %v2267 = vunpack.c.l.b16 %v1711
        %v2268 = vunpack.c.h.b16 %v1711
        %v2269 = vunpack.c.l.b16 %v1712
        %v2270 = vunpack.c.h.b16 %v1712
        %v2271 = vunpack.c.l.b16 %v1713
        %v2272 = vunpack.c.h.b16 %v1713
        %v2273 = vunpack.c.l.b16 %v1714
        %v2274 = vunpack.c.h.b16 %v1714
        %v2275 = vunpack.c.l.b16 %v1715
        %v2276 = vunpack.c.h.b16 %v1715
        %v2277 = vunpack.c.l.b16 %v1716
        %v2278 = vunpack.c.h.b16 %v1716
        %v2279 = vunpack.c.l.b16 %v1717
        %v2280 = vunpack.c.h.b16 %v1717
        %v2281 = vunpack.c.l.b16 %v1718
        %v2282 = vunpack.c.h.b16 %v1718
        %v2283 = vunpack.c.l.b16 %v1719
        %v2284 = vunpack.c.h.b16 %v1719
        %v2285 = vunpack.c.l.b16 %v1720
        %v2286 = vunpack.c.h.b16 %v1720
        %v2287 = vunpack.c.l.b16 %v1721
        %v2288 = vunpack.c.h.b16 %v1721
        %v2289 = vunpack.c.l.b16 %v1722
        %v2290 = vunpack.c.h.b16 %v1722
        %v2291 = vunpack.c.l.b16 %v1723
        %v2292 = vunpack.c.h.b16 %v1723
        %v2293 = vunpack.c.l.b16 %v1724
        %v2294 = vunpack.c.h.b16 %v1724
        %v2295 = vunpack.c.l.b16 %v1725
        %v2296 = vunpack.c.h.b16 %v1725
        %v2297 = vunpack.c.l.b16 %v1726
        %v2298 = vunpack.c.h.b16 %v1726
        %v2299 = vunpack.c.l.b16 %v1727
        %v2300 = vunpack.c.h.b16 %v1727
        %v2301 = vunpack.c.l.b16 %v1728
        %v2302 = vunpack.c.h.b16 %v1728
        %v2303 = vunpack.c.l.b16 %v1729
        %v2304 = vunpack.c.h.b16 %v1729
        %v2305 = vunpack.c.l.b16 %v1730
        %v2306 = vunpack.c.h.b16 %v1730
        %v2307 = vunpack.c.l.b16 %v1731
        %v2308 = vunpack.c.h.b16 %v1731
        %v2309 = vunpack.c.l.b16 %v1732
        %v2310 = vunpack.c.h.b16 %v1732
        %v2311 = vunpack.c.l.b16 %v1733
        %v2312 = vunpack.c.h.b16 %v1733
        %v2313 = vunpack.c.l.b16 %v1734
        %v2314 = vunpack.c.h.b16 %v1734
        %v2315 = vunpack.c.l.b16 %v1735
        %v2316 = vunpack.c.h.b16 %v1735
        %v2317 = vunpack.c.l.b16 %v1736
        %v2318 = vunpack.c.h.b16 %v1736
        %v2319 = vunpack.c.l.b16 %v1737
        %v2320 = vunpack.c.h.b16 %v1737
        %v2321 = vunpack.c.l.b16 %v1738
        %v2322 = vunpack.c.h.b16 %v1738
        %v2323 = vunpack.c.l.b16 %v1739
        %v2324 = vunpack.c.h.b16 %v1739
        %v2325 = vunpack.c.l.b16 %v1740
        %v2326 = vunpack.c.h.b16 %v1740
        %v2327 = vunpack.c.l.b16 %v1741
        %v2328 = vunpack.c.h.b16 %v1741
        %v2329 = vunpack.c.l.b16 %v1742
        %v2330 = vunpack.c.h.b16 %v1742
        %v2331 = vunpack.c.l.b16 %v1743
        %v2332 = vunpack.c.h.b16 %v1743
        %v2333 = vunpack.c.l.b16 %v1744
        %v2334 = vunpack.c.h.b16 %v1744
        %v2335 = vunpack.c.l.b16 %v1745
        %v2336 = vunpack.c.h.b16 %v1745
        %v2337 = vunpack.c.l.b16 %v1746
        %v2338 = vunpack.c.h.b16 %v1746
        %v2339 = vunpack.c.l.b16 %v1747
        %v2340 = vunpack.c.h.b16 %v1747
        %v2341 = vunpack.c.l.b16 %v1748
        %v2342 = vunpack.c.h.b16 %v1748
        %v2343 = vunpack.c.l.b16 %v1749
        %v2344 = vunpack.c.h.b16 %v1749
        %v2345 = vunpack.c.l.b16 %v1750
        %v2346 = vunpack.c.h.b16 %v1750
        %v2347 = vunpack.c.l.b16 %v1751
        %v2348 = vunpack.c.h.b16 %v1751
        %v2349 = vunpack.c.l.b16 %v1752
        %v2350 = vunpack.c.h.b16 %v1752
        %v2351 = vunpack.c.l.b16 %v1753
        %v2352 = vunpack.c.h.b16 %v1753
        %v2353 = vunpack.c.l.b16 %v1754
        %v2354 = vunpack.c.h.b16 %v1754
        %v2355 = vunpack.c.l.b16 %v1755
        %v2356 = vunpack.c.h.b16 %v1755
        %v2357 = vunpack.c.l.b16 %v1756
        %v2358 = vunpack.c.h.b16 %v1756
        %v2359 = vunpack.c.l.b16 %v1757
        %v2360 = vunpack.c.h.b16 %v1757
        %v2361 = vunpack.c.l.b16 %v1758
        %v2362 = vunpack.c.h.b16 %v1758
        %v2363 = vunpack.c.l.b16 %v1759
        %v2364 = vunpack.c.h.b16 %v1759
        %v2365 = vunpack.c.l.b16 %v1760
        %v2366 = vunpack.c.h.b16 %v1760
        %v2367 = vunpack.c.l.b16 %v1761
        %v2368 = vunpack.c.h.b16 %v1761
        %v2369 = vunpack.c.l.b16 %v1762
        %v2370 = vunpack.c.h.b16 %v1762
        %v2371 = vunpack.c.l.b16 %v1763
        %v2372 = vunpack.c.h.b16 %v1763
        %v2373 = vunpack.c.l.b16 %v1764
        %v2374 = vunpack.c.h.b16 %v1764
        %v2375 = vunpack.c.l.b16 %v1765
        %v2376 = vunpack.c.h.b16 %v1765
        %v2377 = vunpack.c.l.b16 %v1766
        %v2378 = vunpack.c.h.b16 %v1766
        %v2379 = vunpack.c.l.b16 %v1767
        %v2380 = vunpack.c.h.b16 %v1767
        %v2381 = vunpack.c.l.b16 %v1768
        %v2382 = vunpack.c.h.b16 %v1768
        %v2383 = vunpack.c.l.b16 %v1769
        %v2384 = vunpack.c.h.b16 %v1769
        %v2385 = vunpack.c.l.b16 %v1770
        %v2386 = vunpack.c.h.b16 %v1770
        %v2387 = vunpack.c.l.b16 %v1771
        %v2388 = vunpack.c.h.b16 %v1771
        %v2389 = vunpack.c.l.b16 %v1772
        %v2390 = vunpack.c.h.b16 %v1772
        %v2391 = vunpack.c.l.b16 %v1773
        %v2392 = vunpack.c.h.b16 %v1773
        %v2393 = vunpack.c.l.b16 %v1774
        %v2394 = vunpack.c.h.b16 %v1774
        %v2395 = vunpack.c.l.b16 %v1775
        %v2396 = vunpack.c.h.b16 %v1775
        %v2397 = vunpack.c.l.b16 %v1776
        %v2398 = vunpack.c.h.b16 %v1776
        %v2399 = vunpack.c.l.b16 %v1777
        %v2400 = vunpack.c.h.b16 %v1777
        %v2401 = vunpack.c.l.b16 %v1778
        %v2402 = vunpack.c.h.b16 %v1778
        %v2403 = vunpack.c.l.b16 %v1779
        %v2404 = vunpack.c.h.b16 %v1779
        %v2405 = vunpack.c.l.b16 %v1780
        %v2406 = vunpack.c.h.b16 %v1780
        %v2407 = vunpack.c.l.b16 %v1781
        %v2408 = vunpack.c.h.b16 %v1781
        %v2409 = vunpack.c.l.b16 %v1782
        %v2410 = vunpack.c.h.b16 %v1782
        %v2411 = vunpack.c.l.b16 %v1783
        %v2412 = vunpack.c.h.b16 %v1783
        %v2413 = vunpack.c.l.b16 %v1784
        %v2414 = vunpack.c.h.b16 %v1784
        %v2415 = vunpack.c.l.b16 %v1785
        %v2416 = vunpack.c.h.b16 %v1785
        %v2417 = vunpack.c.l.b16 %v1786
        %v2418 = vunpack.c.h.b16 %v1786
        %v2419 = vunpack.c.l.b16 %v1787
        %v2420 = vunpack.c.h.b16 %v1787
        %v2421 = vunpack.c.l.b16 %v1788
        %v2422 = vunpack.c.h.b16 %v1788
        %v2423 = vunpack.c.l.b16 %v1789
        %v2424 = vunpack.c.h.b16 %v1789
        %v2425 = vunpack.c.l.b16 %v1790
        %v2426 = vunpack.c.h.b16 %v1790
        %v2427 = vunpack.c.l.b16 %v1791
        %v2428 = vunpack.c.h.b16 %v1791
        %v2429 = vunpack.c.l.b16 %v1792
        %v2430 = vunpack.c.h.b16 %v1792
        %v2431 = vunpack.c.l.b16 %v1793
        %v2432 = vunpack.c.h.b16 %v1793
        %v2433 = vunpack.c.l.b16 %v1794
        %v2434 = vunpack.c.h.b16 %v1794
        %v2435 = vunpack.c.l.b16 %v1795
        %v2436 = vunpack.c.h.b16 %v1795
        %v2437 = vunpack.c.l.b16 %v1796
        %v2438 = vunpack.c.h.b16 %v1796
        %v2439 = vunpack.c.l.b16 %v1797
        %v2440 = vunpack.c.h.b16 %v1797
        %v2441 = vunpack.c.l.b16 %v1798
        %v2442 = vunpack.c.h.b16 %v1798
        %v2443 = vunpack.c.l.b16 %v1799
        %v2444 = vunpack.c.h.b16 %v1799
        %v2445 = vunpack.c.l.b16 %v1800
        %v2446 = vunpack.c.h.b16 %v1800
        %v2447 = vunpack.c.l.b16 %v1801
        %v2448 = vunpack.c.h.b16 %v1801
        %v2449 = vunpack.c.l.b16 %v1802
        %v2450 = vunpack.c.h.b16 %v1802
        %v2451 = vunpack.c.l.b16 %v1803
        %v2452 = vunpack.c.h.b16 %v1803
        %v2453 = vunpack.c.l.b16 %v1804
        %v2454 = vunpack.c.h.b16 %v1804
        %v2455 = vunpack.c.l.b16 %v1805
        %v2456 = vunpack.c.h.b16 %v1805
        %v2457 = vunpack.c.l.b16 %v1806
        %v2458 = vunpack.c.h.b16 %v1806
        %v2459 = vunpack.c.l.b16 %v1807
        %v2460 = vunpack.c.h.b16 %v1807
        %v2461 = vunpack.c.l.b16 %v1808
        %v2462 = vunpack.c.h.b16 %v1808
        %v2463 = vunpack.c.l.b16 %v1809
        %v2464 = vunpack.c.h.b16 %v1809
        %v2465 = vunpack.c.l.b16 %v1810
        %v2466 = vunpack.c.h.b16 %v1810
        %v2467 = vunpack.c.l.b16 %v1811
        %v2468 = vunpack.c.h.b16 %v1811
        %v2469 = vunpack.c.l.b16 %v1812
        %v2470 = vunpack.c.h.b16 %v1812
        %v2471 = vunpack.c.l.b16 %v1813
        %v2472 = vunpack.c.h.b16 %v1813
        %v2473 = vunpack.c.l.b16 %v1814
        %v2474 = vunpack.c.h.b16 %v1814
        %v2475 = vunpack.c.l.b16 %v1815
        %v2476 = vunpack.c.h.b16 %v1815
        %v2477 = vunpack.c.l.b16 %v1816
        %v2478 = vunpack.c.h.b16 %v1816
        %v2479 = vunpack.c.l.b16 %v1817
        %v2480 = vunpack.c.h.b16 %v1817
        %v2481 = vunpack.c.l.b16 %v1818
        %v2482 = vunpack.c.h.b16 %v1818
        %v2483 = vunpack.c.l.b16 %v1819
        %v2484 = vunpack.c.h.b16 %v1819
        %v2485 = vunpack.c.l.b16 %v1820
        %v2486 = vunpack.c.h.b16 %v1820
        %v2487 = vunpack.c.l.b16 %v1821
        %v2488 = vunpack.c.h.b16 %v1821
        %v2489 = vunpack.c.l.b16 %v1822
        %v2490 = vunpack.c.h.b16 %v1822
        %v2491 = vunpack.c.l.b16 %v1823
        %v2492 = vunpack.c.h.b16 %v1823
        %v2493 = vunpack.c.l.b16 %v1824
        %v2494 = vunpack.c.h.b16 %v1824
        %v2495 = vunpack.c.l.b16 %v1825
        %v2496 = vunpack.c.h.b16 %v1825
        %v2497 = vunpack.c.l.b16 %v1826
        %v2498 = vunpack.c.h.b16 %v1826
        %v2499 = vunpack.c.l.b16 %v1827
        %v2500 = vunpack.c.h.b16 %v1827
        %v2501 = vunpack.c.l.b16 %v1828
        %v2502 = vunpack.c.h.b16 %v1828
        %v2503 = vunpack.c.l.b16 %v1829
        %v2504 = vunpack.c.h.b16 %v1829
        %v2505 = vunpack.c.l.b16 %v1830
        %v2506 = vunpack.c.h.b16 %v1830
        %v2507 = vunpack.c.l.b16 %v1831
        %v2508 = vunpack.c.h.b16 %v1831
        %v2509 = vunpack.c.l.b16 %v1832
        %v2510 = vunpack.c.h.b16 %v1832
        %v2511 = vunpack.c.l.b16 %v1833
        %v2512 = vunpack.c.h.b16 %v1833
        %v2513 = vunpack.c.l.b16 %v1834
        %v2514 = vunpack.c.h.b16 %v1834
        %v2515 = vunpack.c.l.b16 %v1835
        %v2516 = vunpack.c.h.b16 %v1835
        %v2517 = vunpack.c.l.b16 %v1836
        %v2518 = vunpack.c.h.b16 %v1836
        %v2519 = vunpack.c.l.b16 %v1837
        %v2520 = vunpack.c.h.b16 %v1837
        %v2521 = vunpack.c.l.b16 %v1838
        %v2522 = vunpack.c.h.b16 %v1838
        %v2523 = vunpack.c.l.b16 %v1839
        %v2524 = vunpack.c.h.b16 %v1839
        %v2525 = vunpack.c.l.b16 %v1840
        %v2526 = vunpack.c.h.b16 %v1840
        %v2527 = vunpack.c.l.b16 %v1841
        %v2528 = vunpack.c.h.b16 %v1841
        %v2529 = vunpack.c.l.b16 %v1842
        %v2530 = vunpack.c.h.b16 %v1842
        %v2531 = vunpack.c.l.b16 %v1843
        %v2532 = vunpack.c.h.b16 %v1843
        %v2533 = vunpack.c.l.b16 %v1844
        %v2534 = vunpack.c.h.b16 %v1844
        %v2535 = vunpack.c.l.b16 %v1845
        %v2536 = vunpack.c.h.b16 %v1845
        %v2537 = vunpack.c.l.b16 %v1846
        %v2538 = vunpack.c.h.b16 %v1846
        %v2539 = vunpack.c.l.b16 %v1847
        %v2540 = vunpack.c.h.b16 %v1847
        %v2541 = vunpack.c.l.b16 %v1848
        %v2542 = vunpack.c.h.b16 %v1848
        %v2543 = vunpack.c.l.b16 %v1849
        %v2544 = vunpack.c.h.b16 %v1849
        %v2545 = vunpack.c.l.b16 %v1850
        %v2546 = vunpack.c.h.b16 %v1850
        %v2547 = vunpack.c.l.b16 %v1851
        %v2548 = vunpack.c.h.b16 %v1851
        %v2549 = vunpack.c.l.b16 %v1852
        %v2550 = vunpack.c.h.b16 %v1852
        %v2551 = vunpack.c.l.b16 %v1853
        %v2552 = vunpack.c.h.b16 %v1853
        %v2553 = vunpack.c.l.b16 %v1854
        %v2554 = vunpack.c.h.b16 %v1854
        %v2555 = vunpack.c.l.b16 %v1855
        %v2556 = vunpack.c.h.b16 %v1855
        %v2557 = vunpack.c.l.b16 %v1856
        %v2558 = vunpack.c.h.b16 %v1856
        %v2559 = vunpack.c.l.b16 %v1857
        %v2560 = vunpack.c.h.b16 %v1857
        %v2561 = vunpack.c.l.b16 %v1858
        %v2562 = vunpack.c.h.b16 %v1858
        %v2563 = vunpack.c.l.b16 %v1859
        %v2564 = vunpack.c.h.b16 %v1859
        %v2565 = vunpack.c.l.b16 %v1860
        %v2566 = vunpack.c.h.b16 %v1860
        %v2567 = vunpack.c.l.b16 %v1861
        %v2568 = vunpack.c.h.b16 %v1861
        %v2569 = vunpack.c.l.b16 %v1862
        %v2570 = vunpack.c.h.b16 %v1862
        %v2571 = vunpack.c.l.b16 %v1863
        %v2572 = vunpack.c.h.b16 %v1863
        %v2573 = vunpack.c.l.b16 %v1864
        %v2574 = vunpack.c.h.b16 %v1864
        %v2575 = vunpack.c.l.b16 %v1865
        %v2576 = vunpack.c.h.b16 %v1865
        %v2577 = vunpack.c.l.b16 %v1866
        %v2578 = vunpack.c.h.b16 %v1866
        %v2579 = vunpack.c.l.b16 %v1867
        %v2580 = vunpack.c.h.b16 %v1867
        %v2581 = vunpack.c.l.b16 %v1868
        %v2582 = vunpack.c.h.b16 %v1868
        %v2583 = vunpack.c.l.b16 %v1869
        %v2584 = vunpack.c.h.b16 %v1869
        %v2585 = vunpack.c.l.b16 %v1870
        %v2586 = vunpack.c.h.b16 %v1870
        %v2587 = vunpack.c.l.b16 %v1871
        %v2588 = vunpack.c.h.b16 %v1871
        %v2589 = vunpack.c.l.b16 %v1872
        %v2590 = vunpack.c.h.b16 %v1872
        %v2591 = vunpack.c.l.b16 %v1873
        %v2592 = vunpack.c.h.b16 %v1873
        %v2593 = vunpack.c.l.b16 %v1874
        %v2594 = vunpack.c.h.b16 %v1874
        %v2595 = vunpack.c.l.b16 %v1875
        %v2596 = vunpack.c.h.b16 %v1875
        %v2597 = vunpack.c.l.b16 %v1876
        %v2598 = vunpack.c.h.b16 %v1876
        %v2599 = vunpack.c.l.b16 %v1877
        %v2600 = vunpack.c.h.b16 %v1877
        %v2601 = vunpack.c.l.b16 %v1878
        %v2602 = vunpack.c.h.b16 %v1878
        %v2603 = vunpack.c.l.b16 %v1879
        %v2604 = vunpack.c.h.b16 %v1879
        %v2605 = vunpack.c.l.b16 %v1880
        %v2606 = vunpack.c.h.b16 %v1880
        %v2607 = vunpack.c.l.b16 %v1881
        %v2608 = vunpack.c.h.b16 %v1881
        %v2609 = vunpack.c.l.b16 %v1882
        %v2610 = vunpack.c.h.b16 %v1882
        %v2611 = vunpack.c.l.b16 %v1883
        %v2612 = vunpack.c.h.b16 %v1883
        %v2613 = vunpack.c.l.b16 %v1884
        %v2614 = vunpack.c.h.b16 %v1884
        %v2615 = vunpack.c.l.b16 %v1885
        %v2616 = vunpack.c.h.b16 %v1885
        %v2617 = vunpack.c.l.b16 %v1886
        %v2618 = vunpack.c.h.b16 %v1886
        %v2619 = vunpack.c.l.b16 %v1887
        %v2620 = vunpack.c.h.b16 %v1887
        %v2621 = vunpack.c.l.b16 %v1888
        %v2622 = vunpack.c.h.b16 %v1888
        %v2623 = vunpack.c.l.b16 %v1889
        %v2624 = vunpack.c.h.b16 %v1889
        %v2625 = vunpack.c.l.b16 %v1890
        %v2626 = vunpack.c.h.b16 %v1890
        %v2627 = vunpack.c.l.b16 %v1891
        %v2628 = vunpack.c.h.b16 %v1891
        %v2629 = vunpack.c.l.b16 %v1892
        %v2630 = vunpack.c.h.b16 %v1892
        %v2631 = vunpack.c.l.b16 %v1893
        %v2632 = vunpack.c.h.b16 %v1893
        %v2633 = vunpack.c.l.b16 %v1894
        %v2634 = vunpack.c.h.b16 %v1894
        %v2635 = vunpack.c.l.b16 %v1895
        %v2636 = vunpack.c.h.b16 %v1895
        %v2637 = vunpack.c.l.b16 %v1896
        %v2638 = vunpack.c.h.b16 %v1896
        %v2639 = vunpack.c.l.b16 %v1897
        %v2640 = vunpack.c.h.b16 %v1897
        %v2641 = vunpack.c.l.b16 %v1898
        %v2642 = vunpack.c.h.b16 %v1898
        %v2643 = vunpack.c.l.b16 %v1899
        %v2644 = vunpack.c.h.b16 %v1899
        %v2645 = vunpack.c.l.b16 %v1900
        %v2646 = vunpack.c.h.b16 %v1900
        %v2647 = vunpack.c.l.b16 %v1901
        %v2648 = vunpack.c.h.b16 %v1901
        %v2649 = vunpack.c.l.b16 %v1902
        %v2650 = vunpack.c.h.b16 %v1902
        %v2651 = vunpack.c.l.b16 %v1903
        %v2652 = vunpack.c.h.b16 %v1903
        %v2653 = vunpack.c.l.b16 %v1904
        %v2654 = vunpack.c.h.b16 %v1904
        %v2655 = vunpack.c.l.b16 %v1905
        %v2656 = vunpack.c.h.b16 %v1905
        %v2657 = vunpack.c.l.b16 %v1906
        %v2658 = vunpack.c.h.b16 %v1906
        %v2659 = vunpack.c.l.b16 %v1907
        %v2660 = vunpack.c.h.b16 %v1907
        %v2661 = vunpack.c.l.b16 %v1908
        %v2662 = vunpack.c.h.b16 %v1908
        %v2663 = vunpack.c.l.b16 %v1909
        %v2664 = vunpack.c.h.b16 %v1909
        %v2665 = vunpack.c.l.b16 %v1910
        %v2666 = vunpack.c.h.b16 %v1910
        %v2667 = vunpack.c.l.b16 %v1911
        %v2668 = vunpack.c.h.b16 %v1911
        %v2669 = vunpack.c.l.b16 %v1912
        %v2670 = vunpack.c.h.b16 %v1912
        %v2671 = vunpack.c.l.b16 %v1913
        %v2672 = vunpack.c.h.b16 %v1913
        %v2673 = vunpack.c.l.b16 %v1914
        %v2674 = vunpack.c.h.b16 %v1914
        %v2675 = vunpack.c.l.b16 %v1915
        %v2676 = vunpack.c.h.b16 %v1915
        %v2677 = vunpack.c.l.b16 %v1916
        %v2678 = vunpack.c.h.b16 %v1916
        %v2679 = vunpack.c.l.b16 %v1917
        %v2680 = vunpack.c.h.b16 %v1917
        %v2681 = vunpack.c.l.b16 %v1918
        %v2682 = vunpack.c.h.b16 %v1918
        %v2683 = vunpack.c.l.b16 %v1919
        %v2684 = vunpack.c.h.b16 %v1919
        %v2685 = vunpack.c.l.b16 %v1920
        %v2686 = vunpack.c.h.b16 %v1920
        %v2687 = vunpack.c.l.b16 %v1921
        %v2688 = vunpack.c.h.b16 %v1921
        %v2689 = vunpack.c.l.b16 %v1922
        %v2690 = vunpack.c.h.b16 %v1922
        %v2691 = vunpack.c.l.b16 %v1923
        %v2692 = vunpack.c.h.b16 %v1923
        %v2693 = vunpack.c.l.b16 %v1924
        %v2694 = vunpack.c.h.b16 %v1924
        %v2695 = vunpack.c.l.b16 %v1925
        %v2696 = vunpack.c.h.b16 %v1925
        %v2697 = vunpack.c.l.b16 %v1926
        %v2698 = vunpack.c.h.b16 %v1926
        %v2699 = vunpack.c.l.b16 %v1927
        %v2700 = vunpack.c.h.b16 %v1927
        %v2701 = vunpack.c.l.b16 %v1928
        %v2702 = vunpack.c.h.b16 %v1928
        %v2703 = vunpack.c.l.b16 %v1929
        %v2704 = vunpack.c.h.b16 %v1929
        %v2705 = vunpack.c.l.b16 %v1930
        %v2706 = vunpack.c.h.b16 %v1930
        %v2707 = vunpack.c.l.b16 %v1931
        %v2708 = vunpack.c.h.b16 %v1931
        %v2709 = vunpack.c.l.b16 %v1932
        %v2710 = vunpack.c.h.b16 %v1932
        %v2711 = vunpack.c.l.b16 %v1933
        %v2712 = vunpack.c.h.b16 %v1933
        %v2713 = vunpack.c.l.b16 %v1934
        %v2714 = vunpack.c.h.b16 %v1934
        %v2715 = vunpack.c.l.b16 %v1935
        %v2716 = vunpack.c.h.b16 %v1935
        %v2717 = vunpack.c.l.b16 %v1936
        %v2718 = vunpack.c.h.b16 %v1936
        %v2719 = vunpack.c.l.b16 %v1937
        %v2720 = vunpack.c.h.b16 %v1937
        %v2721 = vunpack.c.l.b16 %v1938
        %v2722 = vunpack.c.h.b16 %v1938
        %v2723 = vunpack.c.l.b16 %v1939
        %v2724 = vunpack.c.h.b16 %v1939
        %v2725 = vunpack.c.l.b16 %v1940
        %v2726 = vunpack.c.h.b16 %v1940
        %v2727 = vunpack.c.l.b16 %v1941
        %v2728 = vunpack.c.h.b16 %v1941
        %v2729 = vunpack.c.l.b16 %v1942
        %v2730 = vunpack.c.h.b16 %v1942
        %v2731 = vunpack.c.l.b16 %v1943
        %v2732 = vunpack.c.h.b16 %v1943
        %v2733 = vunpack.c.l.b16 %v1944
        %v2734 = vunpack.c.h.b16 %v1944
        %v2735 = vpack.c.b16 %v2227, %v2223
        %v2736 = vpack.c.b16 %v2228, %v2224
        %v2737 = vpack.c.b16 %v2229, %v2225
        %v2738 = vpack.c.b16 %v2230, %v2226
        %v2739 = vpack.c.b16 %v2235, %v2231
        %v2740 = vpack.c.b16 %v2236, %v2232
        %v2741 = vpack.c.b16 %v2237, %v2233
        %v2742 = vpack.c.b16 %v2238, %v2234
        %v2743 = vpack.c.b16 %v2243, %v2239
        %v2744 = vpack.c.b16 %v2244, %v2240
        %v2745 = vpack.c.b16 %v2245, %v2241
        %v2746 = vpack.c.b16 %v2246, %v2242
        %v2747 = vpack.c.b16 %v2251, %v2247
        %v2748 = vpack.c.b16 %v2252, %v2248
        %v2749 = vpack.c.b16 %v2253, %v2249
        %v2750 = vpack.c.b16 %v2254, %v2250
        %v2751 = vpack.c.b16 %v2259, %v2255
        %v2752 = vpack.c.b16 %v2260, %v2256
        %v2753 = vpack.c.b16 %v2261, %v2257
        %v2754 = vpack.c.b16 %v2262, %v2258
        %v2755 = vpack.c.b16 %v2267, %v2263
        %v2756 = vpack.c.b16 %v2268, %v2264
        %v2757 = vpack.c.b16 %v2269, %v2265
        %v2758 = vpack.c.b16 %v2270, %v2266
        %v2759 = vpack.c.b16 %v2275, %v2271
        %v2760 = vpack.c.b16 %v2276, %v2272
        %v2761 = vpack.c.b16 %v2277, %v2273
        %v2762 = vpack.c.b16 %v2278, %v2274
        %v2763 = vpack.c.b16 %v2283, %v2279
        %v2764 = vpack.c.b16 %v2284, %v2280
        %v2765 = vpack.c.b16 %v2285, %v2281
        %v2766 = vpack.c.b16 %v2286, %v2282
        %v2767 = vpack.c.b16 %v2291, %v2287
        %v2768 = vpack.c.b16 %v2292, %v2288
        %v2769 = vpack.c.b16 %v2293, %v2289
        %v2770 = vpack.c.b16 %v2294, %v2290
        %v2771 = vpack.c.b16 %v2299, %v2295
        %v2772 = vpack.c.b16 %v2300, %v2296
        %v2773 = vpack.c.b16 %v2301, %v2297
        %v2774 = vpack.c.b16 %v2302, %v2298
        %v2775 = vpack.c.b16 %v2307, %v2303
        %v2776 = vpack.c.b16 %v2308, %v2304
        %v2777 = vpack.c.b16 %v2309, %v2305
        %v2778 = vpack.c.b16 %v2310, %v2306
        %v2779 = vpack.c.b16 %v2315, %v2311
        %v2780 = vpack.c.b16 %v2316, %v2312
        %v2781 = vpack.c.b16 %v2317, %v2313
        %v2782 = vpack.c.b16 %v2318, %v2314
        %v2783 = vpack.c.b16 %v2323, %v2319
        %v2784 = vpack.c.b16 %v2324, %v2320
        %v2785 = vpack.c.b16 %v2325, %v2321
        %v2786 = vpack.c.b16 %v2326, %v2322
        %v2787 = vpack.c.b16 %v2331, %v2327
        %v2788 = vpack.c.b16 %v2332, %v2328
        %v2789 = vpack.c.b16 %v2333, %v2329
        %v2790 = vpack.c.b16 %v2334, %v2330
        %v2791 = vpack.c.b16 %v2339, %v2335
        %v2792 = vpack.c.b16 %v2340, %v2336
        %v2793 = vpack.c.b16 %v2341, %v2337
        %v2794 = vpack.c.b16 %v2342, %v2338
        %v2795 = vpack.c.b16 %v2347, %v2343
        %v2796 = vpack.c.b16 %v2348, %v2344
        %v2797 = vpack.c.b16 %v2349, %v2345
        %v2798 = vpack.c.b16 %v2350, %v2346
        %v2799 = vpack.c.b16 %v2355, %v2351
        %v2800 = vpack.c.b16 %v2356, %v2352
        %v2801 = vpack.c.b16 %v2357, %v2353
        %v2802 = vpack.c.b16 %v2358, %v2354
        %v2803 = vpack.c.b16 %v2363, %v2359
        %v2804 = vpack.c.b16 %v2364, %v2360
        %v2805 = vpack.c.b16 %v2365, %v2361
        %v2806 = vpack.c.b16 %v2366, %v2362
        %v2807 = vpack.c.b16 %v2371, %v2367
        %v2808 = vpack.c.b16 %v2372, %v2368
        %v2809 = vpack.c.b16 %v2373, %v2369
        %v2810 = vpack.c.b16 %v2374, %v2370
        %v2811 = vpack.c.b16 %v2379, %v2375
        %v2812 = vpack.c.b16 %v2380, %v2376
        %v2813 = vpack.c.b16 %v2381, %v2377
        %v2814 = vpack.c.b16 %v2382, %v2378
        %v2815 = vpack.c.b16 %v2387, %v2383
        %v2816 = vpack.c.b16 %v2388, %v2384
        %v2817 = vpack.c.b16 %v2389, %v2385
        %v2818 = vpack.c.b16 %v2390, %v2386
        %v2819 = vpack.c.b16 %v2395, %v2391
        %v2820 = vpack.c.b16 %v2396, %v2392
        %v2821 = vpack.c.b16 %v2397, %v2393
        %v2822 = vpack.c.b16 %v2398, %v2394
        %v2823 = vpack.c.b16 %v2403, %v2399
        %v2824 = vpack.c.b16 %v2404, %v2400
        %v2825 = vpack.c.b16 %v2405, %v2401
        %v2826 = vpack.c.b16 %v2406, %v2402
        %v2827 = vpack.c.b16 %v2411, %v2407
        %v2828 = vpack.c.b16 %v2412, %v2408
        %v2829 = vpack.c.b16 %v2413, %v2409
        %v2830 = vpack.c.b16 %v2414, %v2410
        %v2831 = vpack.c.b16 %v2419, %v2415
        %v2832 = vpack.c.b16 %v2420, %v2416
        %v2833 = vpack.c.b16 %v2421, %v2417
        %v2834 = vpack.c.b16 %v2422, %v2418
        %v2835 = vpack.c.b16 %v2427, %v2423
        %v2836 = vpack.c.b16 %v2428, %v2424
        %v2837 = vpack.c.b16 %v2429, %v2425
        %v2838 = vpack.c.b16 %v2430, %v2426
        %v2839 = vpack.c.b16 %v2435, %v2431
        %v2840 = vpack.c.b16 %v2436, %v2432
        %v2841 = vpack.c.b16 %v2437, %v2433
        %v2842 = vpack.c.b16 %v2438, %v2434
        %v2843 = vpack.c.b16 %v2443, %v2439
        %v2844 = vpack.c.b16 %v2444, %v2440
        %v2845 = vpack.c.b16 %v2445, %v2441
        %v2846 = vpack.c.b16 %v2446, %v2442
        %v2847 = vpack.c.b16 %v2451, %v2447
        %v2848 = vpack.c.b16 %v2452, %v2448
        %v2849 = vpack.c.b16 %v2453, %v2449
        %v2850 = vpack.c.b16 %v2454, %v2450
        %v2851 = vpack.c.b16 %v2459, %v2455
        %v2852 = vpack.c.b16 %v2460, %v2456
        %v2853 = vpack.c.b16 %v2461, %v2457
        %v2854 = vpack.c.b16 %v2462, %v2458
        %v2855 = vpack.c.b16 %v2467, %v2463
        %v2856 = vpack.c.b16 %v2468, %v2464
        %v2857 = vpack.c.b16 %v2469, %v2465
        %v2858 = vpack.c.b16 %v2470, %v2466
        %v2859 = vpack.c.b16 %v2475, %v2471
        %v2860 = vpack.c.b16 %v2476, %v2472
        %v2861 = vpack.c.b16 %v2477, %v2473
        %v2862 = vpack.c.b16 %v2478, %v2474
        %v2863 = vpack.c.b16 %v2483, %v2479
        %v2864 = vpack.c.b16 %v2484, %v2480
        %v2865 = vpack.c.b16 %v2485, %v2481
        %v2866 = vpack.c.b16 %v2486, %v2482
        %v2867 = vpack.c.b16 %v2491, %v2487
        %v2868 = vpack.c.b16 %v2492, %v2488
        %v2869 = vpack.c.b16 %v2493, %v2489
        %v2870 = vpack.c.b16 %v2494, %v2490
        %v2871 = vpack.c.b16 %v2499, %v2495
        %v2872 = vpack.c.b16 %v2500, %v2496
        %v2873 = vpack.c.b16 %v2501, %v2497
        %v2874 = vpack.c.b16 %v2502, %v2498
        %v2875 = vpack.c.b16 %v2507, %v2503
        %v2876 = vpack.c.b16 %v2508, %v2504
        %v2877 = vpack.c.b16 %v2509, %v2505
        %v2878 = vpack.c.b16 %v2510, %v2506
        %v2879 = vpack.c.b16 %v2515, %v2511
        %v2880 = vpack.c.b16 %v2516, %v2512
        %v2881 = vpack.c.b16 %v2517, %v2513
        %v2882 = vpack.c.b16 %v2518, %v2514
        %v2883 = vpack.c.b16 %v2523, %v2519
        %v2884 = vpack.c.b16 %v2524, %v2520
        %v2885 = vpack.c.b16 %v2525, %v2521
        %v2886 = vpack.c.b16 %v2526, %v2522
        %v2887 = vpack.c.b16 %v2531, %v2527
        %v2888 = vpack.c.b16 %v2532, %v2528
        %v2889 = vpack.c.b16 %v2533, %v2529
        %v2890 = vpack.c.b16 %v2534, %v2530
        %v2891 = vpack.c.b16 %v2539, %v2535
        %v2892 = vpack.c.b16 %v2540, %v2536
        %v2893 = vpack.c.b16 %v2541, %v2537
        %v2894 = vpack.c.b16 %v2542, %v2538
        %v2895 = vpack.c.b16 %v2547, %v2543
        %v2896 = vpack.c.b16 %v2548, %v2544
        %v2897 = vpack.c.b16 %v2549, %v2545
        %v2898 = vpack.c.b16 %v2550, %v2546
        %v2899 = vpack.c.b16 %v2555, %v2551
        %v2900 = vpack.c.b16 %v2556, %v2552
        %v2901 = vpack.c.b16 %v2557, %v2553
        %v2902 = vpack.c.b16 %v2558, %v2554
        %v2903 = vpack.c.b16 %v2563, %v2559
        %v2904 = vpack.c.b16 %v2564, %v2560
        %v2905 = vpack.c.b16 %v2565, %v2561
        %v2906 = vpack.c.b16 %v2566, %v2562
        %v2907 = vpack.c.b16 %v2571, %v2567
        %v2908 = vpack.c.b16 %v2572, %v2568
        %v2909 = vpack.c.b16 %v2573, %v2569
        %v2910 = vpack.c.b16 %v2574, %v2570
        %v2911 = vpack.c.b16 %v2579, %v2575
        %v2912 = vpack.c.b16 %v2580, %v2576
        %v2913 = vpack.c.b16 %v2581, %v2577
        %v2914 = vpack.c.b16 %v2582, %v2578
        %v2915 = vpack.c.b16 %v2587, %v2583
        %v2916 = vpack.c.b16 %v2588, %v2584
        %v2917 = vpack.c.b16 %v2589, %v2585
        %v2918 = vpack.c.b16 %v2590, %v2586
        %v2919 = vpack.c.b16 %v2595, %v2591
        %v2920 = vpack.c.b16 %v2596, %v2592
        %v2921 = vpack.c.b16 %v2597, %v2593
        %v2922 = vpack.c.b16 %v2598, %v2594
        %v2923 = vpack.c.b16 %v2603, %v2599
        %v2924 = vpack.c.b16 %v2604, %v2600
        %v2925 = vpack.c.b16 %v2605, %v2601
        %v2926 = vpack.c.b16 %v2606, %v2602
        %v2927 = vpack.c.b16 %v2611, %v2607
        %v2928 = vpack.c.b16 %v2612, %v2608
        %v2929 = vpack.c.b16 %v2613, %v2609
        %v2930 = vpack.c.b16 %v2614, %v2610
        %v2931 = vpack.c.b16 %v2619, %v2615
        %v2932 = vpack.c.b16 %v2620, %v2616
        %v2933 = vpack.c.b16 %v2621, %v2617
        %v2934 = vpack.c.b16 %v2622, %v2618
        %v2935 = vpack.c.b16 %v2627, %v2623
        %v2936 = vpack.c.b16 %v2628, %v2624
        %v2937 = vpack.c.b16 %v2629, %v2625
        %v2938 = vpack.c.b16 %v2630, %v2626
        %v2939 = vpack.c.b16 %v2635, %v2631
        %v2940 = vpack.c.b16 %v2636, %v2632
        %v2941 = vpack.c.b16 %v2637, %v2633
        %v2942 = vpack.c.b16 %v2638, %v2634
        %v2943 = vpack.c.b16 %v2643, %v2639
        %v2944 = vpack.c.b16 %v2644, %v2640
        %v2945 = vpack.c.b16 %v2645, %v2641
        %v2946 = vpack.c.b16 %v2646, %v2642
        %v2947 = vpack.c.b16 %v2651, %v2647
        %v2948 = vpack.c.b16 %v2652, %v2648
        %v2949 = vpack.c.b16 %v2653, %v2649
        %v2950 = vpack.c.b16 %v2654, %v2650
        %v2951 = vpack.c.b16 %v2659, %v2655
        %v2952 = vpack.c.b16 %v2660, %v2656
        %v2953 = vpack.c.b16 %v2661, %v2657
        %v2954 = vpack.c.b16 %v2662, %v2658
        %v2955 = vpack.c.b16 %v2667, %v2663
        %v2956 = vpack.c.b16 %v2668, %v2664
        %v2957 = vpack.c.b16 %v2669, %v2665
        %v2958 = vpack.c.b16 %v2670, %v2666
        %v2959 = vpack.c.b16 %v2675, %v2671
        %v2960 = vpack.c.b16 %v2676, %v2672
        %v2961 = vpack.c.b16 %v2677, %v2673
        %v2962 = vpack.c.b16 %v2678, %v2674
        %v2963 = vpack.c.b16 %v2683, %v2679
        %v2964 = vpack.c.b16 %v2684, %v2680
        %v2965 = vpack.c.b16 %v2685, %v2681
        %v2966 = vpack.c.b16 %v2686, %v2682
        %v2967 = vpack.c.b16 %v2691, %v2687
        %v2968 = vpack.c.b16 %v2692, %v2688
        %v2969 = vpack.c.b16 %v2693, %v2689
        %v2970 = vpack.c.b16 %v2694, %v2690
        %v2971 = vpack.c.b16 %v2699, %v2695
        %v2972 = vpack.c.b16 %v2700, %v2696
        %v2973 = vpack.c.b16 %v2701, %v2697
        %v2974 = vpack.c.b16 %v2702, %v2698
        %v2975 = vpack.c.b16 %v2707, %v2703
        %v2976 = vpack.c.b16 %v2708, %v2704
        %v2977 = vpack.c.b16 %v2709, %v2705
        %v2978 = vpack.c.b16 %v2710, %v2706
        %v2979 = vpack.c.b16 %v2715, %v2711
        %v2980 = vpack.c.b16 %v2716, %v2712
        %v2981 = vpack.c.b16 %v2717, %v2713
        %v2982 = vpack.c.b16 %v2718, %v2714
        %v2983 = vpack.c.b16 %v2723, %v2719
        %v2984 = vpack.c.b16 %v2724, %v2720
        %v2985 = vpack.c.b16 %v2725, %v2721
        %v2986 = vpack.c.b16 %v2726, %v2722
        %v2987 = vpack.c.b16 %v2731, %v2727
        %v2988 = vpack.c.b16 %v2732, %v2728
        %v2989 = vpack.c.b16 %v2733, %v2729
        %v2990 = vpack.c.b16 %v2734, %v2730
        %3247 = vmatprep.subr.bf16.mxu0 %v2736
        %3248 = vmatpush1.bf16.msra.mxu0 %v2735
        %3249 = vmatprep.subr.bf16.mxu0 %v2740
        %3250 = vmatpush1.bf16.msra.mxu0 %v2739
        %3251 = vmatprep.subr.bf16.mxu0 %v2744
        %3252 = vmatpush1.bf16.msra.mxu0 %v2743
        %3253 = vmatprep.subr.bf16.mxu0 %v2748
        %3254 = vmatpush1.bf16.msra.mxu0 %v2747
        %3255 = vmatprep.subr.bf16.mxu0 %v2752
        %3256 = vmatpush1.bf16.msra.mxu0 %v2751
        %3257 = vmatprep.subr.bf16.mxu0 %v2756
        %3258 = vmatpush1.bf16.msra.mxu0 %v2755
        %3259 = vmatprep.subr.bf16.mxu0 %v2760
        %3260 = vmatpush1.bf16.msra.mxu0 %v2759
        %3261 = vmatprep.subr.bf16.mxu0 %v2764
        %3262 = vmatpush1.bf16.msra.mxu0 %v2763
        %3263 = vmatprep.subr.bf16.mxu0 %v2768
        %3264 = vmatpush1.bf16.msra.mxu0 %v2767
        %3265 = vmatprep.subr.bf16.mxu0 %v2772
        %3266 = vmatpush1.bf16.msra.mxu0 %v2771
        %3267 = vmatprep.subr.bf16.mxu0 %v2776
        %3268 = vmatpush1.bf16.msra.mxu0 %v2775
        %3269 = vmatprep.subr.bf16.mxu0 %v2780
        %3270 = vmatpush1.bf16.msra.mxu0 %v2779
        %3271 = vmatprep.subr.bf16.mxu0 %v2784
        %3272 = vmatpush1.bf16.msra.mxu0 %v2783
        %3273 = vmatprep.subr.bf16.mxu0 %v2788
        %3274 = vmatpush1.bf16.msra.mxu0 %v2787
        %3275 = vmatprep.subr.bf16.mxu0 %v2792
        %3276 = vmatpush1.bf16.msra.mxu0 %v2791
        %3277 = vmatprep.subr.bf16.mxu0 %v2796
        %3278 = vmatpush1.bf16.msra.mxu0 %v2795
        %3279 = vmatprep.mubr.bf16.mxu0 %v1562
        %3280 = vmatmul.mubr.bf16.gmra.mrb[0].mxu0 %v1561
        %v3281 = vpop.f32.mrb[0].mxu0
        %v3282 = vadd.f32 %v1950, %v3281
        %v3283 = vpop.f32.mrb[0].mxu0
        %v3284 = vadd.f32 %v1954, %v3283
        %v3285 = vpop.f32.mrb[0].mxu0
        %v3286 = vadd.f32 %v1950, %v3285
        %v3287 = vpop.f32.mrb[0].mxu0
        %v3288 = vadd.f32 %v1954, %v3287
        %3289 = vmatprep.mubr.bf16.mxu0 %v1570
        %3290 = vmatmul.mubr.bf16.gmra.mrb[0].mxu0 %v1569
        %v3291 = vpop.f32.mrb[0].mxu0
        %v3292 = vadd.f32 %v1950, %v3291
        %v3293 = vpop.f32.mrb[0].mxu0
        %v3294 = vadd.f32 %v1954, %v3293
        %v3295 = vpop.f32.mrb[0].mxu0
        %v3296 = vadd.f32 %v1950, %v3295
        %v3297 = vpop.f32.mrb[0].mxu0
        %v3298 = vadd.f32 %v1954, %v3297
        %3299 = vmatprep.mubr.bf16.mxu0 %v1578
        %3300 = vmatmul.mubr.bf16.gmra.mrb[0].mxu0 %v1577
        %v3301 = vpop.f32.mrb[0].mxu0
        %v3302 = vadd.f32 %v1950, %v3301
        %v3303 = vpop.f32.mrb[0].mxu0
        %v3304 = vadd.f32 %v1954, %v3303
        %v3305 = vpop.f32.mrb[0].mxu0
        %v3306 = vadd.f32 %v1950, %v3305
        %v3307 = vpop.f32.mrb[0].mxu0
        %v3308 = vadd.f32 %v1954, %v3307
        %3309 = vmatprep.mubr.bf16.mxu0 %v1586
        %3310 = vmatmul.mubr.bf16.gmra.mrb[0].mxu0 %v1585
        %v3311 = vpop.f32.mrb[0].mxu0
        %v3312 = vadd.f32 %v1950, %v3311
        %v3313 = vpop.f32.mrb[0].mxu0
        %v3314 = vadd.f32 %v1954, %v3313
        %v3315 = vpop.f32.mrb[0].mxu0
        %v3316 = vadd.f32 %v1950, %v3315
        %v3317 = vpop.f32.mrb[0].mxu0
        %v3318 = vadd.f32 %v1954, %v3317
        %3319 = vmatprep.mubr.bf16.mxu0 %v1594
        %3320 = vmatmul.mubr.bf16.gmra.mrb[0].mxu0 %v1593
        %v3321 = vpop.f32.mrb[0].mxu0
        %v3322 = vadd.f32 %v1950, %v3321
        %v3323 = vpop.f32.mrb[0].mxu0
        %v3324 = vadd.f32 %v1954, %v3323
        %v3325 = vpop.f32.mrb[0].mxu0
        %v3326 = vadd.f32 %v1950, %v3325
        %v3327 = vpop.f32.mrb[0].mxu0
        %v3328 = vadd.f32 %v1954, %v3327
        %3329 = vmatprep.mubr.bf16.mxu0 %v1602
        %3330 = vmatmul.mubr.bf16.gmra.mrb[0].mxu0 %v1601
        %v3331 = vpop.f32.mrb[0].mxu0
        %v3332 = vadd.f32 %v1950, %v3331
        %v3333 = vpop.f32.mrb[0].mxu0
        %v3334 = vadd.f32 %v1954, %v3333
        %v3335 = vpop.f32.mrb[0].mxu0
        %v3336 = vadd.f32 %v1950, %v3335
        %v3337 = vpop.f32.mrb[0].mxu0
        %v3338 = vadd.f32 %v1954, %v3337
        %3339 = vmatprep.mubr.bf16.mxu0 %v1610
        %3340 = vmatmul.mubr.bf16.gmra.mrb[0].mxu0 %v1609
        %v3341 = vpop.f32.mrb[0].mxu0
        %v3342 = vadd.f32 %v1950, %v3341
        %v3343 = vpop.f32.mrb[0].mxu0
        %v3344 = vadd.f32 %v1954, %v3343
        %v3345 = vpop.f32.mrb[0].mxu0
        %v3346 = vadd.f32 %v1950, %v3345
        %v3347 = vpop.f32.mrb[0].mxu0
        %v3348 = vadd.f32 %v1954, %v3347
        %3349 = vmatprep.mubr.bf16.mxu0 %v1618
        %3350 = vmatmul.mubr.bf16.gmra.mrb[0].mxu0 %v1617
        %v3351 = vpop.f32.mrb[0].mxu0
        %v3352 = vadd.f32 %v1950, %v3351
        %v3353 = vpop.f32.mrb[0].mxu0
        %v3354 = vadd.f32 %v1954, %v3353
        %v3355 = vpop.f32.mrb[0].mxu0
        %v3356 = vadd.f32 %v1950, %v3355
        %v3357 = vpop.f32.mrb[0].mxu0
        %v3358 = vadd.f32 %v1954, %v3357
        %3359 = vmatprep.mubr.bf16.mxu0 %v1626
        %3360 = vmatmul.mubr.bf16.gmra.mrb[0].mxu0 %v1625
        %v3361 = vpop.f32.mrb[0].mxu0
        %v3362 = vadd.f32 %v1950, %v3361
        %v3363 = vpop.f32.mrb[0].mxu0
        %v3364 = vadd.f32 %v1954, %v3363
        %v3365 = vpop.f32.mrb[0].mxu0
        %v3366 = vadd.f32 %v1950, %v3365
        %v3367 = vpop.f32.mrb[0].mxu0
        %v3368 = vadd.f32 %v1954, %v3367
        %3369 = vmatprep.mubr.bf16.mxu0 %v1634
        %3370 = vmatmul.mubr.bf16.gmra.mrb[0].mxu0 %v1633
        %v3371 = vpop.f32.mrb[0].mxu0
        %v3372 = vadd.f32 %v1950, %v3371
        %v3373 = vpop.f32.mrb[0].mxu0
        %v3374 = vadd.f32 %v1954, %v3373
        %v3375 = vpop.f32.mrb[0].mxu0
        %v3376 = vadd.f32 %v1950, %v3375
        %v3377 = vpop.f32.mrb[0].mxu0
        %v3378 = vadd.f32 %v1954, %v3377
        %3379 = vmatprep.mubr.bf16.mxu0 %v1642
        %3380 = vmatmul.mubr.bf16.gmra.mrb[0].mxu0 %v1641
        %v3381 = vpop.f32.mrb[0].mxu0
        %v3382 = vadd.f32 %v1950, %v3381
        %v3383 = vpop.f32.mrb[0].mxu0
        %v3384 = vadd.f32 %v1954, %v3383
        %v3385 = vpop.f32.mrb[0].mxu0
        %v3386 = vadd.f32 %v1950, %v3385
        %v3387 = vpop.f32.mrb[0].mxu0
        %v3388 = vadd.f32 %v1954, %v3387
        %3389 = vmatprep.mubr.bf16.mxu0 %v1650
        %3390 = vmatmul.mubr.bf16.gmra.mrb[0].mxu0 %v1649
        %v3391 = vpop.f32.mrb[0].mxu0
        %v3392 = vadd.f32 %v1950, %v3391
        %v3393 = vpop.f32.mrb[0].mxu0
        %v3394 = vadd.f32 %v1954, %v3393
        %v3395 = vpop.f32.mrb[0].mxu0
        %v3396 = vadd.f32 %v1950, %v3395
        %v3397 = vpop.f32.mrb[0].mxu0
        %v3398 = vadd.f32 %v1954, %v3397
        %3399 = vmatprep.mubr.bf16.mxu0 %v1658
        %3400 = vmatmul.mubr.bf16.gmra.mrb[0].mxu0 %v1657
        %v3401 = vpop.f32.mrb[0].mxu0
        %v3402 = vadd.f32 %v1950, %v3401
        %v3403 = vpop.f32.mrb[0].mxu0
        %v3404 = vadd.f32 %v1954, %v3403
        %v3405 = vpop.f32.mrb[0].mxu0
        %v3406 = vadd.f32 %v1950, %v3405
        %v3407 = vpop.f32.mrb[0].mxu0
        %v3408 = vadd.f32 %v1954, %v3407
        %3409 = vmatprep.mubr.bf16.mxu0 %v1666
        %3410 = vmatmul.mubr.bf16.gmra.mrb[0].mxu0 %v1665
        %v3411 = vpop.f32.mrb[0].mxu0
        %v3412 = vadd.f32 %v1950, %v3411
        %v3413 = vpop.f32.mrb[0].mxu0
        %v3414 = vadd.f32 %v1954, %v3413
        %v3415 = vpop.f32.mrb[0].mxu0
        %v3416 = vadd.f32 %v1950, %v3415
        %v3417 = vpop.f32.mrb[0].mxu0
        %v3418 = vadd.f32 %v1954, %v3417
        %3419 = vmatprep.mubr.bf16.mxu0 %v1674
        %3420 = vmatmul.mubr.bf16.gmra.mrb[0].mxu0 %v1673
        %v3421 = vpop.f32.mrb[0].mxu0
        %v3422 = vadd.f32 %v1950, %v3421
        %v3423 = vpop.f32.mrb[0].mxu0
        %v3424 = vadd.f32 %v1954, %v3423
        %v3425 = vpop.f32.mrb[0].mxu0
        %v3426 = vadd.f32 %v1950, %v3425
        %v3427 = vpop.f32.mrb[0].mxu0
        %v3428 = vadd.f32 %v1954, %v3427
        %3429 = vmatprep.mubr.bf16.mxu0 %v1682
        %3430 = vmatmul.mubr.bf16.gmra.mrb[0].mxu0 %v1681
        %v3431 = vpop.f32.mrb[0].mxu0
        %v3432 = vadd.f32 %v1950, %v3431
        %v3433 = vpop.f32.mrb[0].mxu0
        %v3434 = vadd.f32 %v1954, %v3433
        %v3435 = vpop.f32.mrb[0].mxu0
        %v3436 = vadd.f32 %v1950, %v3435
        %v3437 = vpop.f32.mrb[0].mxu0
        %v3438 = vadd.f32 %v1954, %v3437
        %3439 = vdwg.mxu0
        %3440 = vmatprep.subr.bf16.mxu0 %v2800
        %3441 = vmatpush1.bf16.msra.mxu0 %v2799
        %3442 = vmatprep.subr.bf16.mxu0 %v2804
        %3443 = vmatpush1.bf16.msra.mxu0 %v2803
        %3444 = vmatprep.subr.bf16.mxu0 %v2808
        %3445 = vmatpush1.bf16.msra.mxu0 %v2807
        %3446 = vmatprep.subr.bf16.mxu0 %v2812
        %3447 = vmatpush1.bf16.msra.mxu0 %v2811
        %3448 = vmatprep.subr.bf16.mxu0 %v2816
        %3449 = vmatpush1.bf16.msra.mxu0 %v2815
        %3450 = vmatprep.subr.bf16.mxu0 %v2820
        %3451 = vmatpush1.bf16.msra.mxu0 %v2819
        %3452 = vmatprep.subr.bf16.mxu0 %v2824
        %3453 = vmatpush1.bf16.msra.mxu0 %v2823
        %3454 = vmatprep.subr.bf16.mxu0 %v2828
        %3455 = vmatpush1.bf16.msra.mxu0 %v2827
        %3456 = vmatprep.subr.bf16.mxu0 %v2832
        %3457 = vmatpush1.bf16.msra.mxu0 %v2831
        %3458 = vmatprep.subr.bf16.mxu0 %v2836
        %3459 = vmatpush1.bf16.msra.mxu0 %v2835
        %3460 = vmatprep.subr.bf16.mxu0 %v2840
        %3461 = vmatpush1.bf16.msra.mxu0 %v2839
        %3462 = vmatprep.subr.bf16.mxu0 %v2844
        %3463 = vmatpush1.bf16.msra.mxu0 %v2843
        %3464 = vmatprep.subr.bf16.mxu0 %v2848
        %3465 = vmatpush1.bf16.msra.mxu0 %v2847
        %3466 = vmatprep.subr.bf16.mxu0 %v2852
        %3467 = vmatpush1.bf16.msra.mxu0 %v2851
        %3468 = vmatprep.subr.bf16.mxu0 %v2856
        %3469 = vmatpush1.bf16.msra.mxu0 %v2855
        %3470 = vmatprep.subr.bf16.mxu0 %v2860
        %3471 = vmatpush1.bf16.msra.mxu0 %v2859
        %3472 = vmatprep.mubr.bf16.mxu0 %v1564
        %3473 = vmatmul.mubr.bf16.gmra.mrb[0].mxu0 %v1563
        %v3474 = vpop.f32.mrb[0].mxu0
        %v3475 = vadd.f32 %v3282, %v3474
        %v3476 = vpop.f32.mrb[0].mxu0
        %v3477 = vadd.f32 %v3284, %v3476
        %v3478 = vpop.f32.mrb[0].mxu0
        %v3479 = vadd.f32 %v3286, %v3478
        %v3480 = vpop.f32.mrb[0].mxu0
        %v3481 = vadd.f32 %v3288, %v3480
        %3482 = vmatprep.mubr.bf16.mxu0 %v1572
        %3483 = vmatmul.mubr.bf16.gmra.mrb[0].mxu0 %v1571
        %v3484 = vpop.f32.mrb[0].mxu0
        %v3485 = vadd.f32 %v3292, %v3484
        %v3486 = vpop.f32.mrb[0].mxu0
        %v3487 = vadd.f32 %v3294, %v3486
        %v3488 = vpop.f32.mrb[0].mxu0
        %v3489 = vadd.f32 %v3296, %v3488
        %v3490 = vpop.f32.mrb[0].mxu0
        %v3491 = vadd.f32 %v3298, %v3490
        %3492 = vmatprep.mubr.bf16.mxu0 %v1580
        %3493 = vmatmul.mubr.bf16.gmra.mrb[0].mxu0 %v1579
        %v3494 = vpop.f32.mrb[0].mxu0
        %v3495 = vadd.f32 %v3302, %v3494
        %v3496 = vpop.f32.mrb[0].mxu0
        %v3497 = vadd.f32 %v3304, %v3496
        %v3498 = vpop.f32.mrb[0].mxu0
        %v3499 = vadd.f32 %v3306, %v3498
        %v3500 = vpop.f32.mrb[0].mxu0
        %v3501 = vadd.f32 %v3308, %v3500
        %3502 = vmatprep.mubr.bf16.mxu0 %v1588
        %3503 = vmatmul.mubr.bf16.gmra.mrb[0].mxu0 %v1587
        %v3504 = vpop.f32.mrb[0].mxu0
        %v3505 = vadd.f32 %v3312, %v3504
        %v3506 = vpop.f32.mrb[0].mxu0
        %v3507 = vadd.f32 %v3314, %v3506
        %v3508 = vpop.f32.mrb[0].mxu0
        %v3509 = vadd.f32 %v3316, %v3508
        %v3510 = vpop.f32.mrb[0].mxu0
        %v3511 = vadd.f32 %v3318, %v3510
        %3512 = vmatprep.mubr.bf16.mxu0 %v1596
        %3513 = vmatmul.mubr.bf16.gmra.mrb[0].mxu0 %v1595
        %v3514 = vpop.f32.mrb[0].mxu0
        %v3515 = vadd.f32 %v3322, %v3514
        %v3516 = vpop.f32.mrb[0].mxu0
        %v3517 = vadd.f32 %v3324, %v3516
        %v3518 = vpop.f32.mrb[0].mxu0
        %v3519 = vadd.f32 %v3326, %v3518
        %v3520 = vpop.f32.mrb[0].mxu0
        %v3521 = vadd.f32 %v3328, %v3520
        %3522 = vmatprep.mubr.bf16.mxu0 %v1604
        %3523 = vmatmul.mubr.bf16.gmra.mrb[0].mxu0 %v1603
        %v3524 = vpop.f32.mrb[0].mxu0
        %v3525 = vadd.f32 %v3332, %v3524
        %v3526 = vpop.f32.mrb[0].mxu0
        %v3527 = vadd.f32 %v3334, %v3526
        %v3528 = vpop.f32.mrb[0].mxu0
        %v3529 = vadd.f32 %v3336, %v3528
        %v3530 = vpop.f32.mrb[0].mxu0
        %v3531 = vadd.f32 %v3338, %v3530
        %3532 = vmatprep.mubr.bf16.mxu0 %v1612
        %3533 = vmatmul.mubr.bf16.gmra.mrb[0].mxu0 %v1611
        %v3534 = vpop.f32.mrb[0].mxu0
        %v3535 = vadd.f32 %v3342, %v3534
        %v3536 = vpop.f32.mrb[0].mxu0
        %v3537 = vadd.f32 %v3344, %v3536
        %v3538 = vpop.f32.mrb[0].mxu0
        %v3539 = vadd.f32 %v3346, %v3538
        %v3540 = vpop.f32.mrb[0].mxu0
        %v3541 = vadd.f32 %v3348, %v3540
        %3542 = vmatprep.mubr.bf16.mxu0 %v1620
        %3543 = vmatmul.mubr.bf16.gmra.mrb[0].mxu0 %v1619
        %v3544 = vpop.f32.mrb[0].mxu0
        %v3545 = vadd.f32 %v3352, %v3544
        %v3546 = vpop.f32.mrb[0].mxu0
        %v3547 = vadd.f32 %v3354, %v3546
        %v3548 = vpop.f32.mrb[0].mxu0
        %v3549 = vadd.f32 %v3356, %v3548
        %v3550 = vpop.f32.mrb[0].mxu0
        %v3551 = vadd.f32 %v3358, %v3550
        %3552 = vmatprep.mubr.bf16.mxu0 %v1628
        %3553 = vmatmul.mubr.bf16.gmra.mrb[0].mxu0 %v1627
        %v3554 = vpop.f32.mrb[0].mxu0
        %v3555 = vadd.f32 %v3362, %v3554
        %v3556 = vpop.f32.mrb[0].mxu0
        %v3557 = vadd.f32 %v3364, %v3556
        %v3558 = vpop.f32.mrb[0].mxu0
        %v3559 = vadd.f32 %v3366, %v3558
        %v3560 = vpop.f32.mrb[0].mxu0
        %v3561 = vadd.f32 %v3368, %v3560
        %3562 = vmatprep.mubr.bf16.mxu0 %v1636
        %3563 = vmatmul.mubr.bf16.gmra.mrb[0].mxu0 %v1635
        %v3564 = vpop.f32.mrb[0].mxu0
        %v3565 = vadd.f32 %v3372, %v3564
        %v3566 = vpop.f32.mrb[0].mxu0
        %v3567 = vadd.f32 %v3374, %v3566
        %v3568 = vpop.f32.mrb[0].mxu0
        %v3569 = vadd.f32 %v3376, %v3568
        %v3570 = vpop.f32.mrb[0].mxu0
        %v3571 = vadd.f32 %v3378, %v3570
        %3572 = vmatprep.mubr.bf16.mxu0 %v1644
        %3573 = vmatmul.mubr.bf16.gmra.mrb[0].mxu0 %v1643
        %v3574 = vpop.f32.mrb[0].mxu0
        %v3575 = vadd.f32 %v3382, %v3574
        %v3576 = vpop.f32.mrb[0].mxu0
        %v3577 = vadd.f32 %v3384, %v3576
        %v3578 = vpop.f32.mrb[0].mxu0
        %v3579 = vadd.f32 %v3386, %v3578
        %v3580 = vpop.f32.mrb[0].mxu0
        %v3581 = vadd.f32 %v3388, %v3580
        %3582 = vmatprep.mubr.bf16.mxu0 %v1652
        %3583 = vmatmul.mubr.bf16.gmra.mrb[0].mxu0 %v1651
        %v3584 = vpop.f32.mrb[0].mxu0
        %v3585 = vadd.f32 %v3392, %v3584
        %v3586 = vpop.f32.mrb[0].mxu0
        %v3587 = vadd.f32 %v3394, %v3586
        %v3588 = vpop.f32.mrb[0].mxu0
        %v3589 = vadd.f32 %v3396, %v3588
        %v3590 = vpop.f32.mrb[0].mxu0
        %v3591 = vadd.f32 %v3398, %v3590
        %3592 = vmatprep.mubr.bf16.mxu0 %v1660
        %3593 = vmatmul.mubr.bf16.gmra.mrb[0].mxu0 %v1659
        %v3594 = vpop.f32.mrb[0].mxu0
        %v3595 = vadd.f32 %v3402, %v3594
        %v3596 = vpop.f32.mrb[0].mxu0
        %v3597 = vadd.f32 %v3404, %v3596
        %v3598 = vpop.f32.mrb[0].mxu0
        %v3599 = vadd.f32 %v3406, %v3598
        %v3600 = vpop.f32.mrb[0].mxu0
        %v3601 = vadd.f32 %v3408, %v3600
        %3602 = vmatprep.mubr.bf16.mxu0 %v1668
        %3603 = vmatmul.mubr.bf16.gmra.mrb[0].mxu0 %v1667
        %v3604 = vpop.f32.mrb[0].mxu0
        %v3605 = vadd.f32 %v3412, %v3604
        %v3606 = vpop.f32.mrb[0].mxu0
        %v3607 = vadd.f32 %v3414, %v3606
        %v3608 = vpop.f32.mrb[0].mxu0
        %v3609 = vadd.f32 %v3416, %v3608
        %v3610 = vpop.f32.mrb[0].mxu0
        %v3611 = vadd.f32 %v3418, %v3610
        %3612 = vmatprep.mubr.bf16.mxu0 %v1676
        %3613 = vmatmul.mubr.bf16.gmra.mrb[0].mxu0 %v1675
        %v3614 = vpop.f32.mrb[0].mxu0
        %v3615 = vadd.f32 %v3422, %v3614
        %v3616 = vpop.f32.mrb[0].mxu0
        %v3617 = vadd.f32 %v3424, %v3616
        %v3618 = vpop.f32.mrb[0].mxu0
        %v3619 = vadd.f32 %v3426, %v3618
        %v3620 = vpop.f32.mrb[0].mxu0
        %v3621 = vadd.f32 %v3428, %v3620
        %3622 = vmatprep.mubr.bf16.mxu0 %v1684
        %3623 = vmatmul.mubr.bf16.gmra.mrb[0].mxu0 %v1683
        %v3624 = vpop.f32.mrb[0].mxu0
        %v3625 = vadd.f32 %v3432, %v3624
        %v3626 = vpop.f32.mrb[0].mxu0
        %v3627 = vadd.f32 %v3434, %v3626
        %v3628 = vpop.f32.mrb[0].mxu0
        %v3629 = vadd.f32 %v3436, %v3628
        %v3630 = vpop.f32.mrb[0].mxu0
        %v3631 = vadd.f32 %v3438, %v3630
        %3632 = vdwg.mxu0
        %3633 = vmatprep.subr.bf16.mxu0 %v2864
        %3634 = vmatpush1.bf16.msra.mxu0 %v2863
        %3635 = vmatprep.subr.bf16.mxu0 %v2868
        %3636 = vmatpush1.bf16.msra.mxu0 %v2867
        %3637 = vmatprep.subr.bf16.mxu0 %v2872
        %3638 = vmatpush1.bf16.msra.mxu0 %v2871
        %3639 = vmatprep.subr.bf16.mxu0 %v2876
        %3640 = vmatpush1.bf16.msra.mxu0 %v2875
        %3641 = vmatprep.subr.bf16.mxu0 %v2880
        %3642 = vmatpush1.bf16.msra.mxu0 %v2879
        %3643 = vmatprep.subr.bf16.mxu0 %v2884
        %3644 = vmatpush1.bf16.msra.mxu0 %v2883
        %3645 = vmatprep.subr.bf16.mxu0 %v2888
        %3646 = vmatpush1.bf16.msra.mxu0 %v2887
        %3647 = vmatprep.subr.bf16.mxu0 %v2892
        %3648 = vmatpush1.bf16.msra.mxu0 %v2891
        %3649 = vmatprep.subr.bf16.mxu0 %v2896
        %3650 = vmatpush1.bf16.msra.mxu0 %v2895
        %3651 = vmatprep.subr.bf16.mxu0 %v2900
        %3652 = vmatpush1.bf16.msra.mxu0 %v2899
        %3653 = vmatprep.subr.bf16.mxu0 %v2904
        %3654 = vmatpush1.bf16.msra.mxu0 %v2903
        %3655 = vmatprep.subr.bf16.mxu0 %v2908
        %3656 = vmatpush1.bf16.msra.mxu0 %v2907
        %3657 = vmatprep.subr.bf16.mxu0 %v2912
        %3658 = vmatpush1.bf16.msra.mxu0 %v2911
        %3659 = vmatprep.subr.bf16.mxu0 %v2916
        %3660 = vmatpush1.bf16.msra.mxu0 %v2915
        %3661 = vmatprep.subr.bf16.mxu0 %v2920
        %3662 = vmatpush1.bf16.msra.mxu0 %v2919
        %3663 = vmatprep.subr.bf16.mxu0 %v2924
        %3664 = vmatpush1.bf16.msra.mxu0 %v2923
        %3665 = vmatprep.mubr.bf16.mxu0 %v1566
        %3666 = vmatmul.mubr.bf16.gmra.mrb[0].mxu0 %v1565
        %v3667 = vpop.f32.mrb[0].mxu0
        %v3668 = vadd.f32 %v3475, %v3667
        %v3669 = vpop.f32.mrb[0].mxu0
        %v3670 = vadd.f32 %v3477, %v3669
        %v3671 = vpop.f32.mrb[0].mxu0
        %v3672 = vadd.f32 %v3479, %v3671
        %v3673 = vpop.f32.mrb[0].mxu0
        %v3674 = vadd.f32 %v3481, %v3673
        %3675 = vmatprep.mubr.bf16.mxu0 %v1574
        %3676 = vmatmul.mubr.bf16.gmra.mrb[0].mxu0 %v1573
        %v3677 = vpop.f32.mrb[0].mxu0
        %v3678 = vadd.f32 %v3485, %v3677
        %v3679 = vpop.f32.mrb[0].mxu0
        %v3680 = vadd.f32 %v3487, %v3679
        %v3681 = vpop.f32.mrb[0].mxu0
        %v3682 = vadd.f32 %v3489, %v3681
        %v3683 = vpop.f32.mrb[0].mxu0
        %v3684 = vadd.f32 %v3491, %v3683
        %3685 = vmatprep.mubr.bf16.mxu0 %v1582
        %3686 = vmatmul.mubr.bf16.gmra.mrb[0].mxu0 %v1581
        %v3687 = vpop.f32.mrb[0].mxu0
        %v3688 = vadd.f32 %v3495, %v3687
        %v3689 = vpop.f32.mrb[0].mxu0
        %v3690 = vadd.f32 %v3497, %v3689
        %v3691 = vpop.f32.mrb[0].mxu0
        %v3692 = vadd.f32 %v3499, %v3691
        %v3693 = vpop.f32.mrb[0].mxu0
        %v3694 = vadd.f32 %v3501, %v3693
        %3695 = vmatprep.mubr.bf16.mxu0 %v1590
        %3696 = vmatmul.mubr.bf16.gmra.mrb[0].mxu0 %v1589
        %v3697 = vpop.f32.mrb[0].mxu0
        %v3698 = vadd.f32 %v3505, %v3697
        %v3699 = vpop.f32.mrb[0].mxu0
        %v3700 = vadd.f32 %v3507, %v3699
        %v3701 = vpop.f32.mrb[0].mxu0
        %v3702 = vadd.f32 %v3509, %v3701
        %v3703 = vpop.f32.mrb[0].mxu0
        %v3704 = vadd.f32 %v3511, %v3703
        %3705 = vmatprep.mubr.bf16.mxu0 %v1598
        %3706 = vmatmul.mubr.bf16.gmra.mrb[0].mxu0 %v1597
        %v3707 = vpop.f32.mrb[0].mxu0
        %v3708 = vadd.f32 %v3515, %v3707
        %v3709 = vpop.f32.mrb[0].mxu0
        %v3710 = vadd.f32 %v3517, %v3709
        %v3711 = vpop.f32.mrb[0].mxu0
        %v3712 = vadd.f32 %v3519, %v3711
        %v3713 = vpop.f32.mrb[0].mxu0
        %v3714 = vadd.f32 %v3521, %v3713
        %3715 = vmatprep.mubr.bf16.mxu0 %v1606
        %3716 = vmatmul.mubr.bf16.gmra.mrb[0].mxu0 %v1605
        %v3717 = vpop.f32.mrb[0].mxu0
        %v3718 = vadd.f32 %v3525, %v3717
        %v3719 = vpop.f32.mrb[0].mxu0
        %v3720 = vadd.f32 %v3527, %v3719
        %v3721 = vpop.f32.mrb[0].mxu0
        %v3722 = vadd.f32 %v3529, %v3721
        %v3723 = vpop.f32.mrb[0].mxu0
        %v3724 = vadd.f32 %v3531, %v3723
        %3725 = vmatprep.mubr.bf16.mxu0 %v1614
        %3726 = vmatmul.mubr.bf16.gmra.mrb[0].mxu0 %v1613
        %v3727 = vpop.f32.mrb[0].mxu0
        %v3728 = vadd.f32 %v3535, %v3727
        %v3729 = vpop.f32.mrb[0].mxu0
        %v3730 = vadd.f32 %v3537, %v3729
        %v3731 = vpop.f32.mrb[0].mxu0
        %v3732 = vadd.f32 %v3539, %v3731
        %v3733 = vpop.f32.mrb[0].mxu0
        %v3734 = vadd.f32 %v3541, %v3733
        %3735 = vmatprep.mubr.bf16.mxu0 %v1622
        %3736 = vmatmul.mubr.bf16.gmra.mrb[0].mxu0 %v1621
        %v3737 = vpop.f32.mrb[0].mxu0
        %v3738 = vadd.f32 %v3545, %v3737
        %v3739 = vpop.f32.mrb[0].mxu0
        %v3740 = vadd.f32 %v3547, %v3739
        %v3741 = vpop.f32.mrb[0].mxu0
        %v3742 = vadd.f32 %v3549, %v3741
        %v3743 = vpop.f32.mrb[0].mxu0
        %v3744 = vadd.f32 %v3551, %v3743
        %3745 = vmatprep.mubr.bf16.mxu0 %v1630
        %3746 = vmatmul.mubr.bf16.gmra.mrb[0].mxu0 %v1629
        %v3747 = vpop.f32.mrb[0].mxu0
        %v3748 = vadd.f32 %v3555, %v3747
        %v3749 = vpop.f32.mrb[0].mxu0
        %v3750 = vadd.f32 %v3557, %v3749
        %v3751 = vpop.f32.mrb[0].mxu0
        %v3752 = vadd.f32 %v3559, %v3751
        %v3753 = vpop.f32.mrb[0].mxu0
        %v3754 = vadd.f32 %v3561, %v3753
        %3755 = vmatprep.mubr.bf16.mxu0 %v1638
        %3756 = vmatmul.mubr.bf16.gmra.mrb[0].mxu0 %v1637
        %v3757 = vpop.f32.mrb[0].mxu0
        %v3758 = vadd.f32 %v3565, %v3757
        %v3759 = vpop.f32.mrb[0].mxu0
        %v3760 = vadd.f32 %v3567, %v3759
        %v3761 = vpop.f32.mrb[0].mxu0
        %v3762 = vadd.f32 %v3569, %v3761
        %v3763 = vpop.f32.mrb[0].mxu0
        %v3764 = vadd.f32 %v3571, %v3763
        %3765 = vmatprep.mubr.bf16.mxu0 %v1646
        %3766 = vmatmul.mubr.bf16.gmra.mrb[0].mxu0 %v1645
        %v3767 = vpop.f32.mrb[0].mxu0
        %v3768 = vadd.f32 %v3575, %v3767
        %v3769 = vpop.f32.mrb[0].mxu0
        %v3770 = vadd.f32 %v3577, %v3769
        %v3771 = vpop.f32.mrb[0].mxu0
        %v3772 = vadd.f32 %v3579, %v3771
        %v3773 = vpop.f32.mrb[0].mxu0
        %v3774 = vadd.f32 %v3581, %v3773
        %3775 = vmatprep.mubr.bf16.mxu0 %v1654
        %3776 = vmatmul.mubr.bf16.gmra.mrb[0].mxu0 %v1653
        %v3777 = vpop.f32.mrb[0].mxu0
        %v3778 = vadd.f32 %v3585, %v3777
        %v3779 = vpop.f32.mrb[0].mxu0
        %v3780 = vadd.f32 %v3587, %v3779
        %v3781 = vpop.f32.mrb[0].mxu0
        %v3782 = vadd.f32 %v3589, %v3781
        %v3783 = vpop.f32.mrb[0].mxu0
        %v3784 = vadd.f32 %v3591, %v3783
        %3785 = vmatprep.mubr.bf16.mxu0 %v1662
        %3786 = vmatmul.mubr.bf16.gmra.mrb[0].mxu0 %v1661
        %v3787 = vpop.f32.mrb[0].mxu0
        %v3788 = vadd.f32 %v3595, %v3787
        %v3789 = vpop.f32.mrb[0].mxu0
        %v3790 = vadd.f32 %v3597, %v3789
        %v3791 = vpop.f32.mrb[0].mxu0
        %v3792 = vadd.f32 %v3599, %v3791
        %v3793 = vpop.f32.mrb[0].mxu0
        %v3794 = vadd.f32 %v3601, %v3793
        %3795 = vmatprep.mubr.bf16.mxu0 %v1670
        %3796 = vmatmul.mubr.bf16.gmra.mrb[0].mxu0 %v1669
        %v3797 = vpop.f32.mrb[0].mxu0
        %v3798 = vadd.f32 %v3605, %v3797
        %v3799 = vpop.f32.mrb[0].mxu0
        %v3800 = vadd.f32 %v3607, %v3799
        %v3801 = vpop.f32.mrb[0].mxu0
        %v3802 = vadd.f32 %v3609, %v3801
        %v3803 = vpop.f32.mrb[0].mxu0
        %v3804 = vadd.f32 %v3611, %v3803
        %3805 = vmatprep.mubr.bf16.mxu0 %v1678
        %3806 = vmatmul.mubr.bf16.gmra.mrb[0].mxu0 %v1677
        %v3807 = vpop.f32.mrb[0].mxu0
        %v3808 = vadd.f32 %v3615, %v3807
        %v3809 = vpop.f32.mrb[0].mxu0
        %v3810 = vadd.f32 %v3617, %v3809
        %v3811 = vpop.f32.mrb[0].mxu0
        %v3812 = vadd.f32 %v3619, %v3811
        %v3813 = vpop.f32.mrb[0].mxu0
        %v3814 = vadd.f32 %v3621, %v3813
        %3815 = vmatprep.mubr.bf16.mxu0 %v1686
        %3816 = vmatmul.mubr.bf16.gmra.mrb[0].mxu0 %v1685
        %v3817 = vpop.f32.mrb[0].mxu0
        %v3818 = vadd.f32 %v3625, %v3817
        %v3819 = vpop.f32.mrb[0].mxu0
        %v3820 = vadd.f32 %v3627, %v3819
        %v3821 = vpop.f32.mrb[0].mxu0
        %v3822 = vadd.f32 %v3629, %v3821
        %v3823 = vpop.f32.mrb[0].mxu0
        %v3824 = vadd.f32 %v3631, %v3823
        %3825 = vdwg.mxu0
        %3826 = vmatprep.subr.bf16.mxu0 %v2928
        %3827 = vmatpush1.bf16.msra.mxu0 %v2927
        %3828 = vmatprep.subr.bf16.mxu0 %v2932
        %3829 = vmatpush1.bf16.msra.mxu0 %v2931
        %3830 = vmatprep.subr.bf16.mxu0 %v2936
        %3831 = vmatpush1.bf16.msra.mxu0 %v2935
        %3832 = vmatprep.subr.bf16.mxu0 %v2940
        %3833 = vmatpush1.bf16.msra.mxu0 %v2939
        %3834 = vmatprep.subr.bf16.mxu0 %v2944
        %3835 = vmatpush1.bf16.msra.mxu0 %v2943
        %3836 = vmatprep.subr.bf16.mxu0 %v2948
        %3837 = vmatpush1.bf16.msra.mxu0 %v2947
        %3838 = vmatprep.subr.bf16.mxu0 %v2952
        %3839 = vmatpush1.bf16.msra.mxu0 %v2951
        %3840 = vmatprep.subr.bf16.mxu0 %v2956
        %3841 = vmatpush1.bf16.msra.mxu0 %v2955
        %3842 = vmatprep.subr.bf16.mxu0 %v2960
        %3843 = vmatpush1.bf16.msra.mxu0 %v2959
        %3844 = vmatprep.subr.bf16.mxu0 %v2964
        %3845 = vmatpush1.bf16.msra.mxu0 %v2963
        %3846 = vmatprep.subr.bf16.mxu0 %v2968
        %3847 = vmatpush1.bf16.msra.mxu0 %v2967
        %3848 = vmatprep.subr.bf16.mxu0 %v2972
        %3849 = vmatpush1.bf16.msra.mxu0 %v2971
        %3850 = vmatprep.subr.bf16.mxu0 %v2976
        %3851 = vmatpush1.bf16.msra.mxu0 %v2975
        %3852 = vmatprep.subr.bf16.mxu0 %v2980
        %3853 = vmatpush1.bf16.msra.mxu0 %v2979
        %3854 = vmatprep.subr.bf16.mxu0 %v2984
        %3855 = vmatpush1.bf16.msra.mxu0 %v2983
        %3856 = vmatprep.subr.bf16.mxu0 %v2988
        %3857 = vmatpush1.bf16.msra.mxu0 %v2987
        %3858 = vmatprep.mubr.bf16.mxu0 %v1568
        %3859 = vmatmul.mubr.bf16.gmra.mrb[0].mxu0 %v1567
        %v3860 = vpop.f32.mrb[0].mxu0
        %v3861 = vadd.f32 %v3668, %v3860
        %v3862 = vpop.f32.mrb[0].mxu0
        %v3863 = vadd.f32 %v3670, %v3862
        %v3864 = vpop.f32.mrb[0].mxu0
        %v3865 = vadd.f32 %v3672, %v3864
        %v3866 = vpop.f32.mrb[0].mxu0
        %v3867 = vadd.f32 %v3674, %v3866
        %3868 = vmatprep.mubr.bf16.mxu0 %v1576
        %3869 = vmatmul.mubr.bf16.gmra.mrb[0].mxu0 %v1575
        %v3870 = vpop.f32.mrb[0].mxu0
        %v3871 = vadd.f32 %v3678, %v3870
        %v3872 = vpop.f32.mrb[0].mxu0
        %v3873 = vadd.f32 %v3680, %v3872
        %v3874 = vpop.f32.mrb[0].mxu0
        %v3875 = vadd.f32 %v3682, %v3874
        %v3876 = vpop.f32.mrb[0].mxu0
        %v3877 = vadd.f32 %v3684, %v3876
        %3878 = vmatprep.mubr.bf16.mxu0 %v1584
        %3879 = vmatmul.mubr.bf16.gmra.mrb[0].mxu0 %v1583
        %v3880 = vpop.f32.mrb[0].mxu0
        %v3881 = vadd.f32 %v3688, %v3880
        %v3882 = vpop.f32.mrb[0].mxu0
        %v3883 = vadd.f32 %v3690, %v3882
        %v3884 = vpop.f32.mrb[0].mxu0
        %v3885 = vadd.f32 %v3692, %v3884
        %v3886 = vpop.f32.mrb[0].mxu0
        %v3887 = vadd.f32 %v3694, %v3886
        %3888 = vmatprep.mubr.bf16.mxu0 %v1592
        %3889 = vmatmul.mubr.bf16.gmra.mrb[0].mxu0 %v1591
        %v3890 = vpop.f32.mrb[0].mxu0
        %v3891 = vadd.f32 %v3698, %v3890
        %v3892 = vpop.f32.mrb[0].mxu0
        %v3893 = vadd.f32 %v3700, %v3892
        %v3894 = vpop.f32.mrb[0].mxu0
        %v3895 = vadd.f32 %v3702, %v3894
        %v3896 = vpop.f32.mrb[0].mxu0
        %v3897 = vadd.f32 %v3704, %v3896
        %3898 = vmatprep.mubr.bf16.mxu0 %v1600
        %3899 = vmatmul.mubr.bf16.gmra.mrb[0].mxu0 %v1599
        %v3900 = vpop.f32.mrb[0].mxu0
        %v3901 = vadd.f32 %v3708, %v3900
        %v3902 = vpop.f32.mrb[0].mxu0
        %v3903 = vadd.f32 %v3710, %v3902
        %v3904 = vpop.f32.mrb[0].mxu0
        %v3905 = vadd.f32 %v3712, %v3904
        %v3906 = vpop.f32.mrb[0].mxu0
        %v3907 = vadd.f32 %v3714, %v3906
        %3908 = vmatprep.mubr.bf16.mxu0 %v1608
        %3909 = vmatmul.mubr.bf16.gmra.mrb[0].mxu0 %v1607
        %v3910 = vpop.f32.mrb[0].mxu0
        %v3911 = vadd.f32 %v3718, %v3910
        %v3912 = vpop.f32.mrb[0].mxu0
        %v3913 = vadd.f32 %v3720, %v3912
        %v3914 = vpop.f32.mrb[0].mxu0
        %v3915 = vadd.f32 %v3722, %v3914
        %v3916 = vpop.f32.mrb[0].mxu0
        %v3917 = vadd.f32 %v3724, %v3916
        %3918 = vmatprep.mubr.bf16.mxu0 %v1616
        %3919 = vmatmul.mubr.bf16.gmra.mrb[0].mxu0 %v1615
        %v3920 = vpop.f32.mrb[0].mxu0
        %v3921 = vadd.f32 %v3728, %v3920
        %v3922 = vpop.f32.mrb[0].mxu0
        %v3923 = vadd.f32 %v3730, %v3922
        %v3924 = vpop.f32.mrb[0].mxu0
        %v3925 = vadd.f32 %v3732, %v3924
        %v3926 = vpop.f32.mrb[0].mxu0
        %v3927 = vadd.f32 %v3734, %v3926
        %3928 = vmatprep.mubr.bf16.mxu0 %v1624
        %3929 = vmatmul.mubr.bf16.gmra.mrb[0].mxu0 %v1623
        %v3930 = vpop.f32.mrb[0].mxu0
        %v3931 = vadd.f32 %v3738, %v3930
        %v3932 = vpop.f32.mrb[0].mxu0
        %v3933 = vadd.f32 %v3740, %v3932
        %v3934 = vpop.f32.mrb[0].mxu0
        %v3935 = vadd.f32 %v3742, %v3934
        %v3936 = vpop.f32.mrb[0].mxu0
        %v3937 = vadd.f32 %v3744, %v3936
        %3938 = vmatprep.mubr.bf16.mxu0 %v1632
        %3939 = vmatmul.mubr.bf16.gmra.mrb[0].mxu0 %v1631
        %v3940 = vpop.f32.mrb[0].mxu0
        %v3941 = vadd.f32 %v3748, %v3940
        %v3942 = vpop.f32.mrb[0].mxu0
        %v3943 = vadd.f32 %v3750, %v3942
        %v3944 = vpop.f32.mrb[0].mxu0
        %v3945 = vadd.f32 %v3752, %v3944
        %v3946 = vpop.f32.mrb[0].mxu0
        %v3947 = vadd.f32 %v3754, %v3946
        %3948 = vmatprep.mubr.bf16.mxu0 %v1640
        %3949 = vmatmul.mubr.bf16.gmra.mrb[0].mxu0 %v1639
        %v3950 = vpop.f32.mrb[0].mxu0
        %v3951 = vadd.f32 %v3758, %v3950
        %v3952 = vpop.f32.mrb[0].mxu0
        %v3953 = vadd.f32 %v3760, %v3952
        %v3954 = vpop.f32.mrb[0].mxu0
        %v3955 = vadd.f32 %v3762, %v3954
        %v3956 = vpop.f32.mrb[0].mxu0
        %v3957 = vadd.f32 %v3764, %v3956
        %3958 = vmatprep.mubr.bf16.mxu0 %v1648
        %3959 = vmatmul.mubr.bf16.gmra.mrb[0].mxu0 %v1647
        %v3960 = vpop.f32.mrb[0].mxu0
        %v3961 = vadd.f32 %v3768, %v3960
        %v3962 = vpop.f32.mrb[0].mxu0
        %v3963 = vadd.f32 %v3770, %v3962
        %v3964 = vpop.f32.mrb[0].mxu0
        %v3965 = vadd.f32 %v3772, %v3964
        %v3966 = vpop.f32.mrb[0].mxu0
        %v3967 = vadd.f32 %v3774, %v3966
        %3968 = vmatprep.mubr.bf16.mxu0 %v1656
        %3969 = vmatmul.mubr.bf16.gmra.mrb[0].mxu0 %v1655
        %v3970 = vpop.f32.mrb[0].mxu0
        %v3971 = vadd.f32 %v3778, %v3970
        %v3972 = vpop.f32.mrb[0].mxu0
        %v3973 = vadd.f32 %v3780, %v3972
        %v3974 = vpop.f32.mrb[0].mxu0
        %v3975 = vadd.f32 %v3782, %v3974
        %v3976 = vpop.f32.mrb[0].mxu0
        %v3977 = vadd.f32 %v3784, %v3976
        %3978 = vmatprep.mubr.bf16.mxu0 %v1664
        %3979 = vmatmul.mubr.bf16.gmra.mrb[0].mxu0 %v1663
        %v3980 = vpop.f32.mrb[0].mxu0
        %v3981 = vadd.f32 %v3788, %v3980
        %v3982 = vpop.f32.mrb[0].mxu0
        %v3983 = vadd.f32 %v3790, %v3982
        %v3984 = vpop.f32.mrb[0].mxu0
        %v3985 = vadd.f32 %v3792, %v3984
        %v3986 = vpop.f32.mrb[0].mxu0
        %v3987 = vadd.f32 %v3794, %v3986
        %3988 = vmatprep.mubr.bf16.mxu0 %v1672
        %3989 = vmatmul.mubr.bf16.gmra.mrb[0].mxu0 %v1671
        %v3990 = vpop.f32.mrb[0].mxu0
        %v3991 = vadd.f32 %v3798, %v3990
        %v3992 = vpop.f32.mrb[0].mxu0
        %v3993 = vadd.f32 %v3800, %v3992
        %v3994 = vpop.f32.mrb[0].mxu0
        %v3995 = vadd.f32 %v3802, %v3994
        %v3996 = vpop.f32.mrb[0].mxu0
        %v3997 = vadd.f32 %v3804, %v3996
        %3998 = vmatprep.mubr.bf16.mxu0 %v1680
        %3999 = vmatmul.mubr.bf16.gmra.mrb[0].mxu0 %v1679
        %v4000 = vpop.f32.mrb[0].mxu0
        %v4001 = vadd.f32 %v3808, %v4000
        %v4002 = vpop.f32.mrb[0].mxu0
        %v4003 = vadd.f32 %v3810, %v4002
        %v4004 = vpop.f32.mrb[0].mxu0
        %v4005 = vadd.f32 %v3812, %v4004
        %v4006 = vpop.f32.mrb[0].mxu0
        %v4007 = vadd.f32 %v3814, %v4006
        %4008 = vmatprep.mubr.bf16.mxu0 %v1688
        %4009 = vmatmul.mubr.bf16.gmra.mrb[0].mxu0 %v1687
        %v4010 = vpop.f32.mrb[0].mxu0
        %v4011 = vadd.f32 %v3818, %v4010
        %v4012 = vpop.f32.mrb[0].mxu0
        %v4013 = vadd.f32 %v3820, %v4012
        %v4014 = vpop.f32.mrb[0].mxu0
        %v4015 = vadd.f32 %v3822, %v4014
        %v4016 = vpop.f32.mrb[0].mxu0
        %v4017 = vadd.f32 %v3824, %v4016
        %4018 = vdwg.mxu0
        %4019 = vmatprep.subr.bf16.mxu0 %v2738
        %4020 = vmatpush1.bf16.msra.mxu0 %v2737
        %4021 = vmatprep.subr.bf16.mxu0 %v2742
        %4022 = vmatpush1.bf16.msra.mxu0 %v2741
        %4023 = vmatprep.subr.bf16.mxu0 %v2746
        %4024 = vmatpush1.bf16.msra.mxu0 %v2745
        %4025 = vmatprep.subr.bf16.mxu0 %v2750
        %4026 = vmatpush1.bf16.msra.mxu0 %v2749
        %4027 = vmatprep.subr.bf16.mxu0 %v2754
        %4028 = vmatpush1.bf16.msra.mxu0 %v2753
        %4029 = vmatprep.subr.bf16.mxu0 %v2758
        %4030 = vmatpush1.bf16.msra.mxu0 %v2757
        %4031 = vmatprep.subr.bf16.mxu0 %v2762
        %4032 = vmatpush1.bf16.msra.mxu0 %v2761
        %4033 = vmatprep.subr.bf16.mxu0 %v2766
        %4034 = vmatpush1.bf16.msra.mxu0 %v2765
        %4035 = vmatprep.subr.bf16.mxu0 %v2770
        %4036 = vmatpush1.bf16.msra.mxu0 %v2769
        %4037 = vmatprep.subr.bf16.mxu0 %v2774
        %4038 = vmatpush1.bf16.msra.mxu0 %v2773
        %4039 = vmatprep.subr.bf16.mxu0 %v2778
        %4040 = vmatpush1.bf16.msra.mxu0 %v2777
        %4041 = vmatprep.subr.bf16.mxu0 %v2782
        %4042 = vmatpush1.bf16.msra.mxu0 %v2781
        %4043 = vmatprep.subr.bf16.mxu0 %v2786
        %4044 = vmatpush1.bf16.msra.mxu0 %v2785
        %4045 = vmatprep.subr.bf16.mxu0 %v2790
        %4046 = vmatpush1.bf16.msra.mxu0 %v2789
        %4047 = vmatprep.subr.bf16.mxu0 %v2794
        %4048 = vmatpush1.bf16.msra.mxu0 %v2793
        %4049 = vmatprep.subr.bf16.mxu0 %v2798
        %4050 = vmatpush1.bf16.msra.mxu0 %v2797
        %4051 = vmatprep.mubr.bf16.mxu0 %v1562
        %4052 = vmatmul.mubr.bf16.gmra.mrb[0].mxu0 %v1561
        %v4053 = vpop.f32.mrb[0].mxu0
        %v4054 = vadd.f32 %v1958, %v4053
        %v4055 = vpop.f32.mrb[0].mxu0
        %v4056 = vadd.f32 %v1962, %v4055
        %v4057 = vpop.f32.mrb[0].mxu0
        %v4058 = vadd.f32 %v1958, %v4057
        %v4059 = vpop.f32.mrb[0].mxu0
        %v4060 = vadd.f32 %v1962, %v4059
        %4061 = vmatprep.mubr.bf16.mxu0 %v1570
        %4062 = vmatmul.mubr.bf16.gmra.mrb[0].mxu0 %v1569
        %v4063 = vpop.f32.mrb[0].mxu0
        %v4064 = vadd.f32 %v1958, %v4063
        %v4065 = vpop.f32.mrb[0].mxu0
        %v4066 = vadd.f32 %v1962, %v4065
        %v4067 = vpop.f32.mrb[0].mxu0
        %v4068 = vadd.f32 %v1958, %v4067
        %v4069 = vpop.f32.mrb[0].mxu0
        %v4070 = vadd.f32 %v1962, %v4069
        %4071 = vmatprep.mubr.bf16.mxu0 %v1578
        %4072 = vmatmul.mubr.bf16.gmra.mrb[0].mxu0 %v1577
        %v4073 = vpop.f32.mrb[0].mxu0
        %v4074 = vadd.f32 %v1958, %v4073
        %v4075 = vpop.f32.mrb[0].mxu0
        %v4076 = vadd.f32 %v1962, %v4075
        %v4077 = vpop.f32.mrb[0].mxu0
        %v4078 = vadd.f32 %v1958, %v4077
        %v4079 = vpop.f32.mrb[0].mxu0
        %v4080 = vadd.f32 %v1962, %v4079
        %4081 = vmatprep.mubr.bf16.mxu0 %v1586
        %4082 = vmatmul.mubr.bf16.gmra.mrb[0].mxu0 %v1585
        %v4083 = vpop.f32.mrb[0].mxu0
        %v4084 = vadd.f32 %v1958, %v4083
        %v4085 = vpop.f32.mrb[0].mxu0
        %v4086 = vadd.f32 %v1962, %v4085
        %v4087 = vpop.f32.mrb[0].mxu0
        %v4088 = vadd.f32 %v1958, %v4087
        %v4089 = vpop.f32.mrb[0].mxu0
        %v4090 = vadd.f32 %v1962, %v4089
        %4091 = vmatprep.mubr.bf16.mxu0 %v1594
        %4092 = vmatmul.mubr.bf16.gmra.mrb[0].mxu0 %v1593
        %v4093 = vpop.f32.mrb[0].mxu0
        %v4094 = vadd.f32 %v1958, %v4093
        %v4095 = vpop.f32.mrb[0].mxu0
        %v4096 = vadd.f32 %v1962, %v4095
        %v4097 = vpop.f32.mrb[0].mxu0
        %v4098 = vadd.f32 %v1958, %v4097
        %v4099 = vpop.f32.mrb[0].mxu0
        %v4100 = vadd.f32 %v1962, %v4099
        %4101 = vmatprep.mubr.bf16.mxu0 %v1602
        %4102 = vmatmul.mubr.bf16.gmra.mrb[0].mxu0 %v1601
        %v4103 = vpop.f32.mrb[0].mxu0
        %v4104 = vadd.f32 %v1958, %v4103
        %v4105 = vpop.f32.mrb[0].mxu0
        %v4106 = vadd.f32 %v1962, %v4105
        %v4107 = vpop.f32.mrb[0].mxu0
        %v4108 = vadd.f32 %v1958, %v4107
        %v4109 = vpop.f32.mrb[0].mxu0
        %v4110 = vadd.f32 %v1962, %v4109
        %4111 = vmatprep.mubr.bf16.mxu0 %v1610
        %4112 = vmatmul.mubr.bf16.gmra.mrb[0].mxu0 %v1609
        %v4113 = vpop.f32.mrb[0].mxu0
        %v4114 = vadd.f32 %v1958, %v4113
        %v4115 = vpop.f32.mrb[0].mxu0
        %v4116 = vadd.f32 %v1962, %v4115
        %v4117 = vpop.f32.mrb[0].mxu0
        %v4118 = vadd.f32 %v1958, %v4117
        %v4119 = vpop.f32.mrb[0].mxu0
        %v4120 = vadd.f32 %v1962, %v4119
        %4121 = vmatprep.mubr.bf16.mxu0 %v1618
        %4122 = vmatmul.mubr.bf16.gmra.mrb[0].mxu0 %v1617
        %v4123 = vpop.f32.mrb[0].mxu0
        %v4124 = vadd.f32 %v1958, %v4123
        %v4125 = vpop.f32.mrb[0].mxu0
        %v4126 = vadd.f32 %v1962, %v4125
        %v4127 = vpop.f32.mrb[0].mxu0
        %v4128 = vadd.f32 %v1958, %v4127
        %v4129 = vpop.f32.mrb[0].mxu0
        %v4130 = vadd.f32 %v1962, %v4129
        %4131 = vmatprep.mubr.bf16.mxu0 %v1626
        %4132 = vmatmul.mubr.bf16.gmra.mrb[0].mxu0 %v1625
        %v4133 = vpop.f32.mrb[0].mxu0
        %v4134 = vadd.f32 %v1958, %v4133
        %v4135 = vpop.f32.mrb[0].mxu0
        %v4136 = vadd.f32 %v1962, %v4135
        %v4137 = vpop.f32.mrb[0].mxu0
        %v4138 = vadd.f32 %v1958, %v4137
        %v4139 = vpop.f32.mrb[0].mxu0
        %v4140 = vadd.f32 %v1962, %v4139
        %4141 = vmatprep.mubr.bf16.mxu0 %v1634
        %4142 = vmatmul.mubr.bf16.gmra.mrb[0].mxu0 %v1633
        %v4143 = vpop.f32.mrb[0].mxu0
        %v4144 = vadd.f32 %v1958, %v4143
        %v4145 = vpop.f32.mrb[0].mxu0
        %v4146 = vadd.f32 %v1962, %v4145
        %v4147 = vpop.f32.mrb[0].mxu0
        %v4148 = vadd.f32 %v1958, %v4147
        %v4149 = vpop.f32.mrb[0].mxu0
        %v4150 = vadd.f32 %v1962, %v4149
        %4151 = vmatprep.mubr.bf16.mxu0 %v1642
        %4152 = vmatmul.mubr.bf16.gmra.mrb[0].mxu0 %v1641
        %v4153 = vpop.f32.mrb[0].mxu0
        %v4154 = vadd.f32 %v1958, %v4153
        %v4155 = vpop.f32.mrb[0].mxu0
        %v4156 = vadd.f32 %v1962, %v4155
        %v4157 = vpop.f32.mrb[0].mxu0
        %v4158 = vadd.f32 %v1958, %v4157
        %v4159 = vpop.f32.mrb[0].mxu0
        %v4160 = vadd.f32 %v1962, %v4159
        %4161 = vmatprep.mubr.bf16.mxu0 %v1650
        %4162 = vmatmul.mubr.bf16.gmra.mrb[0].mxu0 %v1649
        %v4163 = vpop.f32.mrb[0].mxu0
        %v4164 = vadd.f32 %v1958, %v4163
        %v4165 = vpop.f32.mrb[0].mxu0
        %v4166 = vadd.f32 %v1962, %v4165
        %v4167 = vpop.f32.mrb[0].mxu0
        %v4168 = vadd.f32 %v1958, %v4167
        %v4169 = vpop.f32.mrb[0].mxu0
        %v4170 = vadd.f32 %v1962, %v4169
        %4171 = vmatprep.mubr.bf16.mxu0 %v1658
        %4172 = vmatmul.mubr.bf16.gmra.mrb[0].mxu0 %v1657
        %v4173 = vpop.f32.mrb[0].mxu0
        %v4174 = vadd.f32 %v1958, %v4173
        %v4175 = vpop.f32.mrb[0].mxu0
        %v4176 = vadd.f32 %v1962, %v4175
        %v4177 = vpop.f32.mrb[0].mxu0
        %v4178 = vadd.f32 %v1958, %v4177
        %v4179 = vpop.f32.mrb[0].mxu0
        %v4180 = vadd.f32 %v1962, %v4179
        %4181 = vmatprep.mubr.bf16.mxu0 %v1666
        %4182 = vmatmul.mubr.bf16.gmra.mrb[0].mxu0 %v1665
        %v4183 = vpop.f32.mrb[0].mxu0
        %v4184 = vadd.f32 %v1958, %v4183
        %v4185 = vpop.f32.mrb[0].mxu0
        %v4186 = vadd.f32 %v1962, %v4185
        %v4187 = vpop.f32.mrb[0].mxu0
        %v4188 = vadd.f32 %v1958, %v4187
        %v4189 = vpop.f32.mrb[0].mxu0
        %v4190 = vadd.f32 %v1962, %v4189
        %4191 = vmatprep.mubr.bf16.mxu0 %v1674
        %4192 = vmatmul.mubr.bf16.gmra.mrb[0].mxu0 %v1673
        %v4193 = vpop.f32.mrb[0].mxu0
        %v4194 = vadd.f32 %v1958, %v4193
        %v4195 = vpop.f32.mrb[0].mxu0
        %v4196 = vadd.f32 %v1962, %v4195
        %v4197 = vpop.f32.mrb[0].mxu0
        %v4198 = vadd.f32 %v1958, %v4197
        %v4199 = vpop.f32.mrb[0].mxu0
        %v4200 = vadd.f32 %v1962, %v4199
        %4201 = vmatprep.mubr.bf16.mxu0 %v1682
        %4202 = vmatmul.mubr.bf16.gmra.mrb[0].mxu0 %v1681
        %v4203 = vpop.f32.mrb[0].mxu0
        %v4204 = vadd.f32 %v1958, %v4203
        %v4205 = vpop.f32.mrb[0].mxu0
        %v4206 = vadd.f32 %v1962, %v4205
        %v4207 = vpop.f32.mrb[0].mxu0
        %v4208 = vadd.f32 %v1958, %v4207
        %v4209 = vpop.f32.mrb[0].mxu0
        %v4210 = vadd.f32 %v1962, %v4209
        %4211 = vdwg.mxu0
        %4212 = vmatprep.subr.bf16.mxu0 %v2802
        %4213 = vmatpush1.bf16.msra.mxu0 %v2801
        %4214 = vmatprep.subr.bf16.mxu0 %v2806
        %4215 = vmatpush1.bf16.msra.mxu0 %v2805
        %4216 = vmatprep.subr.bf16.mxu0 %v2810
        %4217 = vmatpush1.bf16.msra.mxu0 %v2809
        %4218 = vmatprep.subr.bf16.mxu0 %v2814
        %4219 = vmatpush1.bf16.msra.mxu0 %v2813
        %4220 = vmatprep.subr.bf16.mxu0 %v2818
        %4221 = vmatpush1.bf16.msra.mxu0 %v2817
        %4222 = vmatprep.subr.bf16.mxu0 %v2822
        %4223 = vmatpush1.bf16.msra.mxu0 %v2821
        %4224 = vmatprep.subr.bf16.mxu0 %v2826
        %4225 = vmatpush1.bf16.msra.mxu0 %v2825
        %4226 = vmatprep.subr.bf16.mxu0 %v2830
        %4227 = vmatpush1.bf16.msra.mxu0 %v2829
        %4228 = vmatprep.subr.bf16.mxu0 %v2834
        %4229 = vmatpush1.bf16.msra.mxu0 %v2833
        %4230 = vmatprep.subr.bf16.mxu0 %v2838
        %4231 = vmatpush1.bf16.msra.mxu0 %v2837
        %4232 = vmatprep.subr.bf16.mxu0 %v2842
        %4233 = vmatpush1.bf16.msra.mxu0 %v2841
        %4234 = vmatprep.subr.bf16.mxu0 %v2846
        %4235 = vmatpush1.bf16.msra.mxu0 %v2845
        %4236 = vmatprep.subr.bf16.mxu0 %v2850
        %4237 = vmatpush1.bf16.msra.mxu0 %v2849
        %4238 = vmatprep.subr.bf16.mxu0 %v2854
        %4239 = vmatpush1.bf16.msra.mxu0 %v2853
        %4240 = vmatprep.subr.bf16.mxu0 %v2858
        %4241 = vmatpush1.bf16.msra.mxu0 %v2857
        %4242 = vmatprep.subr.bf16.mxu0 %v2862
        %4243 = vmatpush1.bf16.msra.mxu0 %v2861
        %4244 = vmatprep.mubr.bf16.mxu0 %v1564
        %4245 = vmatmul.mubr.bf16.gmra.mrb[0].mxu0 %v1563
        %v4246 = vpop.f32.mrb[0].mxu0
        %v4247 = vadd.f32 %v4054, %v4246
        %v4248 = vpop.f32.mrb[0].mxu0
        %v4249 = vadd.f32 %v4056, %v4248
        %v4250 = vpop.f32.mrb[0].mxu0
        %v4251 = vadd.f32 %v4058, %v4250
        %v4252 = vpop.f32.mrb[0].mxu0
        %v4253 = vadd.f32 %v4060, %v4252
        %4254 = vmatprep.mubr.bf16.mxu0 %v1572
        %4255 = vmatmul.mubr.bf16.gmra.mrb[0].mxu0 %v1571
        %v4256 = vpop.f32.mrb[0].mxu0
        %v4257 = vadd.f32 %v4064, %v4256
        %v4258 = vpop.f32.mrb[0].mxu0
        %v4259 = vadd.f32 %v4066, %v4258
        %v4260 = vpop.f32.mrb[0].mxu0
        %v4261 = vadd.f32 %v4068, %v4260
        %v4262 = vpop.f32.mrb[0].mxu0
        %v4263 = vadd.f32 %v4070, %v4262
        %4264 = vmatprep.mubr.bf16.mxu0 %v1580
        %4265 = vmatmul.mubr.bf16.gmra.mrb[0].mxu0 %v1579
        %v4266 = vpop.f32.mrb[0].mxu0
        %v4267 = vadd.f32 %v4074, %v4266
        %v4268 = vpop.f32.mrb[0].mxu0
        %v4269 = vadd.f32 %v4076, %v4268
        %v4270 = vpop.f32.mrb[0].mxu0
        %v4271 = vadd.f32 %v4078, %v4270
        %v4272 = vpop.f32.mrb[0].mxu0
        %v4273 = vadd.f32 %v4080, %v4272
        %4274 = vmatprep.mubr.bf16.mxu0 %v1588
        %4275 = vmatmul.mubr.bf16.gmra.mrb[0].mxu0 %v1587
        %v4276 = vpop.f32.mrb[0].mxu0
        %v4277 = vadd.f32 %v4084, %v4276
        %v4278 = vpop.f32.mrb[0].mxu0
        %v4279 = vadd.f32 %v4086, %v4278
        %v4280 = vpop.f32.mrb[0].mxu0
        %v4281 = vadd.f32 %v4088, %v4280
        %v4282 = vpop.f32.mrb[0].mxu0
        %v4283 = vadd.f32 %v4090, %v4282
        %4284 = vmatprep.mubr.bf16.mxu0 %v1596
        %4285 = vmatmul.mubr.bf16.gmra.mrb[0].mxu0 %v1595
        %v4286 = vpop.f32.mrb[0].mxu0
        %v4287 = vadd.f32 %v4094, %v4286
        %v4288 = vpop.f32.mrb[0].mxu0
        %v4289 = vadd.f32 %v4096, %v4288
        %v4290 = vpop.f32.mrb[0].mxu0
        %v4291 = vadd.f32 %v4098, %v4290
        %v4292 = vpop.f32.mrb[0].mxu0
        %v4293 = vadd.f32 %v4100, %v4292
        %4294 = vmatprep.mubr.bf16.mxu0 %v1604
        %4295 = vmatmul.mubr.bf16.gmra.mrb[0].mxu0 %v1603
        %v4296 = vpop.f32.mrb[0].mxu0
        %v4297 = vadd.f32 %v4104, %v4296
        %v4298 = vpop.f32.mrb[0].mxu0
        %v4299 = vadd.f32 %v4106, %v4298
        %v4300 = vpop.f32.mrb[0].mxu0
        %v4301 = vadd.f32 %v4108, %v4300
        %v4302 = vpop.f32.mrb[0].mxu0
        %v4303 = vadd.f32 %v4110, %v4302
        %4304 = vmatprep.mubr.bf16.mxu0 %v1612
        %4305 = vmatmul.mubr.bf16.gmra.mrb[0].mxu0 %v1611
        %v4306 = vpop.f32.mrb[0].mxu0
        %v4307 = vadd.f32 %v4114, %v4306
        %v4308 = vpop.f32.mrb[0].mxu0
        %v4309 = vadd.f32 %v4116, %v4308
        %v4310 = vpop.f32.mrb[0].mxu0
        %v4311 = vadd.f32 %v4118, %v4310
        %v4312 = vpop.f32.mrb[0].mxu0
        %v4313 = vadd.f32 %v4120, %v4312
        %4314 = vmatprep.mubr.bf16.mxu0 %v1620
        %4315 = vmatmul.mubr.bf16.gmra.mrb[0].mxu0 %v1619
        %v4316 = vpop.f32.mrb[0].mxu0
        %v4317 = vadd.f32 %v4124, %v4316
        %v4318 = vpop.f32.mrb[0].mxu0
        %v4319 = vadd.f32 %v4126, %v4318
        %v4320 = vpop.f32.mrb[0].mxu0
        %v4321 = vadd.f32 %v4128, %v4320
        %v4322 = vpop.f32.mrb[0].mxu0
        %v4323 = vadd.f32 %v4130, %v4322
        %4324 = vmatprep.mubr.bf16.mxu0 %v1628
        %4325 = vmatmul.mubr.bf16.gmra.mrb[0].mxu0 %v1627
        %v4326 = vpop.f32.mrb[0].mxu0
        %v4327 = vadd.f32 %v4134, %v4326
        %v4328 = vpop.f32.mrb[0].mxu0
        %v4329 = vadd.f32 %v4136, %v4328
        %v4330 = vpop.f32.mrb[0].mxu0
        %v4331 = vadd.f32 %v4138, %v4330
        %v4332 = vpop.f32.mrb[0].mxu0
        %v4333 = vadd.f32 %v4140, %v4332
        %4334 = vmatprep.mubr.bf16.mxu0 %v1636
        %4335 = vmatmul.mubr.bf16.gmra.mrb[0].mxu0 %v1635
        %v4336 = vpop.f32.mrb[0].mxu0
        %v4337 = vadd.f32 %v4144, %v4336
        %v4338 = vpop.f32.mrb[0].mxu0
        %v4339 = vadd.f32 %v4146, %v4338
        %v4340 = vpop.f32.mrb[0].mxu0
        %v4341 = vadd.f32 %v4148, %v4340
        %v4342 = vpop.f32.mrb[0].mxu0
        %v4343 = vadd.f32 %v4150, %v4342
        %4344 = vmatprep.mubr.bf16.mxu0 %v1644
        %4345 = vmatmul.mubr.bf16.gmra.mrb[0].mxu0 %v1643
        %v4346 = vpop.f32.mrb[0].mxu0
        %v4347 = vadd.f32 %v4154, %v4346
        %v4348 = vpop.f32.mrb[0].mxu0
        %v4349 = vadd.f32 %v4156, %v4348
        %v4350 = vpop.f32.mrb[0].mxu0
        %v4351 = vadd.f32 %v4158, %v4350
        %v4352 = vpop.f32.mrb[0].mxu0
        %v4353 = vadd.f32 %v4160, %v4352
        %4354 = vmatprep.mubr.bf16.mxu0 %v1652
        %4355 = vmatmul.mubr.bf16.gmra.mrb[0].mxu0 %v1651
        %v4356 = vpop.f32.mrb[0].mxu0
        %v4357 = vadd.f32 %v4164, %v4356
        %v4358 = vpop.f32.mrb[0].mxu0
        %v4359 = vadd.f32 %v4166, %v4358
        %v4360 = vpop.f32.mrb[0].mxu0
        %v4361 = vadd.f32 %v4168, %v4360
        %v4362 = vpop.f32.mrb[0].mxu0
        %v4363 = vadd.f32 %v4170, %v4362
        %4364 = vmatprep.mubr.bf16.mxu0 %v1660
        %4365 = vmatmul.mubr.bf16.gmra.mrb[0].mxu0 %v1659
        %v4366 = vpop.f32.mrb[0].mxu0
        %v4367 = vadd.f32 %v4174, %v4366
        %v4368 = vpop.f32.mrb[0].mxu0
        %v4369 = vadd.f32 %v4176, %v4368
        %v4370 = vpop.f32.mrb[0].mxu0
        %v4371 = vadd.f32 %v4178, %v4370
        %v4372 = vpop.f32.mrb[0].mxu0
        %v4373 = vadd.f32 %v4180, %v4372
        %4374 = vmatprep.mubr.bf16.mxu0 %v1668
        %4375 = vmatmul.mubr.bf16.gmra.mrb[0].mxu0 %v1667
        %v4376 = vpop.f32.mrb[0].mxu0
        %v4377 = vadd.f32 %v4184, %v4376
        %v4378 = vpop.f32.mrb[0].mxu0
        %v4379 = vadd.f32 %v4186, %v4378
        %v4380 = vpop.f32.mrb[0].mxu0
        %v4381 = vadd.f32 %v4188, %v4380
        %v4382 = vpop.f32.mrb[0].mxu0
        %v4383 = vadd.f32 %v4190, %v4382
        %4384 = vmatprep.mubr.bf16.mxu0 %v1676
        %4385 = vmatmul.mubr.bf16.gmra.mrb[0].mxu0 %v1675
        %v4386 = vpop.f32.mrb[0].mxu0
        %v4387 = vadd.f32 %v4194, %v4386
        %v4388 = vpop.f32.mrb[0].mxu0
        %v4389 = vadd.f32 %v4196, %v4388
        %v4390 = vpop.f32.mrb[0].mxu0
        %v4391 = vadd.f32 %v4198, %v4390
        %v4392 = vpop.f32.mrb[0].mxu0
        %v4393 = vadd.f32 %v4200, %v4392
        %4394 = vmatprep.mubr.bf16.mxu0 %v1684
        %4395 = vmatmul.mubr.bf16.gmra.mrb[0].mxu0 %v1683
        %v4396 = vpop.f32.mrb[0].mxu0
        %v4397 = vadd.f32 %v4204, %v4396
        %v4398 = vpop.f32.mrb[0].mxu0
        %v4399 = vadd.f32 %v4206, %v4398
        %v4400 = vpop.f32.mrb[0].mxu0
        %v4401 = vadd.f32 %v4208, %v4400
        %v4402 = vpop.f32.mrb[0].mxu0
        %v4403 = vadd.f32 %v4210, %v4402
        %4404 = vdwg.mxu0
        %4405 = vmatprep.subr.bf16.mxu0 %v2866
        %4406 = vmatpush1.bf16.msra.mxu0 %v2865
        %4407 = vmatprep.subr.bf16.mxu0 %v2870
        %4408 = vmatpush1.bf16.msra.mxu0 %v2869
        %4409 = vmatprep.subr.bf16.mxu0 %v2874
        %4410 = vmatpush1.bf16.msra.mxu0 %v2873
        %4411 = vmatprep.subr.bf16.mxu0 %v2878
        %4412 = vmatpush1.bf16.msra.mxu0 %v2877
        %4413 = vmatprep.subr.bf16.mxu0 %v2882
        %4414 = vmatpush1.bf16.msra.mxu0 %v2881
        %4415 = vmatprep.subr.bf16.mxu0 %v2886
        %4416 = vmatpush1.bf16.msra.mxu0 %v2885
        %4417 = vmatprep.subr.bf16.mxu0 %v2890
        %4418 = vmatpush1.bf16.msra.mxu0 %v2889
        %4419 = vmatprep.subr.bf16.mxu0 %v2894
        %4420 = vmatpush1.bf16.msra.mxu0 %v2893
        %4421 = vmatprep.subr.bf16.mxu0 %v2898
        %4422 = vmatpush1.bf16.msra.mxu0 %v2897
        %4423 = vmatprep.subr.bf16.mxu0 %v2902
        %4424 = vmatpush1.bf16.msra.mxu0 %v2901
        %4425 = vmatprep.subr.bf16.mxu0 %v2906
        %4426 = vmatpush1.bf16.msra.mxu0 %v2905
        %4427 = vmatprep.subr.bf16.mxu0 %v2910
        %4428 = vmatpush1.bf16.msra.mxu0 %v2909
        %4429 = vmatprep.subr.bf16.mxu0 %v2914
        %4430 = vmatpush1.bf16.msra.mxu0 %v2913
        %4431 = vmatprep.subr.bf16.mxu0 %v2918
        %4432 = vmatpush1.bf16.msra.mxu0 %v2917
        %4433 = vmatprep.subr.bf16.mxu0 %v2922
        %4434 = vmatpush1.bf16.msra.mxu0 %v2921
        %4435 = vmatprep.subr.bf16.mxu0 %v2926
        %4436 = vmatpush1.bf16.msra.mxu0 %v2925
        %4437 = vmatprep.mubr.bf16.mxu0 %v1566
        %4438 = vmatmul.mubr.bf16.gmra.mrb[0].mxu0 %v1565
        %v4439 = vpop.f32.mrb[0].mxu0
        %v4440 = vadd.f32 %v4247, %v4439
        %v4441 = vpop.f32.mrb[0].mxu0
        %v4442 = vadd.f32 %v4249, %v4441
        %v4443 = vpop.f32.mrb[0].mxu0
        %v4444 = vadd.f32 %v4251, %v4443
        %v4445 = vpop.f32.mrb[0].mxu0
        %v4446 = vadd.f32 %v4253, %v4445
        %4447 = vmatprep.mubr.bf16.mxu0 %v1574
        %4448 = vmatmul.mubr.bf16.gmra.mrb[0].mxu0 %v1573
        %v4449 = vpop.f32.mrb[0].mxu0
        %v4450 = vadd.f32 %v4257, %v4449
        %v4451 = vpop.f32.mrb[0].mxu0
        %v4452 = vadd.f32 %v4259, %v4451
        %v4453 = vpop.f32.mrb[0].mxu0
        %v4454 = vadd.f32 %v4261, %v4453
        %v4455 = vpop.f32.mrb[0].mxu0
        %v4456 = vadd.f32 %v4263, %v4455
        %4457 = vmatprep.mubr.bf16.mxu0 %v1582
        %4458 = vmatmul.mubr.bf16.gmra.mrb[0].mxu0 %v1581
        %v4459 = vpop.f32.mrb[0].mxu0
        %v4460 = vadd.f32 %v4267, %v4459
        %v4461 = vpop.f32.mrb[0].mxu0
        %v4462 = vadd.f32 %v4269, %v4461
        %v4463 = vpop.f32.mrb[0].mxu0
        %v4464 = vadd.f32 %v4271, %v4463
        %v4465 = vpop.f32.mrb[0].mxu0
        %v4466 = vadd.f32 %v4273, %v4465
        %4467 = vmatprep.mubr.bf16.mxu0 %v1590
        %4468 = vmatmul.mubr.bf16.gmra.mrb[0].mxu0 %v1589
        %v4469 = vpop.f32.mrb[0].mxu0
        %v4470 = vadd.f32 %v4277, %v4469
        %v4471 = vpop.f32.mrb[0].mxu0
        %v4472 = vadd.f32 %v4279, %v4471
        %v4473 = vpop.f32.mrb[0].mxu0
        %v4474 = vadd.f32 %v4281, %v4473
        %v4475 = vpop.f32.mrb[0].mxu0
        %v4476 = vadd.f32 %v4283, %v4475
        %4477 = vmatprep.mubr.bf16.mxu0 %v1598
        %4478 = vmatmul.mubr.bf16.gmra.mrb[0].mxu0 %v1597
        %v4479 = vpop.f32.mrb[0].mxu0
        %v4480 = vadd.f32 %v4287, %v4479
        %v4481 = vpop.f32.mrb[0].mxu0
        %v4482 = vadd.f32 %v4289, %v4481
        %v4483 = vpop.f32.mrb[0].mxu0
        %v4484 = vadd.f32 %v4291, %v4483
        %v4485 = vpop.f32.mrb[0].mxu0
        %v4486 = vadd.f32 %v4293, %v4485
        %4487 = vmatprep.mubr.bf16.mxu0 %v1606
        %4488 = vmatmul.mubr.bf16.gmra.mrb[0].mxu0 %v1605
        %v4489 = vpop.f32.mrb[0].mxu0
        %v4490 = vadd.f32 %v4297, %v4489
        %v4491 = vpop.f32.mrb[0].mxu0
        %v4492 = vadd.f32 %v4299, %v4491
        %v4493 = vpop.f32.mrb[0].mxu0
        %v4494 = vadd.f32 %v4301, %v4493
        %v4495 = vpop.f32.mrb[0].mxu0
        %v4496 = vadd.f32 %v4303, %v4495
        %4497 = vmatprep.mubr.bf16.mxu0 %v1614
        %4498 = vmatmul.mubr.bf16.gmra.mrb[0].mxu0 %v1613
        %v4499 = vpop.f32.mrb[0].mxu0
        %v4500 = vadd.f32 %v4307, %v4499
        %v4501 = vpop.f32.mrb[0].mxu0
        %v4502 = vadd.f32 %v4309, %v4501
        %v4503 = vpop.f32.mrb[0].mxu0
        %v4504 = vadd.f32 %v4311, %v4503
        %v4505 = vpop.f32.mrb[0].mxu0
        %v4506 = vadd.f32 %v4313, %v4505
        %4507 = vmatprep.mubr.bf16.mxu0 %v1622
        %4508 = vmatmul.mubr.bf16.gmra.mrb[0].mxu0 %v1621
        %v4509 = vpop.f32.mrb[0].mxu0
        %v4510 = vadd.f32 %v4317, %v4509
        %v4511 = vpop.f32.mrb[0].mxu0
        %v4512 = vadd.f32 %v4319, %v4511
        %v4513 = vpop.f32.mrb[0].mxu0
        %v4514 = vadd.f32 %v4321, %v4513
        %v4515 = vpop.f32.mrb[0].mxu0
        %v4516 = vadd.f32 %v4323, %v4515
        %4517 = vmatprep.mubr.bf16.mxu0 %v1630
        %4518 = vmatmul.mubr.bf16.gmra.mrb[0].mxu0 %v1629
        %v4519 = vpop.f32.mrb[0].mxu0
        %v4520 = vadd.f32 %v4327, %v4519
        %v4521 = vpop.f32.mrb[0].mxu0
        %v4522 = vadd.f32 %v4329, %v4521
        %v4523 = vpop.f32.mrb[0].mxu0
        %v4524 = vadd.f32 %v4331, %v4523
        %v4525 = vpop.f32.mrb[0].mxu0
        %v4526 = vadd.f32 %v4333, %v4525
        %4527 = vmatprep.mubr.bf16.mxu0 %v1638
        %4528 = vmatmul.mubr.bf16.gmra.mrb[0].mxu0 %v1637
        %v4529 = vpop.f32.mrb[0].mxu0
        %v4530 = vadd.f32 %v4337, %v4529
        %v4531 = vpop.f32.mrb[0].mxu0
        %v4532 = vadd.f32 %v4339, %v4531
        %v4533 = vpop.f32.mrb[0].mxu0
        %v4534 = vadd.f32 %v4341, %v4533
        %v4535 = vpop.f32.mrb[0].mxu0
        %v4536 = vadd.f32 %v4343, %v4535
        %4537 = vmatprep.mubr.bf16.mxu0 %v1646
        %4538 = vmatmul.mubr.bf16.gmra.mrb[0].mxu0 %v1645
        %v4539 = vpop.f32.mrb[0].mxu0
        %v4540 = vadd.f32 %v4347, %v4539
        %v4541 = vpop.f32.mrb[0].mxu0
        %v4542 = vadd.f32 %v4349, %v4541
        %v4543 = vpop.f32.mrb[0].mxu0
        %v4544 = vadd.f32 %v4351, %v4543
        %v4545 = vpop.f32.mrb[0].mxu0
        %v4546 = vadd.f32 %v4353, %v4545
        %4547 = vmatprep.mubr.bf16.mxu0 %v1654
        %4548 = vmatmul.mubr.bf16.gmra.mrb[0].mxu0 %v1653
        %v4549 = vpop.f32.mrb[0].mxu0
        %v4550 = vadd.f32 %v4357, %v4549
        %v4551 = vpop.f32.mrb[0].mxu0
        %v4552 = vadd.f32 %v4359, %v4551
        %v4553 = vpop.f32.mrb[0].mxu0
        %v4554 = vadd.f32 %v4361, %v4553
        %v4555 = vpop.f32.mrb[0].mxu0
        %v4556 = vadd.f32 %v4363, %v4555
        %4557 = vmatprep.mubr.bf16.mxu0 %v1662
        %4558 = vmatmul.mubr.bf16.gmra.mrb[0].mxu0 %v1661
        %v4559 = vpop.f32.mrb[0].mxu0
        %v4560 = vadd.f32 %v4367, %v4559
        %v4561 = vpop.f32.mrb[0].mxu0
        %v4562 = vadd.f32 %v4369, %v4561
        %v4563 = vpop.f32.mrb[0].mxu0
        %v4564 = vadd.f32 %v4371, %v4563
        %v4565 = vpop.f32.mrb[0].mxu0
        %v4566 = vadd.f32 %v4373, %v4565
        %4567 = vmatprep.mubr.bf16.mxu0 %v1670
        %4568 = vmatmul.mubr.bf16.gmra.mrb[0].mxu0 %v1669
        %v4569 = vpop.f32.mrb[0].mxu0
        %v4570 = vadd.f32 %v4377, %v4569
        %v4571 = vpop.f32.mrb[0].mxu0
        %v4572 = vadd.f32 %v4379, %v4571
        %v4573 = vpop.f32.mrb[0].mxu0
        %v4574 = vadd.f32 %v4381, %v4573
        %v4575 = vpop.f32.mrb[0].mxu0
        %v4576 = vadd.f32 %v4383, %v4575
        %4577 = vmatprep.mubr.bf16.mxu0 %v1678
        %4578 = vmatmul.mubr.bf16.gmra.mrb[0].mxu0 %v1677
        %v4579 = vpop.f32.mrb[0].mxu0
        %v4580 = vadd.f32 %v4387, %v4579
        %v4581 = vpop.f32.mrb[0].mxu0
        %v4582 = vadd.f32 %v4389, %v4581
        %v4583 = vpop.f32.mrb[0].mxu0
        %v4584 = vadd.f32 %v4391, %v4583
        %v4585 = vpop.f32.mrb[0].mxu0
        %v4586 = vadd.f32 %v4393, %v4585
        %4587 = vmatprep.mubr.bf16.mxu0 %v1686
        %4588 = vmatmul.mubr.bf16.gmra.mrb[0].mxu0 %v1685
        %v4589 = vpop.f32.mrb[0].mxu0
        %v4590 = vadd.f32 %v4397, %v4589
        %v4591 = vpop.f32.mrb[0].mxu0
        %v4592 = vadd.f32 %v4399, %v4591
        %v4593 = vpop.f32.mrb[0].mxu0
        %v4594 = vadd.f32 %v4401, %v4593
        %v4595 = vpop.f32.mrb[0].mxu0
        %v4596 = vadd.f32 %v4403, %v4595
        %4597 = vdwg.mxu0
        %4598 = vmatprep.subr.bf16.mxu0 %v2930
        %4599 = vmatpush1.bf16.msra.mxu0 %v2929
        %4600 = vmatprep.subr.bf16.mxu0 %v2934
        %4601 = vmatpush1.bf16.msra.mxu0 %v2933
        %4602 = vmatprep.subr.bf16.mxu0 %v2938
        %4603 = vmatpush1.bf16.msra.mxu0 %v2937
        %4604 = vmatprep.subr.bf16.mxu0 %v2942
        %4605 = vmatpush1.bf16.msra.mxu0 %v2941
        %4606 = vmatprep.subr.bf16.mxu0 %v2946
        %4607 = vmatpush1.bf16.msra.mxu0 %v2945
        %4608 = vmatprep.subr.bf16.mxu0 %v2950
        %4609 = vmatpush1.bf16.msra.mxu0 %v2949
        %4610 = vmatprep.subr.bf16.mxu0 %v2954
        %4611 = vmatpush1.bf16.msra.mxu0 %v2953
        %4612 = vmatprep.subr.bf16.mxu0 %v2958
        %4613 = vmatpush1.bf16.msra.mxu0 %v2957
        %4614 = vmatprep.subr.bf16.mxu0 %v2962
        %4615 = vmatpush1.bf16.msra.mxu0 %v2961
        %4616 = vmatprep.subr.bf16.mxu0 %v2966
        %4617 = vmatpush1.bf16.msra.mxu0 %v2965
        %4618 = vmatprep.subr.bf16.mxu0 %v2970
        %4619 = vmatpush1.bf16.msra.mxu0 %v2969
        %4620 = vmatprep.subr.bf16.mxu0 %v2974
        %4621 = vmatpush1.bf16.msra.mxu0 %v2973
        %4622 = vmatprep.subr.bf16.mxu0 %v2978
        %4623 = vmatpush1.bf16.msra.mxu0 %v2977
        %4624 = vmatprep.subr.bf16.mxu0 %v2982
        %4625 = vmatpush1.bf16.msra.mxu0 %v2981
        %4626 = vmatprep.subr.bf16.mxu0 %v2986
        %4627 = vmatpush1.bf16.msra.mxu0 %v2985
        %4628 = vmatprep.subr.bf16.mxu0 %v2990
        %4629 = vmatpush1.bf16.msra.mxu0 %v2989
        %4630 = vmatprep.mubr.bf16.mxu0 %v1568
        %4631 = vmatmul.mubr.bf16.gmra.mrb[0].mxu0 %v1567
        %v4632 = vpop.f32.mrb[0].mxu0
        %v4633 = vadd.f32 %v4440, %v4632
        %v4634 = vpop.f32.mrb[0].mxu0
        %v4635 = vadd.f32 %v4442, %v4634
        %v4636 = vpop.f32.mrb[0].mxu0
        %v4637 = vadd.f32 %v4444, %v4636
        %v4638 = vpop.f32.mrb[0].mxu0
        %v4639 = vadd.f32 %v4446, %v4638
        %4640 = vmatprep.mubr.bf16.mxu0 %v1576
        %4641 = vmatmul.mubr.bf16.gmra.mrb[0].mxu0 %v1575
        %v4642 = vpop.f32.mrb[0].mxu0
        %v4643 = vadd.f32 %v4450, %v4642
        %v4644 = vpop.f32.mrb[0].mxu0
        %v4645 = vadd.f32 %v4452, %v4644
        %v4646 = vpop.f32.mrb[0].mxu0
        %v4647 = vadd.f32 %v4454, %v4646
        %v4648 = vpop.f32.mrb[0].mxu0
        %v4649 = vadd.f32 %v4456, %v4648
        %4650 = vmatprep.mubr.bf16.mxu0 %v1584
        %4651 = vmatmul.mubr.bf16.gmra.mrb[0].mxu0 %v1583
        %v4652 = vpop.f32.mrb[0].mxu0
        %v4653 = vadd.f32 %v4460, %v4652
        %v4654 = vpop.f32.mrb[0].mxu0
        %v4655 = vadd.f32 %v4462, %v4654
        %v4656 = vpop.f32.mrb[0].mxu0
        %v4657 = vadd.f32 %v4464, %v4656
        %v4658 = vpop.f32.mrb[0].mxu0
        %v4659 = vadd.f32 %v4466, %v4658
        %4660 = vmatprep.mubr.bf16.mxu0 %v1592
        %4661 = vmatmul.mubr.bf16.gmra.mrb[0].mxu0 %v1591
        %v4662 = vpop.f32.mrb[0].mxu0
        %v4663 = vadd.f32 %v4470, %v4662
        %v4664 = vpop.f32.mrb[0].mxu0
        %v4665 = vadd.f32 %v4472, %v4664
        %v4666 = vpop.f32.mrb[0].mxu0
        %v4667 = vadd.f32 %v4474, %v4666
        %v4668 = vpop.f32.mrb[0].mxu0
        %v4669 = vadd.f32 %v4476, %v4668
        %4670 = vmatprep.mubr.bf16.mxu0 %v1600
        %4671 = vmatmul.mubr.bf16.gmra.mrb[0].mxu0 %v1599
        %v4672 = vpop.f32.mrb[0].mxu0
        %v4673 = vadd.f32 %v4480, %v4672
        %v4674 = vpop.f32.mrb[0].mxu0
        %v4675 = vadd.f32 %v4482, %v4674
        %v4676 = vpop.f32.mrb[0].mxu0
        %v4677 = vadd.f32 %v4484, %v4676
        %v4678 = vpop.f32.mrb[0].mxu0
        %v4679 = vadd.f32 %v4486, %v4678
        %4680 = vmatprep.mubr.bf16.mxu0 %v1608
        %4681 = vmatmul.mubr.bf16.gmra.mrb[0].mxu0 %v1607
        %v4682 = vpop.f32.mrb[0].mxu0
        %v4683 = vadd.f32 %v4490, %v4682
        %v4684 = vpop.f32.mrb[0].mxu0
        %v4685 = vadd.f32 %v4492, %v4684
        %v4686 = vpop.f32.mrb[0].mxu0
        %v4687 = vadd.f32 %v4494, %v4686
        %v4688 = vpop.f32.mrb[0].mxu0
        %v4689 = vadd.f32 %v4496, %v4688
        %4690 = vmatprep.mubr.bf16.mxu0 %v1616
        %4691 = vmatmul.mubr.bf16.gmra.mrb[0].mxu0 %v1615
        %v4692 = vpop.f32.mrb[0].mxu0
        %v4693 = vadd.f32 %v4500, %v4692
        %v4694 = vpop.f32.mrb[0].mxu0
        %v4695 = vadd.f32 %v4502, %v4694
        %v4696 = vpop.f32.mrb[0].mxu0
        %v4697 = vadd.f32 %v4504, %v4696
        %v4698 = vpop.f32.mrb[0].mxu0
        %v4699 = vadd.f32 %v4506, %v4698
        %4700 = vmatprep.mubr.bf16.mxu0 %v1624
        %4701 = vmatmul.mubr.bf16.gmra.mrb[0].mxu0 %v1623
        %v4702 = vpop.f32.mrb[0].mxu0
        %v4703 = vadd.f32 %v4510, %v4702
        %v4704 = vpop.f32.mrb[0].mxu0
        %v4705 = vadd.f32 %v4512, %v4704
        %v4706 = vpop.f32.mrb[0].mxu0
        %v4707 = vadd.f32 %v4514, %v4706
        %v4708 = vpop.f32.mrb[0].mxu0
        %v4709 = vadd.f32 %v4516, %v4708
        %4710 = vmatprep.mubr.bf16.mxu0 %v1632
        %4711 = vmatmul.mubr.bf16.gmra.mrb[0].mxu0 %v1631
        %v4712 = vpop.f32.mrb[0].mxu0
        %v4713 = vadd.f32 %v4520, %v4712
        %v4714 = vpop.f32.mrb[0].mxu0
        %v4715 = vadd.f32 %v4522, %v4714
        %v4716 = vpop.f32.mrb[0].mxu0
        %v4717 = vadd.f32 %v4524, %v4716
        %v4718 = vpop.f32.mrb[0].mxu0
        %v4719 = vadd.f32 %v4526, %v4718
        %4720 = vmatprep.mubr.bf16.mxu0 %v1640
        %4721 = vmatmul.mubr.bf16.gmra.mrb[0].mxu0 %v1639
        %v4722 = vpop.f32.mrb[0].mxu0
        %v4723 = vadd.f32 %v4530, %v4722
        %v4724 = vpop.f32.mrb[0].mxu0
        %v4725 = vadd.f32 %v4532, %v4724
        %v4726 = vpop.f32.mrb[0].mxu0
        %v4727 = vadd.f32 %v4534, %v4726
        %v4728 = vpop.f32.mrb[0].mxu0
        %v4729 = vadd.f32 %v4536, %v4728
        %4730 = vmatprep.mubr.bf16.mxu0 %v1648
        %4731 = vmatmul.mubr.bf16.gmra.mrb[0].mxu0 %v1647
        %v4732 = vpop.f32.mrb[0].mxu0
        %v4733 = vadd.f32 %v4540, %v4732
        %v4734 = vpop.f32.mrb[0].mxu0
        %v4735 = vadd.f32 %v4542, %v4734
        %v4736 = vpop.f32.mrb[0].mxu0
        %v4737 = vadd.f32 %v4544, %v4736
        %v4738 = vpop.f32.mrb[0].mxu0
        %v4739 = vadd.f32 %v4546, %v4738
        %4740 = vmatprep.mubr.bf16.mxu0 %v1656
        %4741 = vmatmul.mubr.bf16.gmra.mrb[0].mxu0 %v1655
        %v4742 = vpop.f32.mrb[0].mxu0
        %v4743 = vadd.f32 %v4550, %v4742
        %v4744 = vpop.f32.mrb[0].mxu0
        %v4745 = vadd.f32 %v4552, %v4744
        %v4746 = vpop.f32.mrb[0].mxu0
        %v4747 = vadd.f32 %v4554, %v4746
        %v4748 = vpop.f32.mrb[0].mxu0
        %v4749 = vadd.f32 %v4556, %v4748
        %4750 = vmatprep.mubr.bf16.mxu0 %v1664
        %4751 = vmatmul.mubr.bf16.gmra.mrb[0].mxu0 %v1663
        %v4752 = vpop.f32.mrb[0].mxu0
        %v4753 = vadd.f32 %v4560, %v4752
        %v4754 = vpop.f32.mrb[0].mxu0
        %v4755 = vadd.f32 %v4562, %v4754
        %v4756 = vpop.f32.mrb[0].mxu0
        %v4757 = vadd.f32 %v4564, %v4756
        %v4758 = vpop.f32.mrb[0].mxu0
        %v4759 = vadd.f32 %v4566, %v4758
        %4760 = vmatprep.mubr.bf16.mxu0 %v1672
        %4761 = vmatmul.mubr.bf16.gmra.mrb[0].mxu0 %v1671
        %v4762 = vpop.f32.mrb[0].mxu0
        %v4763 = vadd.f32 %v4570, %v4762
        %v4764 = vpop.f32.mrb[0].mxu0
        %v4765 = vadd.f32 %v4572, %v4764
        %v4766 = vpop.f32.mrb[0].mxu0
        %v4767 = vadd.f32 %v4574, %v4766
        %v4768 = vpop.f32.mrb[0].mxu0
        %v4769 = vadd.f32 %v4576, %v4768
        %4770 = vmatprep.mubr.bf16.mxu0 %v1680
        %4771 = vmatmul.mubr.bf16.gmra.mrb[0].mxu0 %v1679
        %v4772 = vpop.f32.mrb[0].mxu0
        %v4773 = vadd.f32 %v4580, %v4772
        %v4774 = vpop.f32.mrb[0].mxu0
        %v4775 = vadd.f32 %v4582, %v4774
        %v4776 = vpop.f32.mrb[0].mxu0
        %v4777 = vadd.f32 %v4584, %v4776
        %v4778 = vpop.f32.mrb[0].mxu0
        %v4779 = vadd.f32 %v4586, %v4778
        %4780 = vmatprep.mubr.bf16.mxu0 %v1688
        %4781 = vmatmul.mubr.bf16.gmra.mrb[0].mxu0 %v1687
        %v4782 = vpop.f32.mrb[0].mxu0
        %v4783 = vadd.f32 %v4590, %v4782
        %v4784 = vpop.f32.mrb[0].mxu0
        %v4785 = vadd.f32 %v4592, %v4784
        %v4786 = vpop.f32.mrb[0].mxu0
        %v4787 = vadd.f32 %v4594, %v4786
        %v4788 = vpop.f32.mrb[0].mxu0
        %v4789 = vadd.f32 %v4596, %v4788
        %4790 = vdwg.mxu0
        %v4791 = vmax.f32 %v3861, 0.0
        %v4792 = vmax.f32 %v3863, 0.0
        %v4793 = vmax.f32 %v4633, 0.0
        %v4794 = vmax.f32 %v4635, 0.0
        %v4795 = vmax.f32 %v3865, 0.0
        %v4796 = vmax.f32 %v3867, 0.0
        %v4797 = vmax.f32 %v4637, 0.0
        %v4798 = vmax.f32 %v4639, 0.0
        %v4799 = vmax.f32 %v3871, 0.0
        %v4800 = vmax.f32 %v3873, 0.0
        %v4801 = vmax.f32 %v4643, 0.0
        %v4802 = vmax.f32 %v4645, 0.0
        %v4803 = vmax.f32 %v3875, 0.0
        %v4804 = vmax.f32 %v3877, 0.0
        %v4805 = vmax.f32 %v4647, 0.0
        %v4806 = vmax.f32 %v4649, 0.0
        %v4807 = vmax.f32 %v3881, 0.0
        %v4808 = vmax.f32 %v3883, 0.0
        %v4809 = vmax.f32 %v4653, 0.0
        %v4810 = vmax.f32 %v4655, 0.0
        %v4811 = vmax.f32 %v3885, 0.0
        %v4812 = vmax.f32 %v3887, 0.0
        %v4813 = vmax.f32 %v4657, 0.0
        %v4814 = vmax.f32 %v4659, 0.0
        %v4815 = vmax.f32 %v3891, 0.0
        %v4816 = vmax.f32 %v3893, 0.0
        %v4817 = vmax.f32 %v4663, 0.0
        %v4818 = vmax.f32 %v4665, 0.0
        %v4819 = vmax.f32 %v3895, 0.0
        %v4820 = vmax.f32 %v3897, 0.0
        %v4821 = vmax.f32 %v4667, 0.0
        %v4822 = vmax.f32 %v4669, 0.0
        %v4823 = vmax.f32 %v3901, 0.0
        %v4824 = vmax.f32 %v3903, 0.0
        %v4825 = vmax.f32 %v4673, 0.0
        %v4826 = vmax.f32 %v4675, 0.0
        %v4827 = vmax.f32 %v3905, 0.0
        %v4828 = vmax.f32 %v3907, 0.0
        %v4829 = vmax.f32 %v4677, 0.0
        %v4830 = vmax.f32 %v4679, 0.0
        %v4831 = vmax.f32 %v3911, 0.0
        %v4832 = vmax.f32 %v3913, 0.0
        %v4833 = vmax.f32 %v4683, 0.0
        %v4834 = vmax.f32 %v4685, 0.0
        %v4835 = vmax.f32 %v3915, 0.0
        %v4836 = vmax.f32 %v3917, 0.0
        %v4837 = vmax.f32 %v4687, 0.0
        %v4838 = vmax.f32 %v4689, 0.0
        %v4839 = vmax.f32 %v3921, 0.0
        %v4840 = vmax.f32 %v3923, 0.0
        %v4841 = vmax.f32 %v4693, 0.0
        %v4842 = vmax.f32 %v4695, 0.0
        %v4843 = vmax.f32 %v3925, 0.0
        %v4844 = vmax.f32 %v3927, 0.0
        %v4845 = vmax.f32 %v4697, 0.0
        %v4846 = vmax.f32 %v4699, 0.0
        %v4847 = vmax.f32 %v3931, 0.0
        %v4848 = vmax.f32 %v3933, 0.0
        %v4849 = vmax.f32 %v4703, 0.0
        %v4850 = vmax.f32 %v4705, 0.0
        %v4851 = vmax.f32 %v3935, 0.0
        %v4852 = vmax.f32 %v3937, 0.0
        %v4853 = vmax.f32 %v4707, 0.0
        %v4854 = vmax.f32 %v4709, 0.0
        %v4855 = vmax.f32 %v3941, 0.0
        %v4856 = vmax.f32 %v3943, 0.0
        %v4857 = vmax.f32 %v4713, 0.0
        %v4858 = vmax.f32 %v4715, 0.0
        %v4859 = vmax.f32 %v3945, 0.0
        %v4860 = vmax.f32 %v3947, 0.0
        %v4861 = vmax.f32 %v4717, 0.0
        %v4862 = vmax.f32 %v4719, 0.0
        %v4863 = vmax.f32 %v3951, 0.0
        %v4864 = vmax.f32 %v3953, 0.0
        %v4865 = vmax.f32 %v4723, 0.0
        %v4866 = vmax.f32 %v4725, 0.0
        %v4867 = vmax.f32 %v3955, 0.0
        %v4868 = vmax.f32 %v3957, 0.0
        %v4869 = vmax.f32 %v4727, 0.0
        %v4870 = vmax.f32 %v4729, 0.0
        %v4871 = vmax.f32 %v3961, 0.0
        %v4872 = vmax.f32 %v3963, 0.0
        %v4873 = vmax.f32 %v4733, 0.0
        %v4874 = vmax.f32 %v4735, 0.0
        %v4875 = vmax.f32 %v3965, 0.0
        %v4876 = vmax.f32 %v3967, 0.0
        %v4877 = vmax.f32 %v4737, 0.0
        %v4878 = vmax.f32 %v4739, 0.0
        %v4879 = vmax.f32 %v3971, 0.0
        %v4880 = vmax.f32 %v3973, 0.0
        %v4881 = vmax.f32 %v4743, 0.0
        %v4882 = vmax.f32 %v4745, 0.0
        %v4883 = vmax.f32 %v3975, 0.0
        %v4884 = vmax.f32 %v3977, 0.0
        %v4885 = vmax.f32 %v4747, 0.0
        %v4886 = vmax.f32 %v4749, 0.0
        %v4887 = vmax.f32 %v3981, 0.0
        %v4888 = vmax.f32 %v3983, 0.0
        %v4889 = vmax.f32 %v4753, 0.0
        %v4890 = vmax.f32 %v4755, 0.0
        %v4891 = vmax.f32 %v3985, 0.0
        %v4892 = vmax.f32 %v3987, 0.0
        %v4893 = vmax.f32 %v4757, 0.0
        %v4894 = vmax.f32 %v4759, 0.0
        %v4895 = vmax.f32 %v3991, 0.0
        %v4896 = vmax.f32 %v3993, 0.0
        %v4897 = vmax.f32 %v4763, 0.0
        %v4898 = vmax.f32 %v4765, 0.0
        %v4899 = vmax.f32 %v3995, 0.0
        %v4900 = vmax.f32 %v3997, 0.0
        %v4901 = vmax.f32 %v4767, 0.0
        %v4902 = vmax.f32 %v4769, 0.0
        %v4903 = vmax.f32 %v4001, 0.0
        %v4904 = vmax.f32 %v4003, 0.0
        %v4905 = vmax.f32 %v4773, 0.0
        %v4906 = vmax.f32 %v4775, 0.0
        %v4907 = vmax.f32 %v4005, 0.0
        %v4908 = vmax.f32 %v4007, 0.0
        %v4909 = vmax.f32 %v4777, 0.0
        %v4910 = vmax.f32 %v4779, 0.0
        %v4911 = vmax.f32 %v4011, 0.0
        %v4912 = vmax.f32 %v4013, 0.0
        %v4913 = vmax.f32 %v4783, 0.0
        %v4914 = vmax.f32 %v4785, 0.0
        %v4915 = vmax.f32 %v4015, 0.0
        %v4916 = vmax.f32 %v4017, 0.0
        %v4917 = vmax.f32 %v4787, 0.0
        %v4918 = vmax.f32 %v4789, 0.0
        %v4919 = vpack.c.bf16 %v4795, %v4791
        %v4920 = vpack.c.bf16 %v4796, %v4792
        %v4921 = vpack.c.bf16 %v4797, %v4793
        %v4922 = vpack.c.bf16 %v4798, %v4794
        %v4923 = vpack.c.bf16 %v4803, %v4799
        %v4924 = vpack.c.bf16 %v4804, %v4800
        %v4925 = vpack.c.bf16 %v4805, %v4801
        %v4926 = vpack.c.bf16 %v4806, %v4802
        %v4927 = vpack.c.bf16 %v4811, %v4807
        %v4928 = vpack.c.bf16 %v4812, %v4808
        %v4929 = vpack.c.bf16 %v4813, %v4809
        %v4930 = vpack.c.bf16 %v4814, %v4810
        %v4931 = vpack.c.bf16 %v4819, %v4815
        %v4932 = vpack.c.bf16 %v4820, %v4816
        %v4933 = vpack.c.bf16 %v4821, %v4817
        %v4934 = vpack.c.bf16 %v4822, %v4818
        %v4935 = vpack.c.bf16 %v4827, %v4823
        %v4936 = vpack.c.bf16 %v4828, %v4824
        %v4937 = vpack.c.bf16 %v4829, %v4825
        %v4938 = vpack.c.bf16 %v4830, %v4826
        %v4939 = vpack.c.bf16 %v4835, %v4831
        %v4940 = vpack.c.bf16 %v4836, %v4832
        %v4941 = vpack.c.bf16 %v4837, %v4833
        %v4942 = vpack.c.bf16 %v4838, %v4834
        %v4943 = vpack.c.bf16 %v4843, %v4839
        %v4944 = vpack.c.bf16 %v4844, %v4840
        %v4945 = vpack.c.bf16 %v4845, %v4841
        %v4946 = vpack.c.bf16 %v4846, %v4842
        %v4947 = vpack.c.bf16 %v4851, %v4847
        %v4948 = vpack.c.bf16 %v4852, %v4848
        %v4949 = vpack.c.bf16 %v4853, %v4849
        %v4950 = vpack.c.bf16 %v4854, %v4850
        %v4951 = vpack.c.bf16 %v4859, %v4855
        %v4952 = vpack.c.bf16 %v4860, %v4856
        %v4953 = vpack.c.bf16 %v4861, %v4857
        %v4954 = vpack.c.bf16 %v4862, %v4858
        %v4955 = vpack.c.bf16 %v4867, %v4863
        %v4956 = vpack.c.bf16 %v4868, %v4864
        %v4957 = vpack.c.bf16 %v4869, %v4865
        %v4958 = vpack.c.bf16 %v4870, %v4866
        %v4959 = vpack.c.bf16 %v4875, %v4871
        %v4960 = vpack.c.bf16 %v4876, %v4872
        %v4961 = vpack.c.bf16 %v4877, %v4873
        %v4962 = vpack.c.bf16 %v4878, %v4874
        %v4963 = vpack.c.bf16 %v4883, %v4879
        %v4964 = vpack.c.bf16 %v4884, %v4880
        %v4965 = vpack.c.bf16 %v4885, %v4881
        %v4966 = vpack.c.bf16 %v4886, %v4882
        %v4967 = vpack.c.bf16 %v4891, %v4887
        %v4968 = vpack.c.bf16 %v4892, %v4888
        %v4969 = vpack.c.bf16 %v4893, %v4889
        %v4970 = vpack.c.bf16 %v4894, %v4890
        %v4971 = vpack.c.bf16 %v4899, %v4895
        %v4972 = vpack.c.bf16 %v4900, %v4896
        %v4973 = vpack.c.bf16 %v4901, %v4897
        %v4974 = vpack.c.bf16 %v4902, %v4898
        %v4975 = vpack.c.bf16 %v4907, %v4903
        %v4976 = vpack.c.bf16 %v4908, %v4904
        %v4977 = vpack.c.bf16 %v4909, %v4905
        %v4978 = vpack.c.bf16 %v4910, %v4906
        %v4979 = vpack.c.bf16 %v4915, %v4911
        %v4980 = vpack.c.bf16 %v4916, %v4912
        %v4981 = vpack.c.bf16 %v4917, %v4913
        %v4982 = vpack.c.bf16 %v4918, %v4914
        %v4983 = vld [vmem:[%s5] sm:$0xf]
        %v4984 = vld [vmem:[%s5 + $0x4] sm:$0xf]
        %v4985 = vld [vmem:[%s5 + $0x8] sm:$0xf]
        %v4986 = vld [vmem:[%s5 + $0xc] sm:$0xf]
        %v4987 = vld [vmem:[%s5 + $0x10] sm:$0xf]
        %v4988 = vld [vmem:[%s5 + $0x14] sm:$0xf]
        %v4989 = vld [vmem:[%s5 + $0x18] sm:$0xf]
        %v4990 = vld [vmem:[%s5 + $0x1c] sm:$0xf]
        %v4991 = vld [vmem:[%s5 + $0x20] sm:$0xf]
        %v4992 = vld [vmem:[%s5 + $0x24] sm:$0xf]
        %v4993 = vld [vmem:[%s5 + $0x28] sm:$0xf]
        %v4994 = vld [vmem:[%s5 + $0x2c] sm:$0xf]
        %v4995 = vld [vmem:[%s5 + $0x30] sm:$0xf]
        %v4996 = vld [vmem:[%s5 + $0x34] sm:$0xf]
        %v4997 = vld [vmem:[%s5 + $0x38] sm:$0xf]
        %v4998 = vld [vmem:[%s5 + $0x3c] sm:$0xf]
        %v4999 = vld [vmem:[%s5 + $0x40] sm:$0xf]
        %v5000 = vld [vmem:[%s5 + $0x44] sm:$0xf]
        %v5001 = vld [vmem:[%s5 + $0x48] sm:$0xf]
        %v5002 = vld [vmem:[%s5 + $0x4c] sm:$0xf]
        %v5003 = vld [vmem:[%s5 + $0x50] sm:$0xf]
        %v5004 = vld [vmem:[%s5 + $0x54] sm:$0xf]
        %v5005 = vld [vmem:[%s5 + $0x58] sm:$0xf]
        %v5006 = vld [vmem:[%s5 + $0x5c] sm:$0xf]
        %v5007 = vld [vmem:[%s5 + $0x60] sm:$0xf]
        %v5008 = vld [vmem:[%s5 + $0x64] sm:$0xf]
        %v5009 = vld [vmem:[%s5 + $0x68] sm:$0xf]
        %v5010 = vld [vmem:[%s5 + $0x6c] sm:$0xf]
        %v5011 = vld [vmem:[%s5 + $0x70] sm:$0xf]
        %v5012 = vld [vmem:[%s5 + $0x74] sm:$0xf]
        %v5013 = vld [vmem:[%s5 + $0x78] sm:$0xf]
        %v5014 = vld [vmem:[%s5 + $0x7c] sm:$0xf]
        %v5015 = vld [vmem:[%s5 + $0x80] sm:$0xf]
        %v5016 = vld [vmem:[%s5 + $0x84] sm:$0xf]
        %v5017 = vld [vmem:[%s5 + $0x88] sm:$0xf]
        %v5018 = vld [vmem:[%s5 + $0x8c] sm:$0xf]
        %v5019 = vld [vmem:[%s5 + $0x90] sm:$0xf]
        %v5020 = vld [vmem:[%s5 + $0x94] sm:$0xf]
        %v5021 = vld [vmem:[%s5 + $0x98] sm:$0xf]
        %v5022 = vld [vmem:[%s5 + $0x9c] sm:$0xf]
        %v5023 = vld [vmem:[%s5 + $0xa0] sm:$0xf]
        %v5024 = vld [vmem:[%s5 + $0xa4] sm:$0xf]
        %v5025 = vld [vmem:[%s5 + $0xa8] sm:$0xf]
        %v5026 = vld [vmem:[%s5 + $0xac] sm:$0xf]
        %v5027 = vld [vmem:[%s5 + $0xb0] sm:$0xf]
        %v5028 = vld [vmem:[%s5 + $0xb4] sm:$0xf]
        %v5029 = vld [vmem:[%s5 + $0xb8] sm:$0xf]
        %v5030 = vld [vmem:[%s5 + $0xbc] sm:$0xf]
        %v5031 = vld [vmem:[%s5 + $0xc0] sm:$0xf]
        %v5032 = vld [vmem:[%s5 + $0xc4] sm:$0xf]
        %v5033 = vld [vmem:[%s5 + $0xc8] sm:$0xf]
        %v5034 = vld [vmem:[%s5 + $0xcc] sm:$0xf]
        %v5035 = vld [vmem:[%s5 + $0xd0] sm:$0xf]
        %v5036 = vld [vmem:[%s5 + $0xd4] sm:$0xf]
        %v5037 = vld [vmem:[%s5 + $0xd8] sm:$0xf]
        %v5038 = vld [vmem:[%s5 + $0xdc] sm:$0xf]
        %v5039 = vld [vmem:[%s5 + $0xe0] sm:$0xf]
        %v5040 = vld [vmem:[%s5 + $0xe4] sm:$0xf]
        %v5041 = vld [vmem:[%s5 + $0xe8] sm:$0xf]
        %v5042 = vld [vmem:[%s5 + $0xec] sm:$0xf]
        %v5043 = vld [vmem:[%s5 + $0xf0] sm:$0xf]
        %v5044 = vld [vmem:[%s5 + $0xf4] sm:$0xf]
        %v5045 = vld [vmem:[%s5 + $0xf8] sm:$0xf]
        %v5046 = vld [vmem:[%s5 + $0xfc] sm:$0xf]
        %v5047 = vld [vmem:[%s6] sm:$0x1]
        %v5049 = vlaneseq
        %v5050 = vshrl.u32 %v5049, 7
        %v5051 = vsub.s32 0, %v5050
        %v5052 = vrot.slane %v5047, %v5051
        %v5118 = vunpack.c.l.b16 %v4983
        %v5119 = vunpack.c.l.b16 %v4984
        %v5120 = vunpack.c.l.b16 %v4985
        %v5121 = vunpack.c.l.b16 %v4986
        %v5122 = vunpack.c.l.b16 %v4987
        %v5123 = vunpack.c.l.b16 %v4988
        %v5124 = vunpack.c.l.b16 %v4989
        %v5125 = vunpack.c.l.b16 %v4990
        %v5126 = vunpack.c.l.b16 %v4991
        %v5127 = vunpack.c.l.b16 %v4992
        %v5128 = vunpack.c.l.b16 %v4993
        %v5129 = vunpack.c.l.b16 %v4994
        %v5130 = vunpack.c.l.b16 %v4995
        %v5131 = vunpack.c.l.b16 %v4996
        %v5132 = vunpack.c.l.b16 %v4997
        %v5133 = vunpack.c.l.b16 %v4998
        %v5134 = vunpack.c.l.b16 %v4999
        %v5135 = vunpack.c.l.b16 %v5000
        %v5136 = vunpack.c.l.b16 %v5001
        %v5137 = vunpack.c.l.b16 %v5002
        %v5138 = vunpack.c.l.b16 %v5003
        %v5139 = vunpack.c.l.b16 %v5004
        %v5140 = vunpack.c.l.b16 %v5005
        %v5141 = vunpack.c.l.b16 %v5006
        %v5142 = vunpack.c.l.b16 %v5007
        %v5143 = vunpack.c.l.b16 %v5008
        %v5144 = vunpack.c.l.b16 %v5009
        %v5145 = vunpack.c.l.b16 %v5010
        %v5146 = vunpack.c.l.b16 %v5011
        %v5147 = vunpack.c.l.b16 %v5012
        %v5148 = vunpack.c.l.b16 %v5013
        %v5149 = vunpack.c.l.b16 %v5014
        %v5150 = vunpack.c.l.b16 %v5015
        %v5151 = vunpack.c.l.b16 %v5016
        %v5152 = vunpack.c.l.b16 %v5017
        %v5153 = vunpack.c.l.b16 %v5018
        %v5154 = vunpack.c.l.b16 %v5019
        %v5155 = vunpack.c.l.b16 %v5020
        %v5156 = vunpack.c.l.b16 %v5021
        %v5157 = vunpack.c.l.b16 %v5022
        %v5158 = vunpack.c.l.b16 %v5023
        %v5159 = vunpack.c.l.b16 %v5024
        %v5160 = vunpack.c.l.b16 %v5025
        %v5161 = vunpack.c.l.b16 %v5026
        %v5162 = vunpack.c.l.b16 %v5027
        %v5163 = vunpack.c.l.b16 %v5028
        %v5164 = vunpack.c.l.b16 %v5029
        %v5165 = vunpack.c.l.b16 %v5030
        %v5166 = vunpack.c.l.b16 %v5031
        %v5167 = vunpack.c.l.b16 %v5032
        %v5168 = vunpack.c.l.b16 %v5033
        %v5169 = vunpack.c.l.b16 %v5034
        %v5170 = vunpack.c.l.b16 %v5035
        %v5171 = vunpack.c.l.b16 %v5036
        %v5172 = vunpack.c.l.b16 %v5037
        %v5173 = vunpack.c.l.b16 %v5038
        %v5174 = vunpack.c.l.b16 %v5039
        %v5175 = vunpack.c.l.b16 %v5040
        %v5176 = vunpack.c.l.b16 %v5041
        %v5177 = vunpack.c.l.b16 %v5042
        %v5178 = vunpack.c.l.b16 %v5043
        %v5179 = vunpack.c.l.b16 %v5044
        %v5180 = vunpack.c.l.b16 %v5045
        %v5181 = vunpack.c.l.b16 %v5046
        %v5182 = vpack.c.b16 %v5119, %v5118
        %v5183 = vpack.c.b16 %v5121, %v5120
        %v5184 = vpack.c.b16 %v5123, %v5122
        %v5185 = vpack.c.b16 %v5125, %v5124
        %v5186 = vpack.c.b16 %v5127, %v5126
        %v5187 = vpack.c.b16 %v5129, %v5128
        %v5188 = vpack.c.b16 %v5131, %v5130
        %v5189 = vpack.c.b16 %v5133, %v5132
        %v5190 = vpack.c.b16 %v5135, %v5134
        %v5191 = vpack.c.b16 %v5137, %v5136
        %v5192 = vpack.c.b16 %v5139, %v5138
        %v5193 = vpack.c.b16 %v5141, %v5140
        %v5194 = vpack.c.b16 %v5143, %v5142
        %v5195 = vpack.c.b16 %v5145, %v5144
        %v5196 = vpack.c.b16 %v5147, %v5146
        %v5197 = vpack.c.b16 %v5149, %v5148
        %v5198 = vpack.c.b16 %v5151, %v5150
        %v5199 = vpack.c.b16 %v5153, %v5152
        %v5200 = vpack.c.b16 %v5155, %v5154
        %v5201 = vpack.c.b16 %v5157, %v5156
        %v5202 = vpack.c.b16 %v5159, %v5158
        %v5203 = vpack.c.b16 %v5161, %v5160
        %v5204 = vpack.c.b16 %v5163, %v5162
        %v5205 = vpack.c.b16 %v5165, %v5164
        %v5206 = vpack.c.b16 %v5167, %v5166
        %v5207 = vpack.c.b16 %v5169, %v5168
        %v5208 = vpack.c.b16 %v5171, %v5170
        %v5209 = vpack.c.b16 %v5173, %v5172
        %v5210 = vpack.c.b16 %v5175, %v5174
        %v5211 = vpack.c.b16 %v5177, %v5176
        %v5212 = vpack.c.b16 %v5179, %v5178
        %v5213 = vpack.c.b16 %v5181, %v5180
        %5246 = vmatprep.subr.bf16.mxu0 0
        %5247 = vmatpush1.bf16.msra.mxu0 %v5182
        %5248 = vmatprep.subr.bf16.mxu0 0
        %5249 = vmatpush1.bf16.msra.mxu0 %v5183
        %5250 = vmatprep.subr.bf16.mxu0 0
        %5251 = vmatpush1.bf16.msra.mxu0 %v5184
        %5252 = vmatprep.subr.bf16.mxu0 0
        %5253 = vmatpush1.bf16.msra.mxu0 %v5185
        %5254 = vmatprep.subr.bf16.mxu0 0
        %5255 = vmatpush1.bf16.msra.mxu0 %v5186
        %5256 = vmatprep.subr.bf16.mxu0 0
        %5257 = vmatpush1.bf16.msra.mxu0 %v5187
        %5258 = vmatprep.subr.bf16.mxu0 0
        %5259 = vmatpush1.bf16.msra.mxu0 %v5188
        %5260 = vmatprep.subr.bf16.mxu0 0
        %5261 = vmatpush1.bf16.msra.mxu0 %v5189
        %5262 = vmatprep.subr.bf16.mxu0 0
        %5263 = vmatpush1.bf16.msra.mxu0 %v5190
        %5264 = vmatprep.subr.bf16.mxu0 0
        %5265 = vmatpush1.bf16.msra.mxu0 %v5191
        %5266 = vmatprep.subr.bf16.mxu0 0
        %5267 = vmatpush1.bf16.msra.mxu0 %v5192
        %5268 = vmatprep.subr.bf16.mxu0 0
        %5269 = vmatpush1.bf16.msra.mxu0 %v5193
        %5270 = vmatprep.subr.bf16.mxu0 0
        %5271 = vmatpush1.bf16.msra.mxu0 %v5194
        %5272 = vmatprep.subr.bf16.mxu0 0
        %5273 = vmatpush1.bf16.msra.mxu0 %v5195
        %5274 = vmatprep.subr.bf16.mxu0 0
        %5275 = vmatpush1.bf16.msra.mxu0 %v5196
        %5276 = vmatprep.subr.bf16.mxu0 0
        %5277 = vmatpush1.bf16.msra.mxu0 %v5197
        %5278 = vmatprep.mubr.bf16.mxu0 %v4920
        %5279 = vmatmul.mubr.bf16.gmra.mrb[0].mxu0 %v4919
        %v5280 = vpop.f32.mrb[0].mxu0
        %v5281 = vadd.f32 %v5052, %v5280
        %v5282 = vpop.f32.mrb[0].mxu0
        %v5283 = vpop.f32.mrb[0].mxu0
        %v5284 = vadd.f32 %v5052, %v5283
        %v5285 = vpop.f32.mrb[0].mxu0
        %5286 = vmatprep.mubr.bf16.mxu0 %v4924
        %5287 = vmatmul.mubr.bf16.gmra.mrb[0].mxu0 %v4923
        %v5288 = vpop.f32.mrb[0].mxu0
        %v5289 = vadd.f32 %v5052, %v5288
        %v5290 = vpop.f32.mrb[0].mxu0
        %v5291 = vpop.f32.mrb[0].mxu0
        %v5292 = vadd.f32 %v5052, %v5291
        %v5293 = vpop.f32.mrb[0].mxu0
        %5294 = vmatprep.mubr.bf16.mxu0 %v4928
        %5295 = vmatmul.mubr.bf16.gmra.mrb[0].mxu0 %v4927
        %v5296 = vpop.f32.mrb[0].mxu0
        %v5297 = vadd.f32 %v5052, %v5296
        %v5298 = vpop.f32.mrb[0].mxu0
        %v5299 = vpop.f32.mrb[0].mxu0
        %v5300 = vadd.f32 %v5052, %v5299
        %v5301 = vpop.f32.mrb[0].mxu0
        %5302 = vmatprep.mubr.bf16.mxu0 %v4932
        %5303 = vmatmul.mubr.bf16.gmra.mrb[0].mxu0 %v4931
        %v5304 = vpop.f32.mrb[0].mxu0
        %v5305 = vadd.f32 %v5052, %v5304
        %v5306 = vpop.f32.mrb[0].mxu0
        %v5307 = vpop.f32.mrb[0].mxu0
        %v5308 = vadd.f32 %v5052, %v5307
        %v5309 = vpop.f32.mrb[0].mxu0
        %5310 = vmatprep.mubr.bf16.mxu0 %v4936
        %5311 = vmatmul.mubr.bf16.gmra.mrb[0].mxu0 %v4935
        %v5312 = vpop.f32.mrb[0].mxu0
        %v5313 = vadd.f32 %v5052, %v5312
        %v5314 = vpop.f32.mrb[0].mxu0
        %v5315 = vpop.f32.mrb[0].mxu0
        %v5316 = vadd.f32 %v5052, %v5315
        %v5317 = vpop.f32.mrb[0].mxu0
        %5318 = vmatprep.mubr.bf16.mxu0 %v4940
        %5319 = vmatmul.mubr.bf16.gmra.mrb[0].mxu0 %v4939
        %v5320 = vpop.f32.mrb[0].mxu0
        %v5321 = vadd.f32 %v5052, %v5320
        %v5322 = vpop.f32.mrb[0].mxu0
        %v5323 = vpop.f32.mrb[0].mxu0
        %v5324 = vadd.f32 %v5052, %v5323
        %v5325 = vpop.f32.mrb[0].mxu0
        %5326 = vmatprep.mubr.bf16.mxu0 %v4944
        %5327 = vmatmul.mubr.bf16.gmra.mrb[0].mxu0 %v4943
        %v5328 = vpop.f32.mrb[0].mxu0
        %v5329 = vadd.f32 %v5052, %v5328
        %v5330 = vpop.f32.mrb[0].mxu0
        %v5331 = vpop.f32.mrb[0].mxu0
        %v5332 = vadd.f32 %v5052, %v5331
        %v5333 = vpop.f32.mrb[0].mxu0
        %5334 = vmatprep.mubr.bf16.mxu0 %v4948
        %5335 = vmatmul.mubr.bf16.gmra.mrb[0].mxu0 %v4947
        %v5336 = vpop.f32.mrb[0].mxu0
        %v5337 = vadd.f32 %v5052, %v5336
        %v5338 = vpop.f32.mrb[0].mxu0
        %v5339 = vpop.f32.mrb[0].mxu0
        %v5340 = vadd.f32 %v5052, %v5339
        %v5341 = vpop.f32.mrb[0].mxu0
        %5342 = vmatprep.mubr.bf16.mxu0 %v4952
        %5343 = vmatmul.mubr.bf16.gmra.mrb[0].mxu0 %v4951
        %v5344 = vpop.f32.mrb[0].mxu0
        %v5345 = vadd.f32 %v5052, %v5344
        %v5346 = vpop.f32.mrb[0].mxu0
        %v5347 = vpop.f32.mrb[0].mxu0
        %v5348 = vadd.f32 %v5052, %v5347
        %v5349 = vpop.f32.mrb[0].mxu0
        %5350 = vmatprep.mubr.bf16.mxu0 %v4956
        %5351 = vmatmul.mubr.bf16.gmra.mrb[0].mxu0 %v4955
        %v5352 = vpop.f32.mrb[0].mxu0
        %v5353 = vadd.f32 %v5052, %v5352
        %v5354 = vpop.f32.mrb[0].mxu0
        %v5355 = vpop.f32.mrb[0].mxu0
        %v5356 = vadd.f32 %v5052, %v5355
        %v5357 = vpop.f32.mrb[0].mxu0
        %5358 = vmatprep.mubr.bf16.mxu0 %v4960
        %5359 = vmatmul.mubr.bf16.gmra.mrb[0].mxu0 %v4959
        %v5360 = vpop.f32.mrb[0].mxu0
        %v5361 = vadd.f32 %v5052, %v5360
        %v5362 = vpop.f32.mrb[0].mxu0
        %v5363 = vpop.f32.mrb[0].mxu0
        %v5364 = vadd.f32 %v5052, %v5363
        %v5365 = vpop.f32.mrb[0].mxu0
        %5366 = vmatprep.mubr.bf16.mxu0 %v4964
        %5367 = vmatmul.mubr.bf16.gmra.mrb[0].mxu0 %v4963
        %v5368 = vpop.f32.mrb[0].mxu0
        %v5369 = vadd.f32 %v5052, %v5368
        %v5370 = vpop.f32.mrb[0].mxu0
        %v5371 = vpop.f32.mrb[0].mxu0
        %v5372 = vadd.f32 %v5052, %v5371
        %v5373 = vpop.f32.mrb[0].mxu0
        %5374 = vmatprep.mubr.bf16.mxu0 %v4968
        %5375 = vmatmul.mubr.bf16.gmra.mrb[0].mxu0 %v4967
        %v5376 = vpop.f32.mrb[0].mxu0
        %v5377 = vadd.f32 %v5052, %v5376
        %v5378 = vpop.f32.mrb[0].mxu0
        %v5379 = vpop.f32.mrb[0].mxu0
        %v5380 = vadd.f32 %v5052, %v5379
        %v5381 = vpop.f32.mrb[0].mxu0
        %5382 = vmatprep.mubr.bf16.mxu0 %v4972
        %5383 = vmatmul.mubr.bf16.gmra.mrb[0].mxu0 %v4971
        %v5384 = vpop.f32.mrb[0].mxu0
        %v5385 = vadd.f32 %v5052, %v5384
        %v5386 = vpop.f32.mrb[0].mxu0
        %v5387 = vpop.f32.mrb[0].mxu0
        %v5388 = vadd.f32 %v5052, %v5387
        %v5389 = vpop.f32.mrb[0].mxu0
        %5390 = vmatprep.mubr.bf16.mxu0 %v4976
        %5391 = vmatmul.mubr.bf16.gmra.mrb[0].mxu0 %v4975
        %v5392 = vpop.f32.mrb[0].mxu0
        %v5393 = vadd.f32 %v5052, %v5392
        %v5394 = vpop.f32.mrb[0].mxu0
        %v5395 = vpop.f32.mrb[0].mxu0
        %v5396 = vadd.f32 %v5052, %v5395
        %v5397 = vpop.f32.mrb[0].mxu0
        %5398 = vmatprep.mubr.bf16.mxu0 %v4980
        %5399 = vmatmul.mubr.bf16.gmra.mrb[0].mxu0 %v4979
        %v5400 = vpop.f32.mrb[0].mxu0
        %v5401 = vadd.f32 %v5052, %v5400
        %v5402 = vpop.f32.mrb[0].mxu0
        %v5403 = vpop.f32.mrb[0].mxu0
        %v5404 = vadd.f32 %v5052, %v5403
        %v5405 = vpop.f32.mrb[0].mxu0
        %5406 = vdwg.mxu0
        %5407 = vmatprep.subr.bf16.mxu0 0
        %5408 = vmatpush1.bf16.msra.mxu0 %v5198
        %5409 = vmatprep.subr.bf16.mxu0 0
        %5410 = vmatpush1.bf16.msra.mxu0 %v5199
        %5411 = vmatprep.subr.bf16.mxu0 0
        %5412 = vmatpush1.bf16.msra.mxu0 %v5200
        %5413 = vmatprep.subr.bf16.mxu0 0
        %5414 = vmatpush1.bf16.msra.mxu0 %v5201
        %5415 = vmatprep.subr.bf16.mxu0 0
        %5416 = vmatpush1.bf16.msra.mxu0 %v5202
        %5417 = vmatprep.subr.bf16.mxu0 0
        %5418 = vmatpush1.bf16.msra.mxu0 %v5203
        %5419 = vmatprep.subr.bf16.mxu0 0
        %5420 = vmatpush1.bf16.msra.mxu0 %v5204
        %5421 = vmatprep.subr.bf16.mxu0 0
        %5422 = vmatpush1.bf16.msra.mxu0 %v5205
        %5423 = vmatprep.subr.bf16.mxu0 0
        %5424 = vmatpush1.bf16.msra.mxu0 %v5206
        %5425 = vmatprep.subr.bf16.mxu0 0
        %5426 = vmatpush1.bf16.msra.mxu0 %v5207
        %5427 = vmatprep.subr.bf16.mxu0 0
        %5428 = vmatpush1.bf16.msra.mxu0 %v5208
        %5429 = vmatprep.subr.bf16.mxu0 0
        %5430 = vmatpush1.bf16.msra.mxu0 %v5209
        %5431 = vmatprep.subr.bf16.mxu0 0
        %5432 = vmatpush1.bf16.msra.mxu0 %v5210
        %5433 = vmatprep.subr.bf16.mxu0 0
        %5434 = vmatpush1.bf16.msra.mxu0 %v5211
        %5435 = vmatprep.subr.bf16.mxu0 0
        %5436 = vmatpush1.bf16.msra.mxu0 %v5212
        %5437 = vmatprep.subr.bf16.mxu0 0
        %5438 = vmatpush1.bf16.msra.mxu0 %v5213
        %5439 = vmatprep.mubr.bf16.mxu0 %v4922
        %5440 = vmatmul.mubr.bf16.gmra.mrb[0].mxu0 %v4921
        %v5441 = vpop.f32.mrb[0].mxu0
        %v5442 = vadd.f32 %v5281, %v5441
        %v5443 = vpop.f32.mrb[0].mxu0
        %v5444 = vpop.f32.mrb[0].mxu0
        %v5445 = vadd.f32 %v5284, %v5444
        %v5446 = vpop.f32.mrb[0].mxu0
        %5447 = vmatprep.mubr.bf16.mxu0 %v4926
        %5448 = vmatmul.mubr.bf16.gmra.mrb[0].mxu0 %v4925
        %v5449 = vpop.f32.mrb[0].mxu0
        %v5450 = vadd.f32 %v5289, %v5449
        %v5451 = vpop.f32.mrb[0].mxu0
        %v5452 = vpop.f32.mrb[0].mxu0
        %v5453 = vadd.f32 %v5292, %v5452
        %v5454 = vpop.f32.mrb[0].mxu0
        %5455 = vmatprep.mubr.bf16.mxu0 %v4930
        %5456 = vmatmul.mubr.bf16.gmra.mrb[0].mxu0 %v4929
        %v5457 = vpop.f32.mrb[0].mxu0
        %v5458 = vadd.f32 %v5297, %v5457
        %v5459 = vpop.f32.mrb[0].mxu0
        %v5460 = vpop.f32.mrb[0].mxu0
        %v5461 = vadd.f32 %v5300, %v5460
        %v5462 = vpop.f32.mrb[0].mxu0
        %5463 = vmatprep.mubr.bf16.mxu0 %v4934
        %5464 = vmatmul.mubr.bf16.gmra.mrb[0].mxu0 %v4933
        %v5465 = vpop.f32.mrb[0].mxu0
        %v5466 = vadd.f32 %v5305, %v5465
        %v5467 = vpop.f32.mrb[0].mxu0
        %v5468 = vpop.f32.mrb[0].mxu0
        %v5469 = vadd.f32 %v5308, %v5468
        %v5470 = vpop.f32.mrb[0].mxu0
        %5471 = vmatprep.mubr.bf16.mxu0 %v4938
        %5472 = vmatmul.mubr.bf16.gmra.mrb[0].mxu0 %v4937
        %v5473 = vpop.f32.mrb[0].mxu0
        %v5474 = vadd.f32 %v5313, %v5473
        %v5475 = vpop.f32.mrb[0].mxu0
        %v5476 = vpop.f32.mrb[0].mxu0
        %v5477 = vadd.f32 %v5316, %v5476
        %v5478 = vpop.f32.mrb[0].mxu0
        %5479 = vmatprep.mubr.bf16.mxu0 %v4942
        %5480 = vmatmul.mubr.bf16.gmra.mrb[0].mxu0 %v4941
        %v5481 = vpop.f32.mrb[0].mxu0
        %v5482 = vadd.f32 %v5321, %v5481
        %v5483 = vpop.f32.mrb[0].mxu0
        %v5484 = vpop.f32.mrb[0].mxu0
        %v5485 = vadd.f32 %v5324, %v5484
        %v5486 = vpop.f32.mrb[0].mxu0
        %5487 = vmatprep.mubr.bf16.mxu0 %v4946
        %5488 = vmatmul.mubr.bf16.gmra.mrb[0].mxu0 %v4945
        %v5489 = vpop.f32.mrb[0].mxu0
        %v5490 = vadd.f32 %v5329, %v5489
        %v5491 = vpop.f32.mrb[0].mxu0
        %v5492 = vpop.f32.mrb[0].mxu0
        %v5493 = vadd.f32 %v5332, %v5492
        %v5494 = vpop.f32.mrb[0].mxu0
        %5495 = vmatprep.mubr.bf16.mxu0 %v4950
        %5496 = vmatmul.mubr.bf16.gmra.mrb[0].mxu0 %v4949
        %v5497 = vpop.f32.mrb[0].mxu0
        %v5498 = vadd.f32 %v5337, %v5497
        %v5499 = vpop.f32.mrb[0].mxu0
        %v5500 = vpop.f32.mrb[0].mxu0
        %v5501 = vadd.f32 %v5340, %v5500
        %v5502 = vpop.f32.mrb[0].mxu0
        %5503 = vmatprep.mubr.bf16.mxu0 %v4954
        %5504 = vmatmul.mubr.bf16.gmra.mrb[0].mxu0 %v4953
        %v5505 = vpop.f32.mrb[0].mxu0
        %v5506 = vadd.f32 %v5345, %v5505
        %v5507 = vpop.f32.mrb[0].mxu0
        %v5508 = vpop.f32.mrb[0].mxu0
        %v5509 = vadd.f32 %v5348, %v5508
        %v5510 = vpop.f32.mrb[0].mxu0
        %5511 = vmatprep.mubr.bf16.mxu0 %v4958
        %5512 = vmatmul.mubr.bf16.gmra.mrb[0].mxu0 %v4957
        %v5513 = vpop.f32.mrb[0].mxu0
        %v5514 = vadd.f32 %v5353, %v5513
        %v5515 = vpop.f32.mrb[0].mxu0
        %v5516 = vpop.f32.mrb[0].mxu0
        %v5517 = vadd.f32 %v5356, %v5516
        %v5518 = vpop.f32.mrb[0].mxu0
        %5519 = vmatprep.mubr.bf16.mxu0 %v4962
        %5520 = vmatmul.mubr.bf16.gmra.mrb[0].mxu0 %v4961
        %v5521 = vpop.f32.mrb[0].mxu0
        %v5522 = vadd.f32 %v5361, %v5521
        %v5523 = vpop.f32.mrb[0].mxu0
        %v5524 = vpop.f32.mrb[0].mxu0
        %v5525 = vadd.f32 %v5364, %v5524
        %v5526 = vpop.f32.mrb[0].mxu0
        %5527 = vmatprep.mubr.bf16.mxu0 %v4966
        %5528 = vmatmul.mubr.bf16.gmra.mrb[0].mxu0 %v4965
        %v5529 = vpop.f32.mrb[0].mxu0
        %v5530 = vadd.f32 %v5369, %v5529
        %v5531 = vpop.f32.mrb[0].mxu0
        %v5532 = vpop.f32.mrb[0].mxu0
        %v5533 = vadd.f32 %v5372, %v5532
        %v5534 = vpop.f32.mrb[0].mxu0
        %5535 = vmatprep.mubr.bf16.mxu0 %v4970
        %5536 = vmatmul.mubr.bf16.gmra.mrb[0].mxu0 %v4969
        %v5537 = vpop.f32.mrb[0].mxu0
        %v5538 = vadd.f32 %v5377, %v5537
        %v5539 = vpop.f32.mrb[0].mxu0
        %v5540 = vpop.f32.mrb[0].mxu0
        %v5541 = vadd.f32 %v5380, %v5540
        %v5542 = vpop.f32.mrb[0].mxu0
        %5543 = vmatprep.mubr.bf16.mxu0 %v4974
        %5544 = vmatmul.mubr.bf16.gmra.mrb[0].mxu0 %v4973
        %v5545 = vpop.f32.mrb[0].mxu0
        %v5546 = vadd.f32 %v5385, %v5545
        %v5547 = vpop.f32.mrb[0].mxu0
        %v5548 = vpop.f32.mrb[0].mxu0
        %v5549 = vadd.f32 %v5388, %v5548
        %v5550 = vpop.f32.mrb[0].mxu0
        %5551 = vmatprep.mubr.bf16.mxu0 %v4978
        %5552 = vmatmul.mubr.bf16.gmra.mrb[0].mxu0 %v4977
        %v5553 = vpop.f32.mrb[0].mxu0
        %v5554 = vadd.f32 %v5393, %v5553
        %v5555 = vpop.f32.mrb[0].mxu0
        %v5556 = vpop.f32.mrb[0].mxu0
        %v5557 = vadd.f32 %v5396, %v5556
        %v5558 = vpop.f32.mrb[0].mxu0
        %5559 = vmatprep.mubr.bf16.mxu0 %v4982
        %5560 = vmatmul.mubr.bf16.gmra.mrb[0].mxu0 %v4981
        %v5561 = vpop.f32.mrb[0].mxu0
        %v5562 = vadd.f32 %v5401, %v5561
        %v5563 = vpop.f32.mrb[0].mxu0
        %v5564 = vpop.f32.mrb[0].mxu0
        %v5565 = vadd.f32 %v5404, %v5564
        %v5566 = vpop.f32.mrb[0].mxu0
        %5567 = vdwg.mxu0
        %5568 = vst [vmem:[%s295] sm:$0xff] %v5442
        %5569 = vst [vmem:[%s295 + $0x8] sm:$0xff] %v5445
        %5570 = vst [vmem:[%s295 + $0x10] sm:$0xff] %v5450
        %5571 = vst [vmem:[%s295 + $0x18] sm:$0xff] %v5453
        %5572 = vst [vmem:[%s295 + $0x20] sm:$0xff] %v5458
        %5573 = vst [vmem:[%s295 + $0x28] sm:$0xff] %v5461
        %5574 = vst [vmem:[%s295 + $0x30] sm:$0xff] %v5466
        %5575 = vst [vmem:[%s295 + $0x38] sm:$0xff] %v5469
        %5576 = vst [vmem:[%s295 + $0x40] sm:$0xff] %v5474
        %5577 = vst [vmem:[%s295 + $0x48] sm:$0xff] %v5477
        %5578 = vst [vmem:[%s295 + $0x50] sm:$0xff] %v5482
        %5579 = vst [vmem:[%s295 + $0x58] sm:$0xff] %v5485
        %5580 = vst [vmem:[%s295 + $0x60] sm:$0xff] %v5490
        %5581 = vst [vmem:[%s295 + $0x68] sm:$0xff] %v5493
        %5582 = vst [vmem:[%s295 + $0x70] sm:$0xff] %v5498
        %5583 = vst [vmem:[%s295 + $0x78] sm:$0xff] %v5501
        %5584 = vst [vmem:[%s295 + $0x80] sm:$0xff] %v5506
        %5585 = vst [vmem:[%s295 + $0x88] sm:$0xff] %v5509
        %5586 = vst [vmem:[%s295 + $0x90] sm:$0xff] %v5514
        %5587 = vst [vmem:[%s295 + $0x98] sm:$0xff] %v5517
        %5588 = vst [vmem:[%s295 + $0xa0] sm:$0xff] %v5522
        %5589 = vst [vmem:[%s295 + $0xa8] sm:$0xff] %v5525
        %5590 = vst [vmem:[%s295 + $0xb0] sm:$0xff] %v5530
        %5591 = vst [vmem:[%s295 + $0xb8] sm:$0xff] %v5533
        %5592 = vst [vmem:[%s295 + $0xc0] sm:$0xff] %v5538
        %5593 = vst [vmem:[%s295 + $0xc8] sm:$0xff] %v5541
        %5594 = vst [vmem:[%s295 + $0xd0] sm:$0xff] %v5546
        %5595 = vst [vmem:[%s295 + $0xd8] sm:$0xff] %v5549
        %5596 = vst [vmem:[%s295 + $0xe0] sm:$0xff] %v5554
        %5597 = vst [vmem:[%s295 + $0xe8] sm:$0xff] %v5557
        %5598 = vst [vmem:[%s295 + $0xf0] sm:$0xff] %v5562
        %5599 = vst [vmem:[%s295 + $0xf8] sm:$0xff] %v5565
        %s5600 = smul.u32 32, %s19
        %p5601 = scmp.lt.s32.totalorder %s5600, 63
        %s5602 = scalar_select %p5601, %s5600, 63
        %s5603 = smul.addr %s5602, 8
        %s5604 = scalar_lea.vmem %s7, %s5603
        // Predicated region
        $region53: #{net_forward.1} parent=47 // pred_check
          %p5605 = pneg %p189
        $region54: #{net_forward.1} parent=47 // pred_check_branch
          %5607 = sbr.rel (%p5605) target = $region56
        $region55: #{net_forward.1} parent=47 // pred_region
          %s5608 = smul.u32 32, %s19
        $region56: #{net_forward.1} parent=47 // pred_fallthru
          _
      $region48: #{net_forward.1} parent=5 // pred_fallthru
        _
      %p5609 = scmp.le.s32.totalorder 2, %s14
      // Predicated region
      $region57: #{net_forward.1} parent=5 // pred_check
        %p5610 = pneg %p5609
      $region58: #{net_forward.1} parent=5 // pred_check_branch
        %5612 = sbr.rel (%p5610) target = $region60
      $region59: #{net_forward.1} parent=5 // pred_region
        %s5613 = ssub.s32 %s14, 2
        // Predicated region
        $region61: #{net_forward.1} parent=59 // pred_check
          %p5614 = pneg %p195
        $region62: #{net_forward.1} parent=59 // pred_check_branch
          %5616 = sbr.rel (%p5614) target = $region64
        $region63: #{net_forward.1} parent=59 // pred_region
          %s5617 = smul.u32 32, %s20
          %p5618 = scmp.lt.s32.totalorder %s5617, 63
          %s5619 = scalar_select %p5618, %s5617, 63
          %s5620 = smul.addr %s5619, 8
          %s5621 = scalar_lea.vmem %s7, %s5620
        $region64: #{net_forward.1} parent=59 // pred_fallthru
          _
      $region60: #{net_forward.1} parent=5 // pred_fallthru
        _
    $region6: #{net_forward.1} parent=1 // loop_footer
      %s18 = sadd.s32 1, %s14
    $region7: #{net_forward.1} parent=1 // loop_footer_branch
      %13 = sbr.rel target = $region3
    $region8: #{net_forward.1} parent=1 // loop_exit
      _
    %5622 = vsyncpa [#allocation3], 1
    %s5623 = scalar_lea.sflag [#allocation3], 1
    %5624 = vsyncpa %s5623, 1

</llo_original>
